<compile_context>
chip_gen: v6e
topology: v6e:2x2x1
jax: 0.10.0
libtpu: 0.0.40
codegen_flags: <defaults>
</compile_context>

<pallas_src>
import jax
import jax.numpy as jnp
from jax.experimental import pallas as pl
from jax.experimental.pallas import tpu as pltpu


def _bottleneck_kernel(x_ref, x_hbm, w1_ref, b1_ref, w2w_ref, b2_ref, o_ref,
                       imcol_ref, halo_ref, sem):
    # x_ref    : (TH, W, C)        f32   row tile of the input (also residual)
    # x_hbm    : (N, H, W, C)      f32   full input, HBM (memory_space=ANY)
    # w1_ref   : (C, Ch)           bf16  folded 1x1 conv weight
    # b1_ref   : (1, Ch)           f32   folded 1x1 conv bias
    # w2w_ref  : (3, 3*Ch, Cout)   bf16  folded 3x3 conv weight, k = dx*Ch + c
    # b2_ref   : (1, Cout)         f32
    # o_ref    : (TH, W, Cout)     f32   output row tile
    # imcol_ref: (TH+2, W, 3*Ch)   bf16  width-im2col'd, height-padded cv1 out
    # halo_ref : (2, W, C)         f32   DMA landing buffer for halo rows
    # sem      : DMA semaphores (2,)
    TH, W, C = x_ref.shape
    Ch = w1_ref.shape[1]
    Cout = w2w_ref.shape[2]

    n = pl.program_id(0)
    r = pl.program_id(1)
    nr = pl.num_programs(1)
    row0 = r * TH

    # --- kick off the 1-row halo DMAs early (overlap with the main cv1 GEMM).
    @pl.when(r > 0)
    def _():
        pltpu.make_async_copy(x_hbm.at[n, row0 - 1], halo_ref.at[0],
                              sem.at[0]).start()

    @pl.when(r < nr - 1)
    def _():
        pltpu.make_async_copy(x_hbm.at[n, row0 + TH], halo_ref.at[1],
                              sem.at[1]).start()

    w1 = w1_ref[...]
    b1 = b1_ref[...]

    def cv1(x_rows):
        # 1x1 conv as a GEMM (bf16 MXU, f32 acc) + folded BN + SiLU -> bf16.
        rows = x_rows.shape[0]
        z = jnp.dot(x_rows.reshape(rows * W, C).astype(jnp.bfloat16), w1,
                    preferred_element_type=jnp.float32) + b1
        z = z * jax.nn.sigmoid(z)                       # SiLU
        return z.reshape(rows, W, Ch).astype(jnp.bfloat16)

    def write_imcol(g0, y1):
        # Scatter y1 (rows, W, Ch) so that
        #   imcol[g, w, dx*Ch + c] == y1_zero_padded[g - 1 + row0, w + dx - 1, c]
        rows = y1.shape[0]
        imcol_ref[g0:g0 + rows, :, Ch:2 * Ch] = y1                         # dx=1
        imcol_ref[g0:g0 + rows, 1:W, 0:Ch] = y1[:, 0:W - 1, :]             # dx=0
        imcol_ref[g0:g0 + rows, 0:W - 1, 2 * Ch:3 * Ch] = y1[:, 1:W, :]    # dx=2

    # Zero only the lane strips never overwritten by write_imcol (the 3x3
    # conv's left/right zero padding). Unconditional each step (cheap, and
    # safe with both grid axes marked "parallel").
    imcol_ref[:, 0:1, 0:Ch] = jnp.zeros((TH + 2, 1, Ch), jnp.bfloat16)
    imcol_ref[:, W - 1:W, 2 * Ch:3 * Ch] = jnp.zeros((TH + 2, 1, Ch), jnp.bfloat16)

    # cv1 on this tile's TH rows (also reused below as the residual).
    xc = x_ref[...]                                     # (TH, W, C) f32
    write_imcol(1, cv1(xc))

    # Top halo row: cv1 on the DMA'd row, or zero padding at the image top.
    @pl.when(r > 0)
    def _():
        pltpu.make_async_copy(x_hbm.at[n, row0 - 1], halo_ref.at[0],
                              sem.at[0]).wait()
        write_imcol(0, cv1(halo_ref[0:1]))

    @pl.when(r == 0)
    def _():
        imcol_ref[0:1] = jnp.zeros((1, W, 3 * Ch), jnp.bfloat16)

    # Bottom halo row.
    @pl.when(r < nr - 1)
    def _():
        pltpu.make_async_copy(x_hbm.at[n, row0 + TH], halo_ref.at[1],
                              sem.at[1]).wait()
        write_imcol(TH + 1, cv1(halo_ref[1:2]))

    @pl.when(r == nr - 1)
    def _():
        imcol_ref[TH + 1:TH + 2] = jnp.zeros((1, W, 3 * Ch), jnp.bfloat16)

    # cv2: 3x3 conv as 3 wide GEMMs (K = 3*Ch), bf16 MXU inputs, f32 acc.
    # Accumulator starts from the folded bias (no zeros materialization).
    acc = b2_ref[...]                                   # (1, Cout) f32
    for dy in range(3):                                 # static, unrolled
        win = imcol_ref[dy:dy + TH].reshape(TH * W, 3 * Ch)     # already bf16
        acc = acc + jnp.dot(win, w2w_ref[dy], preferred_element_type=jnp.float32)
    z2 = acc * jax.nn.sigmoid(acc)                      # SiLU

    # Residual add (f32) and store (lane-dense, Cout is a multiple of 128).
    o_ref[...] = (xc.reshape(TH * W, C) + z2).reshape(TH, W, Cout)


def _round_up(v, m):
    return (v + m - 1) // m * m


def _largest_divisor_le(n, target):
    t = max(1, min(target, n))
    while n % t:
        t -= 1
    return t


def bottleneck_forward(x_nhwc, params, *, row_tile=8):
    N, H, W, C = x_nhwc.shape
    w1, b1, w2, b2 = params["w1"], params["b1"], params["w2"], params["b2"]
    Ch = w1.shape[1]
    Cout = w2.shape[-1]
    assert C == Cout, "residual add requires in_channels == out_channels"

    LANE = 128
    Cp = _round_up(C, LANE)
    Chp = _round_up(Ch, LANE)
    Coutp = _round_up(Cout, LANE)           # == Cp since C == Cout

    TH = _largest_divisor_le(H, row_tile)
    grid = (N, H // TH)

    # Lane-pad channels (no-op when already 128-aligned); zero padding keeps
    # the math exact and the padded output channels are sliced off below.
    x_p = jnp.pad(x_nhwc, ((0, 0), (0, 0), (0, 0), (0, Cp - C)))
    w1_p = jnp.pad(w1, ((0, Cp - C), (0, Chp - Ch))).astype(jnp.bfloat16)
    b1_p = jnp.pad(b1, (0, Chp - Ch)).reshape(1, Chp).astype(jnp.float32)
    w2_p = jnp.pad(w2, ((0, 0), (0, 0), (0, Chp - Ch), (0, Coutp - Cout)))
    w2w_p = w2_p.reshape(3, 3 * Chp, Coutp).astype(jnp.bfloat16)
    b2_p = jnp.pad(b2, (0, Coutp - Cout)).reshape(1, Coutp).astype(jnp.float32)

    # Explicit VMEM budget: x tile + out tile (double-buffered) + bf16 im2col
    # scratch + halo buffer + weights, with headroom; clamped to v7x-safe 64MiB.
    bf16, f32 = 2, 4
    est = (2 * TH * W * Cp * f32
           + 2 * TH * W * Coutp * f32
           + (TH + 2) * W * 3 * Chp * bf16
           + 2 * W * Cp * f32
           + 2 * (Cp * Chp + 3 * 3 * Chp * Coutp) * bf16
           + 2 * (Chp + Coutp) * f32)
    vmem_limit = max(32 << 20, min(2 * est + (4 << 20), 64 << 20))

    out_p = pl.pallas_call(
        _bottleneck_kernel,
        out_shape=jax.ShapeDtypeStruct((N, H, W, Coutp), jnp.float32),
        grid=grid,
        in_specs=[
            # Row tile of x (residual + cv1 on the tile's own rows).
            pl.BlockSpec((pl.Squeezed(), TH, W, Cp), lambda n, r: (n, r, 0, 0)),
            # Untiled HBM alias of x for the 1-row halo DMAs.
            pl.BlockSpec(memory_space=pl.ANY),
            pl.BlockSpec((Cp, Chp), lambda n, r: (0, 0)),
            pl.BlockSpec((1, Chp), lambda n, r: (0, 0)),
            pl.BlockSpec((3, 3 * Chp, Coutp), lambda n, r: (0, 0, 0)),
            pl.BlockSpec((1, Coutp), lambda n, r: (0, 0)),
        ],
        out_specs=pl.BlockSpec((pl.Squeezed(), TH, W, Coutp),
                               lambda n, r: (n, r, 0, 0)),
        scratch_shapes=[
            pltpu.VMEM((TH + 2, W, 3 * Chp), jnp.bfloat16),   # im2col (bf16)
            pltpu.VMEM((2, W, Cp), jnp.float32),              # halo rows
            pltpu.SemaphoreType.DMA((2,)),
        ],
        compiler_params=pltpu.CompilerParams(
            dimension_semantics=("parallel", "parallel"),
            vmem_limit_bytes=int(vmem_limit)),
    )(x_p, x_p, w1_p, b1_p, w2w_p, b2_p)

    return out_p[..., :Cout]


def make_params(key, in_channels, out_channels, eps=1e-5):
    """Deterministic synthetic weights; BatchNorm (eval mode) folded into convs.

    Folded conv weights are rounded to bf16-representable values so the
    kernel's bf16 weight cast is lossless (inference-style bf16 weights)."""
    hidden = out_channels // 2
    ks = jax.random.split(key, 10)
    w1_raw = 0.3 * jax.random.normal(ks[0], (in_channels, hidden), jnp.float32)
    w2_raw = 0.3 * jax.random.normal(ks[1], (3, 3, hidden, out_channels), jnp.float32)
    g1 = 1.0 + 0.1 * jax.random.normal(ks[2], (hidden,), jnp.float32)
    be1 = 0.1 * jax.random.normal(ks[3], (hidden,), jnp.float32)
    m1 = 0.1 * jax.random.normal(ks[4], (hidden,), jnp.float32)
    v1 = 0.5 + 0.5 * jnp.abs(jax.random.normal(ks[5], (hidden,), jnp.float32))
    g2 = 1.0 + 0.1 * jax.random.normal(ks[6], (out_channels,), jnp.float32)
    be2 = 0.1 * jax.random.normal(ks[7], (out_channels,), jnp.float32)
    m2 = 0.1 * jax.random.normal(ks[8], (out_channels,), jnp.float32)
    v2 = 0.5 + 0.5 * jnp.abs(jax.random.normal(ks[9], (out_channels,), jnp.float32))
    s1 = g1 / jnp.sqrt(v1 + eps)
    s2 = g2 / jnp.sqrt(v2 + eps)
    w1 = (w1_raw * s1[None, :]).astype(jnp.bfloat16).astype(jnp.float32)
    w2 = (w2_raw * s2[None, None, None, :]).astype(jnp.bfloat16).astype(jnp.float32)
    return dict(w1=w1, b1=be1 - m1 * s1, w2=w2, b2=be2 - m2 * s2)


def reference_forward(x_nhwc, params):
    """Pure-JAX f32 reference for correctness checking."""
    y1 = jnp.einsum("nhwc,cd->nhwd", x_nhwc, params["w1"]) + params["b1"]
    y1 = y1 * jax.nn.sigmoid(y1)
    y2 = jax.lax.conv_general_dilated(
        y1, params["w2"], window_strides=(1, 1), padding="SAME",
        dimension_numbers=("NHWC", "HWIO", "NHWC")) + params["b2"]
    y2 = y2 * jax.nn.sigmoid(y2)
    return x_nhwc + y2


if __name__ == "__main__":
    key = jax.random.PRNGKey(0)
    kx, kp = jax.random.split(key)

    # Bottleneck(in_channels=4, out_channels=4); residual requires Cin == Cout.
    N, C, H, W = 2, 4, 16, 16
    x_nchw = jax.random.normal(kx, (N, C, H, W), jnp.float32)   # PyTorch-style NCHW
    x_nhwc = jnp.transpose(x_nchw, (0, 2, 3, 1))                # kernel layout: NHWC
    params = make_params(kp, C, C)

    out = jax.block_until_ready(bottleneck_forward(x_nhwc, params))

    ref = reference_forward(x_nhwc, params)
    assert out.shape == (N, H, W, C)
    max_err = float(jnp.max(jnp.abs(out - ref)))
    # Tolerance accounts for bf16 MXU inputs (activations cast to bf16) vs f32 ref.
    assert bool(jnp.allclose(out, ref, atol=3e-2, rtol=3e-2)), (
        "max abs err = %g" % max_err)
    print("KERNEL_OK")
</pallas_src>

<mosaic_0001>
module attributes {stable_mosaic.version = 11 : i64} {
  func.func @_bottleneck_kernel(%arg0: i32, %arg1: i32, %arg2: memref<1x8x16x128xf32, #tpu.memory_space<vmem>>, %arg3: memref<2x16x16x128xf32, #tpu.memory_space<any>>, %arg4: memref<128x128xbf16, #tpu.memory_space<vmem>>, %arg5: memref<1x128xf32, #tpu.memory_space<vmem>>, %arg6: memref<3x384x128xbf16, #tpu.memory_space<vmem>>, %arg7: memref<1x128xf32, #tpu.memory_space<vmem>>, %arg8: memref<1x8x16x128xf32, #tpu.memory_space<vmem>>, %arg9: memref<10x16x384xbf16, #tpu.memory_space<vmem>>, %arg10: memref<2x16x128xf32, #tpu.memory_space<vmem>>, %arg11: memref<2x!tpu.dma_semaphore, #tpu.memory_space<semaphore_mem>>) attributes {dimension_semantics = [#tpu.dimension_semantics<parallel>, #tpu.dimension_semantics<parallel>], iteration_bounds = array<i64: 2, 2>, scalar_prefetch = 0 : i64, scratch_operands = 3 : i64, tpu.core_type = #tpu.core_type<tc>, window_params = [{transform_indices = @transform_0, window_bounds = array<i64: 1, 8, 16, 128>}, {}, {pipeline_mode = #tpu.pipeline_mode<synchronous>, transform_indices = @transform_2, window_bounds = array<i64: 128, 128>}, {pipeline_mode = #tpu.pipeline_mode<synchronous>, transform_indices = @transform_3, window_bounds = array<i64: 1, 128>}, {pipeline_mode = #tpu.pipeline_mode<synchronous>, transform_indices = @transform_4, window_bounds = array<i64: 3, 384, 128>}, {pipeline_mode = #tpu.pipeline_mode<synchronous>, transform_indices = @transform_5, window_bounds = array<i64: 1, 128>}, {transform_indices = @transform_6, window_bounds = array<i64: 1, 8, 16, 128>}]} {
    %c8_i32 = arith.constant 8 : i32
    %0 = arith.muli %arg1, %c8_i32 : i32
    %c0_i32 = arith.constant 0 : i32
    %1 = arith.cmpi sgt, %arg1, %c0_i32 : i32
    %2 = arith.extui %1 : i1 to i32
    %c0_i32_0 = arith.constant 0 : i32
    %3 = arith.cmpi ne, %2, %c0_i32_0 : i32
    scf.if %3 {
      %c1_i32_58 = arith.constant 1 : i32
      %77 = arith.subi %0, %c1_i32_58 : i32
      %c0_i32_59 = arith.constant 0 : i32
      %c0_i32_60 = arith.constant 0 : i32
      %c0_i32_61 = arith.constant 0 : i32
      %c0_i32_62 = arith.constant 0 : i32
      %78 = tpu.memref_slice %arg3[%arg0, %77, %c0_i32_61, %c0_i32_62] : memref<2x16x16x128xf32, #tpu.memory_space<any>> -> memref<1x1x16x128xf32, #tpu.memory_space<any>>
      %79 = tpu.memref_squeeze %78 : memref<1x1x16x128xf32, #tpu.memory_space<any>> -> memref<16x128xf32, #tpu.memory_space<any>>
      %c0_i32_63 = arith.constant 0 : i32
      %c0_i32_64 = arith.constant 0 : i32
      %80 = tpu.memref_slice %arg10[%c0_i32_59, %c0_i32_63, %c0_i32_64] : memref<2x16x128xf32, #tpu.memory_space<vmem>> -> memref<1x16x128xf32, #tpu.memory_space<vmem>>
      %81 = tpu.memref_squeeze %80 : memref<1x16x128xf32, #tpu.memory_space<vmem>> -> memref<16x128xf32, #tpu.memory_space<vmem>>
      %82 = tpu.memref_slice %arg11[%c0_i32_60] : memref<2x!tpu.dma_semaphore, #tpu.memory_space<semaphore_mem>> -> memref<1x!tpu.dma_semaphore, #tpu.memory_space<semaphore_mem>>
      %83 = tpu.memref_squeeze %82 : memref<1x!tpu.dma_semaphore, #tpu.memory_space<semaphore_mem>> -> memref<!tpu.dma_semaphore, #tpu.memory_space<semaphore_mem>>
      tpu.enqueue_dma source(%79 : memref<16x128xf32, #tpu.memory_space<any>>) target(%81 : memref<16x128xf32, #tpu.memory_space<vmem>>) target_semaphore(%83 : memref<!tpu.dma_semaphore, #tpu.memory_space<semaphore_mem>>)
    } else {
    }
    %c1_i32 = arith.constant 1 : i32
    %4 = arith.cmpi slt, %arg1, %c1_i32 : i32
    %5 = arith.extui %4 : i1 to i32
    %c0_i32_1 = arith.constant 0 : i32
    %6 = arith.cmpi ne, %5, %c0_i32_1 : i32
    scf.if %6 {
      %c8_i32_58 = arith.constant 8 : i32
      %77 = arith.addi %0, %c8_i32_58 : i32
      %c1_i32_59 = arith.constant 1 : i32
      %c1_i32_60 = arith.constant 1 : i32
      %c0_i32_61 = arith.constant 0 : i32
      %c0_i32_62 = arith.constant 0 : i32
      %78 = tpu.memref_slice %arg3[%arg0, %77, %c0_i32_61, %c0_i32_62] : memref<2x16x16x128xf32, #tpu.memory_space<any>> -> memref<1x1x16x128xf32, #tpu.memory_space<any>>
      %79 = tpu.memref_squeeze %78 : memref<1x1x16x128xf32, #tpu.memory_space<any>> -> memref<16x128xf32, #tpu.memory_space<any>>
      %c0_i32_63 = arith.constant 0 : i32
      %c0_i32_64 = arith.constant 0 : i32
      %80 = tpu.memref_slice %arg10[%c1_i32_59, %c0_i32_63, %c0_i32_64] : memref<2x16x128xf32, #tpu.memory_space<vmem>> -> memref<1x16x128xf32, #tpu.memory_space<vmem>>
      %81 = tpu.memref_squeeze %80 : memref<1x16x128xf32, #tpu.memory_space<vmem>> -> memref<16x128xf32, #tpu.memory_space<vmem>>
      %82 = tpu.memref_slice %arg11[%c1_i32_60] : memref<2x!tpu.dma_semaphore, #tpu.memory_space<semaphore_mem>> -> memref<1x!tpu.dma_semaphore, #tpu.memory_space<semaphore_mem>>
      %83 = tpu.memref_squeeze %82 : memref<1x!tpu.dma_semaphore, #tpu.memory_space<semaphore_mem>> -> memref<!tpu.dma_semaphore, #tpu.memory_space<semaphore_mem>>
      tpu.enqueue_dma source(%79 : memref<16x128xf32, #tpu.memory_space<any>>) target(%81 : memref<16x128xf32, #tpu.memory_space<vmem>>) target_semaphore(%83 : memref<!tpu.dma_semaphore, #tpu.memory_space<semaphore_mem>>)
    } else {
    }
    %c0 = arith.constant 0 : index
    %c0_2 = arith.constant 0 : index
    %7 = vector.load %arg4[%c0, %c0_2] : memref<128x128xbf16, #tpu.memory_space<vmem>>, vector<128x128xbf16>
    %c0_3 = arith.constant 0 : index
    %c0_4 = arith.constant 0 : index
    %8 = vector.load %arg5[%c0_3, %c0_4] : memref<1x128xf32, #tpu.memory_space<vmem>>, vector<1x128xf32>
    %cst = arith.constant 0.000000e+00 : bf16
    %9 = vector.broadcast %cst : bf16 to vector<10x1x128xbf16>
    %c0_5 = arith.constant 0 : index
    %c0_6 = arith.constant 0 : index
    %c0_7 = arith.constant 0 : index
    %10 = vector.load %arg9[%c0_5, %c0_6, %c0_7] : memref<10x16x384xbf16, #tpu.memory_space<vmem>>, vector<10x1x128xbf16>
    tpu.vector_store %arg9[%c0_5, %c0_6, %c0_7], %9 {strides = array<i32>} : memref<10x16x384xbf16, #tpu.memory_space<vmem>>, vector<10x1x128xbf16>,
    %cst_8 = arith.constant 0.000000e+00 : bf16
    %11 = vector.broadcast %cst_8 : bf16 to vector<10x1x128xbf16>
    %c0_9 = arith.constant 0 : index
    %c15 = arith.constant 15 : index
    %c256 = arith.constant 256 : index
    %12 = vector.load %arg9[%c0_9, %c15, %c256] : memref<10x16x384xbf16, #tpu.memory_space<vmem>>, vector<10x1x128xbf16>
    tpu.vector_store %arg9[%c0_9, %c15, %c256], %11 {strides = array<i32>} : memref<10x16x384xbf16, #tpu.memory_space<vmem>>, vector<10x1x128xbf16>,
    %c0_10 = arith.constant 0 : index
    %c0_11 = arith.constant 0 : index
    %c0_12 = arith.constant 0 : index
    %c0_13 = arith.constant 0 : index
    %13 = vector.load %arg2[%c0_10, %c0_11, %c0_12, %c0_13] : memref<1x8x16x128xf32, #tpu.memory_space<vmem>>, vector<1x8x16x128xf32>
    %14 = vector.shape_cast %13 : vector<1x8x16x128xf32> to vector<8x16x128xf32>
    %15 = vector.shape_cast %14 : vector<8x16x128xf32> to vector<128x128xf32>
    %16 = arith.truncf %15 : vector<128x128xf32> to vector<128x128xbf16>
    %cst_14 = arith.constant dense<0.000000e+00> : vector<128x128xf32>
    %17 = tpu.matmul %16, %7, %cst_14 {dimension_numbers = #tpu.dot_dimension_numbers<[1], [0], [0], [1], [0, 0, 1, 1], [], []>} : vector<128x128xbf16>, vector<128x128xbf16>, vector<128x128xf32> -> vector<128x128xf32>
    %18 = vector.broadcast %8 : vector<1x128xf32> to vector<128x128xf32>
    %19 = arith.addf %17, %18 : vector<128x128xf32>
    %20 = arith.negf %19 : vector<128x128xf32>
    %21 = math.exp %20 : vector<128x128xf32>
    %cst_15 = arith.constant 1.000000e+00 : f32
    %22 = vector.broadcast %cst_15 : f32 to vector<128x128xf32>
    %23 = arith.addf %22, %21 : vector<128x128xf32>
    %24 = arith.divf %22, %23 : vector<128x128xf32>
    %25 = arith.mulf %19, %24 : vector<128x128xf32>
    %26 = vector.shape_cast %25 : vector<128x128xf32> to vector<8x16x128xf32>
    %27 = arith.truncf %26 : vector<8x16x128xf32> to vector<8x16x128xbf16>
    %c1 = arith.constant 1 : index
    %c0_16 = arith.constant 0 : index
    %c128 = arith.constant 128 : index
    %28 = vector.load %arg9[%c1, %c0_16, %c128] : memref<10x16x384xbf16, #tpu.memory_space<vmem>>, vector<8x16x128xbf16>
    tpu.vector_store %arg9[%c1, %c0_16, %c128], %27 {strides = array<i32>} : memref<10x16x384xbf16, #tpu.memory_space<vmem>>, vector<8x16x128xbf16>,
    %29 = vector.extract_strided_slice %27 {offsets = [0, 0, 0], sizes = [8, 15, 128], strides = [1, 1, 1]} : vector<8x16x128xbf16> to vector<8x15x128xbf16>
    %c1_17 = arith.constant 1 : index
    %c1_18 = arith.constant 1 : index
    %c0_19 = arith.constant 0 : index
    %30 = vector.load %arg9[%c1_17, %c1_18, %c0_19] : memref<10x16x384xbf16, #tpu.memory_space<vmem>>, vector<8x15x128xbf16>
    tpu.vector_store %arg9[%c1_17, %c1_18, %c0_19], %29 {strides = array<i32>} : memref<10x16x384xbf16, #tpu.memory_space<vmem>>, vector<8x15x128xbf16>,
    %31 = vector.extract_strided_slice %27 {offsets = [0, 1, 0], sizes = [8, 15, 128], strides = [1, 1, 1]} : vector<8x16x128xbf16> to vector<8x15x128xbf16>
    %c1_20 = arith.constant 1 : index
    %c0_21 = arith.constant 0 : index
    %c256_22 = arith.constant 256 : index
    %32 = vector.load %arg9[%c1_20, %c0_21, %c256_22] : memref<10x16x384xbf16, #tpu.memory_space<vmem>>, vector<8x15x128xbf16>
    tpu.vector_store %arg9[%c1_20, %c0_21, %c256_22], %31 {strides = array<i32>} : memref<10x16x384xbf16, #tpu.memory_space<vmem>>, vector<8x15x128xbf16>,
    %c0_i32_23 = arith.constant 0 : i32
    %33 = arith.cmpi sgt, %arg1, %c0_i32_23 : i32
    %34 = arith.extui %33 : i1 to i32
    %c0_i32_24 = arith.constant 0 : i32
    %35 = arith.cmpi ne, %34, %c0_i32_24 : i32
    scf.if %35 {
      %c1_i32_58 = arith.constant 1 : i32
      %77 = arith.subi %0, %c1_i32_58 : i32
      %c0_i32_59 = arith.constant 0 : i32
      %c0_i32_60 = arith.constant 0 : i32
      %c0_i32_61 = arith.constant 0 : i32
      %c0_i32_62 = arith.constant 0 : i32
      %78 = tpu.memref_slice %arg3[%arg0, %77, %c0_i32_61, %c0_i32_62] : memref<2x16x16x128xf32, #tpu.memory_space<any>> -> memref<1x1x16x128xf32, #tpu.memory_space<any>>
      %79 = tpu.memref_squeeze %78 : memref<1x1x16x128xf32, #tpu.memory_space<any>> -> memref<16x128xf32, #tpu.memory_space<any>>
      %c0_i32_63 = arith.constant 0 : i32
      %c0_i32_64 = arith.constant 0 : i32
      %80 = tpu.memref_slice %arg10[%c0_i32_59, %c0_i32_63, %c0_i32_64] : memref<2x16x128xf32, #tpu.memory_space<vmem>> -> memref<1x16x128xf32, #tpu.memory_space<vmem>>
      %81 = tpu.memref_squeeze %80 : memref<1x16x128xf32, #tpu.memory_space<vmem>> -> memref<16x128xf32, #tpu.memory_space<vmem>>
      %82 = tpu.memref_slice %arg11[%c0_i32_60] : memref<2x!tpu.dma_semaphore, #tpu.memory_space<semaphore_mem>> -> memref<1x!tpu.dma_semaphore, #tpu.memory_space<semaphore_mem>>
      %83 = tpu.memref_squeeze %82 : memref<1x!tpu.dma_semaphore, #tpu.memory_space<semaphore_mem>> -> memref<!tpu.dma_semaphore, #tpu.memory_space<semaphore_mem>>
      tpu.wait_dma2 semaphore(%83 : memref<!tpu.dma_semaphore, #tpu.memory_space<semaphore_mem>>) src(%79 : memref<16x128xf32, #tpu.memory_space<any>>) dst(%81 : memref<16x128xf32, #tpu.memory_space<vmem>>)
      %c0_65 = arith.constant 0 : index
      %c0_66 = arith.constant 0 : index
      %c0_67 = arith.constant 0 : index
      %84 = vector.load %arg10[%c0_65, %c0_66, %c0_67] : memref<2x16x128xf32, #tpu.memory_space<vmem>>, vector<1x16x128xf32>
      %85 = vector.shape_cast %84 : vector<1x16x128xf32> to vector<16x128xf32>
      %86 = arith.truncf %85 : vector<16x128xf32> to vector<16x128xbf16>
      %cst_68 = arith.constant dense<0.000000e+00> : vector<16x128xf32>
      %87 = tpu.matmul %86, %7, %cst_68 {dimension_numbers = #tpu.dot_dimension_numbers<[1], [0], [0], [1], [0, 0, 1, 1], [], []>} : vector<16x128xbf16>, vector<128x128xbf16>, vector<16x128xf32> -> vector<16x128xf32>
      %88 = vector.broadcast %8 : vector<1x128xf32> to vector<16x128xf32>
      %89 = arith.addf %87, %88 : vector<16x128xf32>
      %90 = arith.negf %89 : vector<16x128xf32>
      %91 = math.exp %90 : vector<16x128xf32>
      %cst_69 = arith.constant 1.000000e+00 : f32
      %92 = vector.broadcast %cst_69 : f32 to vector<16x128xf32>
      %93 = arith.addf %92, %91 : vector<16x128xf32>
      %94 = arith.divf %92, %93 : vector<16x128xf32>
      %95 = arith.mulf %89, %94 : vector<16x128xf32>
      %96 = vector.shape_cast %95 : vector<16x128xf32> to vector<1x16x128xf32>
      %97 = arith.truncf %96 : vector<1x16x128xf32> to vector<1x16x128xbf16>
      %c0_70 = arith.constant 0 : index
      %c0_71 = arith.constant 0 : index
      %c128_72 = arith.constant 128 : index
      %98 = vector.load %arg9[%c0_70, %c0_71, %c128_72] : memref<10x16x384xbf16, #tpu.memory_space<vmem>>, vector<1x16x128xbf16>
      tpu.vector_store %arg9[%c0_70, %c0_71, %c128_72], %97 {strides = array<i32>} : memref<10x16x384xbf16, #tpu.memory_space<vmem>>, vector<1x16x128xbf16>,
      %99 = vector.extract_strided_slice %97 {offsets = [0, 0, 0], sizes = [1, 15, 128], strides = [1, 1, 1]} : vector<1x16x128xbf16> to vector<1x15x128xbf16>
      %c0_73 = arith.constant 0 : index
      %c1_74 = arith.constant 1 : index
      %c0_75 = arith.constant 0 : index
      %100 = vector.load %arg9[%c0_73, %c1_74, %c0_75] : memref<10x16x384xbf16, #tpu.memory_space<vmem>>, vector<1x15x128xbf16>
      tpu.vector_store %arg9[%c0_73, %c1_74, %c0_75], %99 {strides = array<i32>} : memref<10x16x384xbf16, #tpu.memory_space<vmem>>, vector<1x15x128xbf16>,
      %101 = vector.extract_strided_slice %97 {offsets = [0, 1, 0], sizes = [1, 15, 128], strides = [1, 1, 1]} : vector<1x16x128xbf16> to vector<1x15x128xbf16>
      %c0_76 = arith.constant 0 : index
      %c0_77 = arith.constant 0 : index
      %c256_78 = arith.constant 256 : index
      %102 = vector.load %arg9[%c0_76, %c0_77, %c256_78] : memref<10x16x384xbf16, #tpu.memory_space<vmem>>, vector<1x15x128xbf16>
      tpu.vector_store %arg9[%c0_76, %c0_77, %c256_78], %101 {strides = array<i32>} : memref<10x16x384xbf16, #tpu.memory_space<vmem>>, vector<1x15x128xbf16>,
    } else {
    }
    %c0_i32_25 = arith.constant 0 : i32
    %36 = arith.cmpi eq, %arg1, %c0_i32_25 : i32
    %37 = arith.extui %36 : i1 to i32
    %c0_i32_26 = arith.constant 0 : i32
    %38 = arith.cmpi ne, %37, %c0_i32_26 : i32
    scf.if %38 {
      %cst_58 = arith.constant 0.000000e+00 : bf16
      %77 = vector.broadcast %cst_58 : bf16 to vector<1x16x384xbf16>
      %c0_59 = arith.constant 0 : index
      %c0_60 = arith.constant 0 : index
      %c0_61 = arith.constant 0 : index
      %78 = vector.load %arg9[%c0_59, %c0_60, %c0_61] : memref<10x16x384xbf16, #tpu.memory_space<vmem>>, vector<1x16x384xbf16>
      tpu.vector_store %arg9[%c0_59, %c0_60, %c0_61], %77 {strides = array<i32>} : memref<10x16x384xbf16, #tpu.memory_space<vmem>>, vector<1x16x384xbf16>,
    } else {
    }
    %c1_i32_27 = arith.constant 1 : i32
    %39 = arith.cmpi slt, %arg1, %c1_i32_27 : i32
    %40 = arith.extui %39 : i1 to i32
    %c0_i32_28 = arith.constant 0 : i32
    %41 = arith.cmpi ne, %40, %c0_i32_28 : i32
    scf.if %41 {
      %c8_i32_58 = arith.constant 8 : i32
      %77 = arith.addi %0, %c8_i32_58 : i32
      %c1_i32_59 = arith.constant 1 : i32
      %c1_i32_60 = arith.constant 1 : i32
      %c0_i32_61 = arith.constant 0 : i32
      %c0_i32_62 = arith.constant 0 : i32
      %78 = tpu.memref_slice %arg3[%arg0, %77, %c0_i32_61, %c0_i32_62] : memref<2x16x16x128xf32, #tpu.memory_space<any>> -> memref<1x1x16x128xf32, #tpu.memory_space<any>>
      %79 = tpu.memref_squeeze %78 : memref<1x1x16x128xf32, #tpu.memory_space<any>> -> memref<16x128xf32, #tpu.memory_space<any>>
      %c0_i32_63 = arith.constant 0 : i32
      %c0_i32_64 = arith.constant 0 : i32
      %80 = tpu.memref_slice %arg10[%c1_i32_59, %c0_i32_63, %c0_i32_64] : memref<2x16x128xf32, #tpu.memory_space<vmem>> -> memref<1x16x128xf32, #tpu.memory_space<vmem>>
      %81 = tpu.memref_squeeze %80 : memref<1x16x128xf32, #tpu.memory_space<vmem>> -> memref<16x128xf32, #tpu.memory_space<vmem>>
      %82 = tpu.memref_slice %arg11[%c1_i32_60] : memref<2x!tpu.dma_semaphore, #tpu.memory_space<semaphore_mem>> -> memref<1x!tpu.dma_semaphore, #tpu.memory_space<semaphore_mem>>
      %83 = tpu.memref_squeeze %82 : memref<1x!tpu.dma_semaphore, #tpu.memory_space<semaphore_mem>> -> memref<!tpu.dma_semaphore, #tpu.memory_space<semaphore_mem>>
      tpu.wait_dma2 semaphore(%83 : memref<!tpu.dma_semaphore, #tpu.memory_space<semaphore_mem>>) src(%79 : memref<16x128xf32, #tpu.memory_space<any>>) dst(%81 : memref<16x128xf32, #tpu.memory_space<vmem>>)
      %c1_65 = arith.constant 1 : index
      %c0_66 = arith.constant 0 : index
      %c0_67 = arith.constant 0 : index
      %84 = vector.load %arg10[%c1_65, %c0_66, %c0_67] : memref<2x16x128xf32, #tpu.memory_space<vmem>>, vector<1x16x128xf32>
      %85 = vector.shape_cast %84 : vector<1x16x128xf32> to vector<16x128xf32>
      %86 = arith.truncf %85 : vector<16x128xf32> to vector<16x128xbf16>
      %cst_68 = arith.constant dense<0.000000e+00> : vector<16x128xf32>
      %87 = tpu.matmul %86, %7, %cst_68 {dimension_numbers = #tpu.dot_dimension_numbers<[1], [0], [0], [1], [0, 0, 1, 1], [], []>} : vector<16x128xbf16>, vector<128x128xbf16>, vector<16x128xf32> -> vector<16x128xf32>
      %88 = vector.broadcast %8 : vector<1x128xf32> to vector<16x128xf32>
      %89 = arith.addf %87, %88 : vector<16x128xf32>
      %90 = arith.negf %89 : vector<16x128xf32>
      %91 = math.exp %90 : vector<16x128xf32>
      %cst_69 = arith.constant 1.000000e+00 : f32
      %92 = vector.broadcast %cst_69 : f32 to vector<16x128xf32>
      %93 = arith.addf %92, %91 : vector<16x128xf32>
      %94 = arith.divf %92, %93 : vector<16x128xf32>
      %95 = arith.mulf %89, %94 : vector<16x128xf32>
      %96 = vector.shape_cast %95 : vector<16x128xf32> to vector<1x16x128xf32>
      %97 = arith.truncf %96 : vector<1x16x128xf32> to vector<1x16x128xbf16>
      %c9 = arith.constant 9 : index
      %c0_70 = arith.constant 0 : index
      %c128_71 = arith.constant 128 : index
      %98 = vector.load %arg9[%c9, %c0_70, %c128_71] : memref<10x16x384xbf16, #tpu.memory_space<vmem>>, vector<1x16x128xbf16>
      tpu.vector_store %arg9[%c9, %c0_70, %c128_71], %97 {strides = array<i32>} : memref<10x16x384xbf16, #tpu.memory_space<vmem>>, vector<1x16x128xbf16>,
      %99 = vector.extract_strided_slice %97 {offsets = [0, 0, 0], sizes = [1, 15, 128], strides = [1, 1, 1]} : vector<1x16x128xbf16> to vector<1x15x128xbf16>
      %c9_72 = arith.constant 9 : index
      %c1_73 = arith.constant 1 : index
      %c0_74 = arith.constant 0 : index
      %100 = vector.load %arg9[%c9_72, %c1_73, %c0_74] : memref<10x16x384xbf16, #tpu.memory_space<vmem>>, vector<1x15x128xbf16>
      tpu.vector_store %arg9[%c9_72, %c1_73, %c0_74], %99 {strides = array<i32>} : memref<10x16x384xbf16, #tpu.memory_space<vmem>>, vector<1x15x128xbf16>,
      %101 = vector.extract_strided_slice %97 {offsets = [0, 1, 0], sizes = [1, 15, 128], strides = [1, 1, 1]} : vector<1x16x128xbf16> to vector<1x15x128xbf16>
      %c9_75 = arith.constant 9 : index
      %c0_76 = arith.constant 0 : index
      %c256_77 = arith.constant 256 : index
      %102 = vector.load %arg9[%c9_75, %c0_76, %c256_77] : memref<10x16x384xbf16, #tpu.memory_space<vmem>>, vector<1x15x128xbf16>
      tpu.vector_store %arg9[%c9_75, %c0_76, %c256_77], %101 {strides = array<i32>} : memref<10x16x384xbf16, #tpu.memory_space<vmem>>, vector<1x15x128xbf16>,
    } else {
    }
    %c1_i32_29 = arith.constant 1 : i32
    %42 = arith.cmpi eq, %arg1, %c1_i32_29 : i32
    %43 = arith.extui %42 : i1 to i32
    %c0_i32_30 = arith.constant 0 : i32
    %44 = arith.cmpi ne, %43, %c0_i32_30 : i32
    scf.if %44 {
      %cst_58 = arith.constant 0.000000e+00 : bf16
      %77 = vector.broadcast %cst_58 : bf16 to vector<1x16x384xbf16>
      %c9 = arith.constant 9 : index
      %c0_59 = arith.constant 0 : index
      %c0_60 = arith.constant 0 : index
      %78 = vector.load %arg9[%c9, %c0_59, %c0_60] : memref<10x16x384xbf16, #tpu.memory_space<vmem>>, vector<1x16x384xbf16>
      tpu.vector_store %arg9[%c9, %c0_59, %c0_60], %77 {strides = array<i32>} : memref<10x16x384xbf16, #tpu.memory_space<vmem>>, vector<1x16x384xbf16>,
    } else {
    }
    %c0_31 = arith.constant 0 : index
    %c0_32 = arith.constant 0 : index
    %45 = vector.load %arg7[%c0_31, %c0_32] : memref<1x128xf32, #tpu.memory_space<vmem>>, vector<1x128xf32>
    %c0_33 = arith.constant 0 : index
    %c0_34 = arith.constant 0 : index
    %c0_35 = arith.constant 0 : index
    %46 = vector.load %arg9[%c0_33, %c0_34, %c0_35] : memref<10x16x384xbf16, #tpu.memory_space<vmem>>, vector<8x16x384xbf16>
    %47 = vector.shape_cast %46 : vector<8x16x384xbf16> to vector<128x384xbf16>
    %c0_36 = arith.constant 0 : index
    %c0_37 = arith.constant 0 : index
    %c0_38 = arith.constant 0 : index
    %48 = vector.load %arg6[%c0_36, %c0_37, %c0_38] : memref<3x384x128xbf16, #tpu.memory_space<vmem>>, vector<1x384x128xbf16>
    %49 = vector.shape_cast %48 : vector<1x384x128xbf16> to vector<384x128xbf16>
    %cst_39 = arith.constant dense<0.000000e+00> : vector<128x128xf32>
    %50 = tpu.matmul %47, %49, %cst_39 {dimension_numbers = #tpu.dot_dimension_numbers<[1], [0], [0], [1], [0, 0, 1, 1], [], []>} : vector<128x384xbf16>, vector<384x128xbf16>, vector<128x128xf32> -> vector<128x128xf32>
    %51 = vector.broadcast %45 : vector<1x128xf32> to vector<128x128xf32>
    %52 = arith.addf %51, %50 : vector<128x128xf32>
    %c1_40 = arith.constant 1 : index
    %c0_41 = arith.constant 0 : index
    %c0_42 = arith.constant 0 : index
    %53 = vector.load %arg9[%c1_40, %c0_41, %c0_42] : memref<10x16x384xbf16, #tpu.memory_space<vmem>>, vector<8x16x384xbf16>
    %54 = vector.shape_cast %53 : vector<8x16x384xbf16> to vector<128x384xbf16>
    %c1_43 = arith.constant 1 : index
    %c0_44 = arith.constant 0 : index
    %c0_45 = arith.constant 0 : index
    %55 = vector.load %arg6[%c1_43, %c0_44, %c0_45] : memref<3x384x128xbf16, #tpu.memory_space<vmem>>, vector<1x384x128xbf16>
    %56 = vector.shape_cast %55 : vector<1x384x128xbf16> to vector<384x128xbf16>
    %cst_46 = arith.constant dense<0.000000e+00> : vector<128x128xf32>
    %57 = tpu.matmul %54, %56, %cst_46 {dimension_numbers = #tpu.dot_dimension_numbers<[1], [0], [0], [1], [0, 0, 1, 1], [], []>} : vector<128x384xbf16>, vector<384x128xbf16>, vector<128x128xf32> -> vector<128x128xf32>
    %58 = arith.addf %52, %57 : vector<128x128xf32>
    %c2 = arith.constant 2 : index
    %c0_47 = arith.constant 0 : index
    %c0_48 = arith.constant 0 : index
    %59 = vector.load %arg9[%c2, %c0_47, %c0_48] : memref<10x16x384xbf16, #tpu.memory_space<vmem>>, vector<8x16x384xbf16>
    %60 = vector.shape_cast %59 : vector<8x16x384xbf16> to vector<128x384xbf16>
    %c2_49 = arith.constant 2 : index
    %c0_50 = arith.constant 0 : index
    %c0_51 = arith.constant 0 : index
    %61 = vector.load %arg6[%c2_49, %c0_50, %c0_51] : memref<3x384x128xbf16, #tpu.memory_space<vmem>>, vector<1x384x128xbf16>
    %62 = vector.shape_cast %61 : vector<1x384x128xbf16> to vector<384x128xbf16>
    %cst_52 = arith.constant dense<0.000000e+00> : vector<128x128xf32>
    %63 = tpu.matmul %60, %62, %cst_52 {dimension_numbers = #tpu.dot_dimension_numbers<[1], [0], [0], [1], [0, 0, 1, 1], [], []>} : vector<128x384xbf16>, vector<384x128xbf16>, vector<128x128xf32> -> vector<128x128xf32>
    %64 = arith.addf %58, %63 : vector<128x128xf32>
    %65 = arith.negf %64 : vector<128x128xf32>
    %66 = math.exp %65 : vector<128x128xf32>
    %cst_53 = arith.constant 1.000000e+00 : f32
    %67 = vector.broadcast %cst_53 : f32 to vector<128x128xf32>
    %68 = arith.addf %67, %66 : vector<128x128xf32>
    %69 = arith.divf %67, %68 : vector<128x128xf32>
    %70 = arith.mulf %64, %69 : vector<128x128xf32>
    %71 = vector.shape_cast %14 : vector<8x16x128xf32> to vector<128x128xf32>
    %72 = arith.addf %71, %70 : vector<128x128xf32>
    %73 = vector.shape_cast %72 : vector<128x128xf32> to vector<8x16x128xf32>
    %c0_54 = arith.constant 0 : index
    %c0_55 = arith.constant 0 : index
    %c0_56 = arith.constant 0 : index
    %c0_57 = arith.constant 0 : index
    %74 = vector.load %arg8[%c0_54, %c0_55, %c0_56, %c0_57] : memref<1x8x16x128xf32, #tpu.memory_space<vmem>>, vector<1x8x16x128xf32>
    %75 = vector.shape_cast %74 : vector<1x8x16x128xf32> to vector<8x16x128xf32>
    %76 = vector.shape_cast %73 : vector<8x16x128xf32> to vector<1x8x16x128xf32>
    tpu.vector_store %arg8[%c0_54, %c0_55, %c0_56, %c0_57], %76 {strides = array<i32>} : memref<1x8x16x128xf32, #tpu.memory_space<vmem>>, vector<1x8x16x128xf32>,
    return
  }
  func.func @transform_0(%arg0: i32, %arg1: i32) -> (i32, i32, i32, i32) {
    %c0_i32 = arith.constant 0 : i32
    %c0_i32_0 = arith.constant 0 : i32
    %c0_i32_1 = arith.constant 0 : i32
    return %arg0, %arg1, %c0_i32, %c0_i32_0 : i32, i32, i32, i32
  }
  func.func @transform_2(%arg0: i32, %arg1: i32) -> (i32, i32) {
    %c0_i32 = arith.constant 0 : i32
    %c0_i32_0 = arith.constant 0 : i32
    %c0_i32_1 = arith.constant 0 : i32
    return %c0_i32, %c0_i32_0 : i32, i32
  }
  func.func @transform_3(%arg0: i32, %arg1: i32) -> (i32, i32) {
    %c0_i32 = arith.constant 0 : i32
    %c0_i32_0 = arith.constant 0 : i32
    %c0_i32_1 = arith.constant 0 : i32
    return %c0_i32, %c0_i32_0 : i32, i32
  }
  func.func @transform_4(%arg0: i32, %arg1: i32) -> (i32, i32, i32) {
    %c0_i32 = arith.constant 0 : i32
    %c0_i32_0 = arith.constant 0 : i32
    %c0_i32_1 = arith.constant 0 : i32
    %c0_i32_2 = arith.constant 0 : i32
    return %c0_i32, %c0_i32_0, %c0_i32_1 : i32, i32, i32
  }
  func.func @transform_5(%arg0: i32, %arg1: i32) -> (i32, i32) {
    %c0_i32 = arith.constant 0 : i32
    %c0_i32_0 = arith.constant 0 : i32
    %c0_i32_1 = arith.constant 0 : i32
    return %c0_i32, %c0_i32_0 : i32, i32
  }
  func.func @transform_6(%arg0: i32, %arg1: i32) -> (i32, i32, i32, i32) {
    %c0_i32 = arith.constant 0 : i32
    %c0_i32_0 = arith.constant 0 : i32
    %c0_i32_1 = arith.constant 0 : i32
    return %arg0, %arg1, %c0_i32, %c0_i32_0 : i32, i32, i32, i32
  }
}

</mosaic_0001>

<llo_original>
// kernel: tpu_custom_call.1
$region0: #{tpu_custom_call.1}
  #allocation0 [shape = 'u32[]', space=smem, size = 0x4, offset = 0x4, fixed_abs, tag = 'smem constant byte address 0x4 - core index']
  #allocation1 [shape = 'u32[144,128]{1,0:T(1,128)}', space=vmem, size = 0x12000, scoped, tag = 'internal scratch']
  #allocation2 [shape = 'bf16[10,16,384]{2,1,0:T(8,128)(2,1)}', space=vmem, size = 0x1e000, scoped, tag = 'scratch operand']
  #allocation3 [shape = 'f32[2,16,128]{2,1,0:T(8,128)}', space=vmem, size = 0x4000, scoped, tag = 'scratch operand']
  #allocation4 [shape = 's32[2]{0}', space=sflag, size = 0x8, scoped, tag = 'scratch operand']
  #allocation12 [shape = 's32[]', space=sflag, size = 0x4, offset = 0, fixed_abs, tag = 'sflag constant byte address 0x0 - dummy sync flag']
  #allocation13 [shape = 's32[]', space=sflag, size = 0x4, offset = 0, fixed_abs, tag = 'sflag constant byte address 0x0 - dummy sync flag']
  #allocation14 [shape = 'u32[]', space=smem, size = 0x4, offset = 0x44, fixed_abs, tag = 'smem constant byte address 0x44 - assertion arg 0']
  #allocation15 [shape = 'u32[]', space=smem, size = 0x4, offset = 0x48, fixed_abs, tag = 'smem constant byte address 0x48 - assertion arg 1']
  #allocation16 [shape = 's32[]', space=sflag, size = 0x4, offset = 0, fixed_abs, tag = 'sflag constant byte address 0x0 - dummy sync flag']
  #allocation17 [shape = 's32[]', space=sflag, size = 0x4, offset = 0, fixed_abs, tag = 'sflag constant byte address 0x0 - dummy sync flag']
  %s0 = inlined_call_operand.hbm [shape: f32[2,16,16,128], index: 0, kind: input, shape index: {}]
  %s1 = inlined_call_operand.hbm [shape: f32[2,16,16,128], index: 1, kind: input, shape index: {}]
  %s2 = inlined_call_operand.hbm [shape: bf16[128,128], index: 2, kind: input, shape index: {}]
  %s3 = inlined_call_operand.vmem [shape: f32[1,128], index: 3, kind: input, shape index: {}]
  %s4 = inlined_call_operand.hbm [shape: bf16[3,384,128], index: 4, kind: input, shape index: {}]
  %s5 = inlined_call_operand.vmem [shape: f32[1,128], index: 5, kind: input, shape index: {}]
  %s6 = inlined_call_operand.hbm [shape: f32[2,16,16,128], index: 6, kind: output, shape index: {}]
  %s7 = sld [smem:[#allocation0]]
  $region97: #{tpu_custom_call.1} parent=0
    _
  %s9 = ssub.s32 1, %s7
  %s10 = scalar_select 0, %s9, %s7
  $region1: #{tpu_custom_call.1} parent=0
    #allocation5 [shape = 'u8[131072]{0}', space=vmem, size = 0x20000, scoped, tag = 'input window, operand 0']
    #allocation6 [shape = 's32[2]{0}', space=sflag, size = 0x8, scoped, tag = 'scoped memory for tpu_custom_call.1']
    #allocation7 [shape = 's32[2]{0}', space=sflag, size = 0x8, scoped, tag = 'scoped memory for tpu_custom_call.1']
    #allocation8 [shape = 'u8[32768]{0}', space=vmem, size = 0x8000, scoped, tag = 'input window, operand 2, single buffered']
    #allocation9 [shape = 's32[1]{0}', space=sflag, size = 0x4, scoped, tag = 'scoped memory for tpu_custom_call.1']
    #allocation10 [shape = 'u8[294912]{0}', space=vmem, size = 0x48000, scoped, tag = 'input window, operand 4, single buffered']
    #allocation11 [shape = 'u8[131072]{0}', space=vmem, size = 0x20000, scoped, tag = 'output window, operand 0']
    %11 = vsyncpa [#allocation6], 0
    %s12 = scalar_lea.sflag [#allocation6], 1
    %13 = vsyncpa %s12, 0
    %14 = vsyncpa [#allocation9], 0
    %15 = vsyncpa [#allocation7], 0
    %s16 = scalar_lea.sflag [#allocation7], 1
    %17 = vsyncpa %s16, 0
    loop: start=0, step=1, limit=6
    $region2: #{tpu_custom_call.1} parent=1 // loop_pre_header
      _
    $region3: #{tpu_custom_call.1} parent=1 // loop_header
      %s19 = sphi 0, %s23
      %p20 = scmp.ge.s32.totalorder %s19, 6
      %s26 = sphi 0, %s38
      %s27 = sphi 0, %s34
      %s28 = sphi 0, %s26
      %s29 = sphi 0, %s27
      %s30 = sphi 0, %s28
      %s31 = sphi 0, %s29
      %s43 = sphi 0, %s45
      %s46 = sphi 0, %s43
      %s47 = sphi 0, %s46
      %s63 = sphi 0, %s47
      %s67 = sphi 0, %s67
      %s69 = sphi 0, %s67
      %s70 = sphi 0, %s69
      %s84 = sphi 0, %s70
      %s88 = sphi 0, %s88
      %s90 = sphi 0, %s88
      %s91 = sphi 0, %s90
      %s105 = sphi 0, %s91
      %s109 = sphi 0, %s109
      %s111 = sphi 0, %s109
      %s112 = sphi 0, %s111
      %s126 = sphi 0, %s112
      %s130 = sphi 0, %s130
      %s132 = sphi 0, %s130
      %s133 = sphi 0, %s132
      %s147 = sphi 0, %s133
      %s155 = sphi 0, %s157
      %s158 = sphi 0, %s155
      %s159 = sphi 0, %s158
      %s175 = sphi 0, %s159
    $region4: #{tpu_custom_call.1} parent=1 // loop_header_branch
      %22 = sbr.rel (%p20) target = $region8
    $region5: #{tpu_custom_call.1} parent=1 // loop_body
      %s24 = ssub.s32 %s19, 1
      %s25 = ssub.s32 %s19, 2
      %s32 = sadd.s32 1, %s27
      %p33 = scmp.ge.s32.totalorder %s32, 2
      %s34 = scalar_select %p33, 0, %s32
      %s35 = sadd.s32 1, %s26
      %s36 = scalar_select %p33, %s35, %s26
      %p37 = scmp.ge.s32.totalorder %s36, 2
      %s38 = scalar_select %p37, 0, %s36
      %s39 = ssub.s32 %s26, %s38
      %s40 = ssub.s32 %s27, %s34
      %s41 = sor.u32 %s39, %s40
      %p42 = scmp.eq.s32.totalorder %s41, 0
      %s44 = sadd.s32 %s43, 1
      %s45 = scalar_select %p42, %s43, %s44
      %p48 = pneg %p42
      %p49 = scmp.eq.s32.totalorder %s19, 3
      %p50 = por %p48, %p49
      %p51 = scmp.ne.s32.totalorder %s43, %s46
      %p52 = scmp.eq.s32.totalorder %s19, 0
      %p53 = por %p51, %p52
      %p54 = scmp.ne.s32.totalorder %s43, %s46
      %p55 = scmp.eq.s32.totalorder %s24, 3
      %p56 = por %p54, %p55
      %p57 = scmp.ne.s32.totalorder %s46, %s47
      %p58 = scmp.eq.s32.totalorder %s24, 0
      %p59 = por %p57, %p58
      %p60 = scmp.ne.s32.totalorder %s46, %s47
      %p61 = scmp.eq.s32.totalorder %s25, 3
      %p62 = por %p60, %p61
      %p64 = scmp.ne.s32.totalorder %s47, %s63
      %p65 = scmp.eq.s32.totalorder %s25, 0
      %p66 = por %p64, %p65
      %s68 = sadd.s32 %s67, 1
      %p71 = scmp.eq.s32.totalorder %s19, 3
      %p72 = scmp.ne.s32.totalorder %s67, %s69
      %p73 = scmp.eq.s32.totalorder %s19, 0
      %p74 = por %p72, %p73
      %p75 = scmp.ne.s32.totalorder %s67, %s69
      %p76 = scmp.eq.s32.totalorder %s24, 3
      %p77 = por %p75, %p76
      %p78 = scmp.ne.s32.totalorder %s69, %s70
      %p79 = scmp.eq.s32.totalorder %s24, 0
      %p80 = por %p78, %p79
      %p81 = scmp.ne.s32.totalorder %s69, %s70
      %p82 = scmp.eq.s32.totalorder %s25, 3
      %p83 = por %p81, %p82
      %p85 = scmp.ne.s32.totalorder %s70, %s84
      %p86 = scmp.eq.s32.totalorder %s25, 0
      %p87 = por %p85, %p86
      %s89 = sadd.s32 %s88, 1
      %p92 = scmp.eq.s32.totalorder %s19, 3
      %p93 = scmp.ne.s32.totalorder %s88, %s90
      %p94 = scmp.eq.s32.totalorder %s19, 0
      %p95 = por %p93, %p94
      %p96 = scmp.ne.s32.totalorder %s88, %s90
      %p97 = scmp.eq.s32.totalorder %s24, 3
      %p98 = por %p96, %p97
      %p99 = scmp.ne.s32.totalorder %s90, %s91
      %p100 = scmp.eq.s32.totalorder %s24, 0
      %p101 = por %p99, %p100
      %p102 = scmp.ne.s32.totalorder %s90, %s91
      %p103 = scmp.eq.s32.totalorder %s25, 3
      %p104 = por %p102, %p103
      %p106 = scmp.ne.s32.totalorder %s91, %s105
      %p107 = scmp.eq.s32.totalorder %s25, 0
      %p108 = por %p106, %p107
      %s110 = sadd.s32 %s109, 1
      %p113 = scmp.eq.s32.totalorder %s19, 3
      %p114 = scmp.ne.s32.totalorder %s109, %s111
      %p115 = scmp.eq.s32.totalorder %s19, 0
      %p116 = por %p114, %p115
      %p117 = scmp.ne.s32.totalorder %s109, %s111
      %p118 = scmp.eq.s32.totalorder %s24, 3
      %p119 = por %p117, %p118
      %p120 = scmp.ne.s32.totalorder %s111, %s112
      %p121 = scmp.eq.s32.totalorder %s24, 0
      %p122 = por %p120, %p121
      %p123 = scmp.ne.s32.totalorder %s111, %s112
      %p124 = scmp.eq.s32.totalorder %s25, 3
      %p125 = por %p123, %p124
      %p127 = scmp.ne.s32.totalorder %s112, %s126
      %p128 = scmp.eq.s32.totalorder %s25, 0
      %p129 = por %p127, %p128
      %s131 = sadd.s32 %s130, 1
      %p134 = scmp.eq.s32.totalorder %s19, 3
      %p135 = scmp.ne.s32.totalorder %s130, %s132
      %p136 = scmp.eq.s32.totalorder %s19, 0
      %p137 = por %p135, %p136
      %p138 = scmp.ne.s32.totalorder %s130, %s132
      %p139 = scmp.eq.s32.totalorder %s24, 3
      %p140 = por %p138, %p139
      %p141 = scmp.ne.s32.totalorder %s132, %s133
      %p142 = scmp.eq.s32.totalorder %s24, 0
      %p143 = por %p141, %p142
      %p144 = scmp.ne.s32.totalorder %s132, %s133
      %p145 = scmp.eq.s32.totalorder %s25, 3
      %p146 = por %p144, %p145
      %p148 = scmp.ne.s32.totalorder %s133, %s147
      %p149 = scmp.eq.s32.totalorder %s25, 0
      %p150 = por %p148, %p149
      %s151 = ssub.s32 %s26, %s38
      %s152 = ssub.s32 %s27, %s34
      %s153 = sor.u32 %s151, %s152
      %p154 = scmp.eq.s32.totalorder %s153, 0
      %s156 = sadd.s32 %s155, 1
      %s157 = scalar_select %p154, %s155, %s156
      %p160 = pneg %p154
      %p161 = scmp.eq.s32.totalorder %s19, 3
      %p162 = por %p160, %p161
      %p163 = scmp.ne.s32.totalorder %s155, %s158
      %p164 = scmp.eq.s32.totalorder %s19, 0
      %p165 = por %p163, %p164
      %p166 = scmp.ne.s32.totalorder %s155, %s158
      %p167 = scmp.eq.s32.totalorder %s24, 3
      %p168 = por %p166, %p167
      %p169 = scmp.ne.s32.totalorder %s158, %s159
      %p170 = scmp.eq.s32.totalorder %s24, 0
      %p171 = por %p169, %p170
      %p172 = scmp.ne.s32.totalorder %s158, %s159
      %p173 = scmp.eq.s32.totalorder %s25, 3
      %p174 = por %p172, %p173
      %p176 = scmp.ne.s32.totalorder %s159, %s175
      %p177 = scmp.eq.s32.totalorder %s25, 0
      %p178 = por %p176, %p177
      %p179 = scmp.le.s32.totalorder 1, %s19
      %p180 = scmp.lt.s32.totalorder %s19, 5
      %p181 = pnand %p179, %p180
      %p182 = pneg %p181
      // Predicated region
      $region9: #{tpu_custom_call.1} parent=5 // pred_check
        _
      $region10: #{tpu_custom_call.1} parent=5 // pred_check_branch
        %184 = sbr.rel (%p181) target = $region12
      $region11: #{tpu_custom_call.1} parent=5 // pred_region
        %s185 = ssub.s32 %s19, 1
        // Predicated region
        $region13: #{tpu_custom_call.1} parent=11 // pred_check
          %p186 = pneg %p80
        $region14: #{tpu_custom_call.1} parent=11 // pred_check_branch
          %188 = sbr.rel (%p186) target = $region16
        $region15: #{tpu_custom_call.1} parent=11 // pred_region
          %s190 = ssub.s32 1024, 1024
          %191 = vsyncadd [#allocation9], %s190
          %s192 = sshll.u32 [#allocation8], 4
          %s193 = int_to_ptr.vmem [resolvable:$true] %s192
          %198 = dma.hbm_to_vmem [thread:$0]  %s2, 1024, %s193, [#allocation9], 64, 64, 4
        $region16: #{tpu_custom_call.1} parent=11 // pred_fallthru
          _
        // Predicated region
        $region17: #{tpu_custom_call.1} parent=11 // pred_check
          %p199 = pneg %p101
        $region18: #{tpu_custom_call.1} parent=11 // pred_check_branch
          %201 = sbr.rel (%p199) target = $region20
        $region19: #{tpu_custom_call.1} parent=11 // pred_region
          _
        $region20: #{tpu_custom_call.1} parent=11 // pred_fallthru
          _
        // Predicated region
        $region21: #{tpu_custom_call.1} parent=11 // pred_check
          %p202 = pneg %p122
        $region22: #{tpu_custom_call.1} parent=11 // pred_check_branch
          %204 = sbr.rel (%p202) target = $region24
        $region23: #{tpu_custom_call.1} parent=11 // pred_region
          %s206 = ssub.s32 9216, 9216
          %207 = vsyncadd [#allocation9], %s206
          %s208 = sshll.u32 [#allocation10], 4
          %s209 = int_to_ptr.vmem [resolvable:$true] %s208
          %214 = dma.hbm_to_vmem [thread:$0]  %s4, 9216, %s209, [#allocation9], 64, 64, 4
        $region24: #{tpu_custom_call.1} parent=11 // pred_fallthru
          _
        // Predicated region
        $region25: #{tpu_custom_call.1} parent=11 // pred_check
          %p215 = pneg %p143
        $region26: #{tpu_custom_call.1} parent=11 // pred_check_branch
          %217 = sbr.rel (%p215) target = $region28
        $region27: #{tpu_custom_call.1} parent=11 // pred_region
          _
        $region28: #{tpu_custom_call.1} parent=11 // pred_fallthru
          _
      $region12: #{tpu_custom_call.1} parent=5 // pred_fallthru
        _
      %p218 = scmp.lt.s32.totalorder %s19, 4
      // Predicated region
      $region29: #{tpu_custom_call.1} parent=5 // pred_check
        %p219 = pneg %p218
      $region30: #{tpu_custom_call.1} parent=5 // pred_check_branch
        %221 = sbr.rel (%p219) target = $region32
      $region31: #{tpu_custom_call.1} parent=5 // pred_region
        // Predicated region
        $region33: #{tpu_custom_call.1} parent=31 // pred_check
          %p222 = pneg %p53
        $region34: #{tpu_custom_call.1} parent=31 // pred_check_branch
          %224 = sbr.rel (%p222) target = $region36
        $region35: #{tpu_custom_call.1} parent=31 // pred_region
          %s225 = sand.u32 %s43, 1
          %s226 = scalar_lea.sflag [#allocation6], %s225
          %s227 = sand.u32 %s43, 1
          %s228 = smul.addr %s227, 128
          %s229 = scalar_lea.vmem [#allocation5], %s228
          %s230 = smul.u32 8, %s27
          %s232 = ssub.s32 2048, 2048
          %233 = vsyncadd %s226, %s232
          %s234 = smul.addr %s230, 2
          %s235 = smul.addr %s26, 32
          %s236 = sadd.s32 %s234, %s235
          %s237 = smul.addr %s236, 128
          %s238 = scalar_lea.hbm %s0, %s237
          %s239 = sshll.u32 %s229, 4
          %s240 = int_to_ptr.vmem [resolvable:$true] %s239
          %245 = dma.hbm_to_vmem [thread:$0]  %s238, 2048, %s240, %s226, 128, 128, 8
        $region36: #{tpu_custom_call.1} parent=31 // pred_fallthru
          _
      $region32: #{tpu_custom_call.1} parent=5 // pred_fallthru
        _
      %p246 = scmp.le.s32.totalorder 1, %s19
      %p247 = scmp.lt.s32.totalorder %s19, 5
      %p248 = pnand %p246, %p247
      %p249 = pneg %p248
      // Predicated region
      $region37: #{tpu_custom_call.1} parent=5 // pred_check
        _
      $region38: #{tpu_custom_call.1} parent=5 // pred_check_branch
        %251 = sbr.rel (%p248) target = $region40
      $region39: #{tpu_custom_call.1} parent=5 // pred_region
        %s252 = ssub.s32 %s19, 1
        %s253 = sand.u32 %s46, 1
        %s254 = scalar_lea.sflag [#allocation6], %s253
        %s255 = sand.u32 %s46, 1
        %s256 = smul.addr %s255, 128
        %s257 = scalar_lea.vmem [#allocation5], %s256
        // Predicated region
        $region41: #{tpu_custom_call.1} parent=39 // pred_check
          %p258 = pneg %p59
        $region42: #{tpu_custom_call.1} parent=39 // pred_check_branch
          %260 = sbr.rel (%p258) target = $region44
        $region43: #{tpu_custom_call.1} parent=39 // pred_region
          %261 = dma.done %s254, 2048
        $region44: #{tpu_custom_call.1} parent=39 // pred_fallthru
          _
        // Predicated region
        $region45: #{tpu_custom_call.1} parent=39 // pred_check
          %p262 = pneg %p80
        $region46: #{tpu_custom_call.1} parent=39 // pred_check_branch
          %264 = sbr.rel (%p262) target = $region48
        $region47: #{tpu_custom_call.1} parent=39 // pred_region
          %265 = dma.done [#allocation9], 1024
        $region48: #{tpu_custom_call.1} parent=39 // pred_fallthru
          _
        // Predicated region
        $region49: #{tpu_custom_call.1} parent=39 // pred_check
          %p266 = pneg %p122
        $region50: #{tpu_custom_call.1} parent=39 // pred_check_branch
          %268 = sbr.rel (%p266) target = $region52
        $region51: #{tpu_custom_call.1} parent=39 // pred_region
          %269 = dma.done [#allocation9], 9216
        $region52: #{tpu_custom_call.1} parent=39 // pred_fallthru
          _
        %s270 = sand.u32 %s46, 1
        %s271 = scalar_lea.sflag [#allocation6], %s270
        %s272 = sand.u32 %s46, 1
        %s273 = smul.addr %s272, 128
        %s274 = scalar_lea.vmem [#allocation5], %s273
        %p275 = pneg %p59
        %p276 = pneg %p56
        %p277 = pneg %p80
        %p278 = pneg %p77
        %p279 = pneg %p101
        %p280 = pneg %p98
        %p281 = pneg %p122
        %p282 = pneg %p119
        %p283 = pneg %p143
        %p284 = pneg %p140
        %p285 = pneg %p171
        %p286 = pneg %p168
        %s287 = sand.u32 %s158, 1
        %s288 = scalar_lea.sflag [#allocation7], %s287
        %s289 = sand.u32 %s158, 1
        %s290 = smul.addr %s289, 128
        %s291 = scalar_lea.vmem [#allocation11], %s290
        %s292 = smul.u32 8, %s29
        %s293 = smul.u32 8, %s29
        %s295 = smul.u32 %s29, 8
        %p296 = scmp.gt.s32.totalorder %s29, 0
        // Predicated region
        $region53: #{tpu_custom_call.1} parent=39 // pred_check
          %p297 = pneg %p296
        $region54: #{tpu_custom_call.1} parent=39 // pred_check_branch
          %299 = sbr.rel (%p297) target = $region56
        $region55: #{tpu_custom_call.1} parent=39 // pred_region
          %s300 = ssub.s32 %s295, 1
          %s301 = smul.u32 %s300, 16
          %s302 = smul.u32 %s28, 256
          %s303 = sadd.s32 %s301, %s302
          %s304 = smul.addr %s303, 16
          %s305 = scalar_lea.hbm %s1, %s304
          // Predicated region
          $region57: #{tpu_custom_call.1} parent=55 // pred_check
            _
          $region58: #{tpu_custom_call.1} parent=55 // pred_check_branch
            %307 = sbr.rel target = $region60
          $region59: #{tpu_custom_call.1} parent=55 // pred_region
            %308 = sst [smem:[#allocation14]] [#allocation13]
            %309 = sst [smem:[#allocation15]] [#allocation12]
          $region60: #{tpu_custom_call.1} parent=55 // pred_fallthru
            _
          %311 = shalt.err (0)
          %s313 = sshll.u32 [#allocation3], 4
          %s314 = int_to_ptr.vmem [resolvable:$true] %s313
          %316 = dma.hbm_to_vmem [thread:$0]  %s305, 256, %s314, [#allocation4]
        $region56: #{tpu_custom_call.1} parent=39 // pred_fallthru
          _
        %p317 = scmp.lt.s32.totalorder %s29, 1
        // Predicated region
        $region61: #{tpu_custom_call.1} parent=39 // pred_check
          %p318 = pneg %p317
        $region62: #{tpu_custom_call.1} parent=39 // pred_check_branch
          %320 = sbr.rel (%p318) target = $region64
        $region63: #{tpu_custom_call.1} parent=39 // pred_region
          %s321 = sadd.s32 %s295, 8
          %s322 = smul.u32 %s321, 16
          %s323 = smul.u32 %s28, 256
          %s324 = sadd.s32 %s322, %s323
          %s325 = smul.addr %s324, 16
          %s326 = scalar_lea.hbm %s1, %s325
          %s327 = scalar_lea.vmem [#allocation3], 16
          %s328 = scalar_lea.sflag [#allocation4], 1
          // Predicated region
          $region65: #{tpu_custom_call.1} parent=63 // pred_check
            _
          $region66: #{tpu_custom_call.1} parent=63 // pred_check_branch
            %330 = sbr.rel target = $region68
          $region67: #{tpu_custom_call.1} parent=63 // pred_region
            %331 = sst [smem:[#allocation14]] [#allocation17]
            %332 = sst [smem:[#allocation15]] [#allocation16]
          $region68: #{tpu_custom_call.1} parent=63 // pred_fallthru
            _
          %334 = shalt.err (0)
          %s336 = sshll.u32 %s327, 4
          %s337 = int_to_ptr.vmem [resolvable:$true] %s336
          %339 = dma.hbm_to_vmem [thread:$0]  %s326, 256, %s337, %s328
        $region64: #{tpu_custom_call.1} parent=39 // pred_fallthru
          _
        %v340 = vld [vmem:[#allocation8] sm:$0xf]
        %v341 = vld [vmem:[#allocation8 + $0x4] sm:$0xf]
        %v342 = vld [vmem:[#allocation8 + $0x8] sm:$0xf]
        %v343 = vld [vmem:[#allocation8 + $0xc] sm:$0xf]
        %v344 = vld [vmem:[#allocation8 + $0x10] sm:$0xf]
        %v345 = vld [vmem:[#allocation8 + $0x14] sm:$0xf]
        %v346 = vld [vmem:[#allocation8 + $0x18] sm:$0xf]
        %v347 = vld [vmem:[#allocation8 + $0x1c] sm:$0xf]
        %v348 = vld [vmem:[#allocation8 + $0x20] sm:$0xf]
        %v349 = vld [vmem:[#allocation8 + $0x24] sm:$0xf]
        %v350 = vld [vmem:[#allocation8 + $0x28] sm:$0xf]
        %v351 = vld [vmem:[#allocation8 + $0x2c] sm:$0xf]
        %v352 = vld [vmem:[#allocation8 + $0x30] sm:$0xf]
        %v353 = vld [vmem:[#allocation8 + $0x34] sm:$0xf]
        %v354 = vld [vmem:[#allocation8 + $0x38] sm:$0xf]
        %v355 = vld [vmem:[#allocation8 + $0x3c] sm:$0xf]
        %v356 = vld [vmem:[%s3] sm:$0x1]
        %vm357 = vcmask 1040384
        %vm358 = vsmask.f32 256
        %vm359 = vmand %vm357, %vm358
        %v360 = vld [vmem:[#allocation2] sm:$0x1]
        %v361 = vsel %vm359, 0, %v360
        %362 = vst [vmem:[#allocation2] sm:$0x1] %v361
        %v363 = vld [vmem:[#allocation2 + $0x18] sm:$0x1]
        %v364 = vsel %vm359, 0, %v363
        %365 = vst [vmem:[#allocation2 + $0x18] sm:$0x1] %v364
        %v366 = vld [vmem:[#allocation2 + $0x30] sm:$0x1]
        %v367 = vsel %vm359, 0, %v366
        %368 = vst [vmem:[#allocation2 + $0x30] sm:$0x1] %v367
        %v369 = vld [vmem:[#allocation2 + $0x48] sm:$0x1]
        %v370 = vsel %vm359, 0, %v369
        %371 = vst [vmem:[#allocation2 + $0x48] sm:$0x1] %v370
        %v372 = vld [vmem:[#allocation2 + $0x60] sm:$0x1]
        %v373 = vsel %vm359, 0, %v372
        %374 = vst [vmem:[#allocation2 + $0x60] sm:$0x1] %v373
        %v375 = vld [vmem:[#allocation2 + $0x78] sm:$0x1]
        %v376 = vsel %vm359, 0, %v375
        %377 = vst [vmem:[#allocation2 + $0x78] sm:$0x1] %v376
        %v378 = vld [vmem:[#allocation2 + $0x90] sm:$0x1]
        %v379 = vsel %vm359, 0, %v378
        %380 = vst [vmem:[#allocation2 + $0x90] sm:$0x1] %v379
        %v381 = vld [vmem:[#allocation2 + $0xa8] sm:$0x1]
        %v382 = vsel %vm359, 0, %v381
        %383 = vst [vmem:[#allocation2 + $0xa8] sm:$0x1] %v382
        %v384 = vld [vmem:[#allocation2 + $0xc0] sm:$0x1]
        %v385 = vsel %vm359, 0, %v384
        %386 = vst [vmem:[#allocation2 + $0xc0] sm:$0x1] %v385
        %v387 = vld [vmem:[#allocation2 + $0xd8] sm:$0x1]
        %v388 = vsel %vm359, 0, %v387
        %389 = vst [vmem:[#allocation2 + $0xd8] sm:$0x1] %v388
        %vm390 = vcmask 1043459
        %vm391 = vsmask.f32 7950
        %vm392 = vmand %vm390, %vm391
        %v393 = vld [vmem:[#allocation2 + $0x14] sm:$0x8]
        %v394 = vsel %vm392, 0, %v393
        %395 = vst [vmem:[#allocation2 + $0x14] sm:$0x8] %v394
        %v396 = vld [vmem:[#allocation2 + $0x2c] sm:$0x8]
        %v397 = vsel %vm392, 0, %v396
        %398 = vst [vmem:[#allocation2 + $0x2c] sm:$0x8] %v397
        %v399 = vld [vmem:[#allocation2 + $0x44] sm:$0x8]
        %v400 = vsel %vm392, 0, %v399
        %401 = vst [vmem:[#allocation2 + $0x44] sm:$0x8] %v400
        %v402 = vld [vmem:[#allocation2 + $0x5c] sm:$0x8]
        %v403 = vsel %vm392, 0, %v402
        %404 = vst [vmem:[#allocation2 + $0x5c] sm:$0x8] %v403
        %v405 = vld [vmem:[#allocation2 + $0x74] sm:$0x8]
        %v406 = vsel %vm392, 0, %v405
        %407 = vst [vmem:[#allocation2 + $0x74] sm:$0x8] %v406
        %v408 = vld [vmem:[#allocation2 + $0x8c] sm:$0x8]
        %v409 = vsel %vm392, 0, %v408
        %410 = vst [vmem:[#allocation2 + $0x8c] sm:$0x8] %v409
        %v411 = vld [vmem:[#allocation2 + $0xa4] sm:$0x8]
        %v412 = vsel %vm392, 0, %v411
        %413 = vst [vmem:[#allocation2 + $0xa4] sm:$0x8] %v412
        %v414 = vld [vmem:[#allocation2 + $0xbc] sm:$0x8]
        %v415 = vsel %vm392, 0, %v414
        %416 = vst [vmem:[#allocation2 + $0xbc] sm:$0x8] %v415
        %v417 = vld [vmem:[#allocation2 + $0xd4] sm:$0x8]
        %v418 = vsel %vm392, 0, %v417
        %419 = vst [vmem:[#allocation2 + $0xd4] sm:$0x8] %v418
        %v420 = vld [vmem:[#allocation2 + $0xec] sm:$0x8]
        %v421 = vsel %vm392, 0, %v420
        %422 = vst [vmem:[#allocation2 + $0xec] sm:$0x8] %v421
        %v423 = vld [vmem:[%s257] sm:$0xff]
        %v424 = vld [vmem:[%s257 + $0x8] sm:$0xff]
        %v425 = vld [vmem:[%s257 + $0x10] sm:$0xff]
        %v426 = vld [vmem:[%s257 + $0x18] sm:$0xff]
        %v427 = vld [vmem:[%s257 + $0x20] sm:$0xff]
        %v428 = vld [vmem:[%s257 + $0x28] sm:$0xff]
        %v429 = vld [vmem:[%s257 + $0x30] sm:$0xff]
        %v430 = vld [vmem:[%s257 + $0x38] sm:$0xff]
        %v431 = vld [vmem:[%s257 + $0x40] sm:$0xff]
        %v432 = vld [vmem:[%s257 + $0x48] sm:$0xff]
        %v433 = vld [vmem:[%s257 + $0x50] sm:$0xff]
        %v434 = vld [vmem:[%s257 + $0x58] sm:$0xff]
        %v435 = vld [vmem:[%s257 + $0x60] sm:$0xff]
        %v436 = vld [vmem:[%s257 + $0x68] sm:$0xff]
        %v437 = vld [vmem:[%s257 + $0x70] sm:$0xff]
        %v438 = vld [vmem:[%s257 + $0x78] sm:$0xff]
        %v439 = vpack.c.bf16 %v424, %v423
        %v440 = vpack.c.bf16 %v426, %v425
        %v441 = vpack.c.bf16 %v428, %v427
        %v442 = vpack.c.bf16 %v430, %v429
        %v443 = vpack.c.bf16 %v432, %v431
        %v444 = vpack.c.bf16 %v434, %v433
        %v445 = vpack.c.bf16 %v436, %v435
        %v446 = vpack.c.bf16 %v438, %v437
        %v448 = vlaneseq
        %v449 = vshrl.u32 %v448, 7
        %v450 = vsub.s32 0, %v449
        %v451 = vrot.slane %v356, %v450
        %v469 = vunpack.c.l.b16 %v340
        %v470 = vunpack.c.l.b16 %v341
        %v471 = vunpack.c.l.b16 %v342
        %v472 = vunpack.c.l.b16 %v343
        %v473 = vunpack.c.l.b16 %v344
        %v474 = vunpack.c.l.b16 %v345
        %v475 = vunpack.c.l.b16 %v346
        %v476 = vunpack.c.l.b16 %v347
        %v477 = vunpack.c.l.b16 %v348
        %v478 = vunpack.c.l.b16 %v349
        %v479 = vunpack.c.l.b16 %v350
        %v480 = vunpack.c.l.b16 %v351
        %v481 = vunpack.c.l.b16 %v352
        %v482 = vunpack.c.l.b16 %v353
        %v483 = vunpack.c.l.b16 %v354
        %v484 = vunpack.c.l.b16 %v355
        %v485 = vpack.c.b16 %v470, %v469
        %v486 = vpack.c.b16 %v472, %v471
        %v487 = vpack.c.b16 %v474, %v473
        %v488 = vpack.c.b16 %v476, %v475
        %v489 = vpack.c.b16 %v478, %v477
        %v490 = vpack.c.b16 %v480, %v479
        %v491 = vpack.c.b16 %v482, %v481
        %v492 = vpack.c.b16 %v484, %v483
        %501 = vmatprep.subr.bf16.mxu0 0
        %502 = vmatpush1.bf16.msra.mxu0 %v492
        %503 = vmatprep.subr.bf16.mxu0 0
        %504 = vmatpush1.bf16.msra.mxu0 %v491
        %505 = vmatprep.subr.bf16.mxu0 0
        %506 = vmatpush1.bf16.msra.mxu0 %v490
        %507 = vmatprep.subr.bf16.mxu0 0
        %508 = vmatpush1.bf16.msra.mxu0 %v489
        %509 = vmatprep.subr.bf16.mxu0 0
        %510 = vmatpush1.bf16.msra.mxu0 %v488
        %511 = vmatprep.subr.bf16.mxu0 0
        %512 = vmatpush1.bf16.msra.mxu0 %v487
        %513 = vmatprep.subr.bf16.mxu0 0
        %514 = vmatpush1.bf16.msra.mxu0 %v486
        %515 = vmatprep.subr.bf16.mxu0 0
        %516 = vmatpush1.bf16.msra.mxu0 %v485
        %517 = vmatprep.subr.bf16.mxu0 0
        %518 = vmatpush2.bf16.msra.mxu0 0
        %519 = vmatprep.subr.bf16.mxu0 0
        %520 = vmatpush2.bf16.msra.mxu0 0
        %521 = vmatprep.subr.bf16.mxu0 0
        %522 = vmatpush2.bf16.msra.mxu0 0
        %523 = vmatprep.subr.bf16.mxu0 0
        %524 = vmatpush2.bf16.msra.mxu0 0
        %525 = vmatprep.subr.bf16.mxu0 0
        %526 = vmatpush2.bf16.msra.mxu0 0
        %527 = vmatprep.subr.bf16.mxu0 0
        %528 = vmatpush2.bf16.msra.mxu0 0
        %529 = vmatprep.subr.bf16.mxu0 0
        %530 = vmatpush2.bf16.msra.mxu0 0
        %531 = vmatprep.subr.bf16.mxu0 0
        %532 = vmatpush2.bf16.msra.mxu0 0
        %533 = vmatprep.mubr.bf16.mxu0 0
        %534 = vmatmul.mubr.bf16.gmra.mxu0 %v439
        %v535 = vpop.f32.mrf.mxu0
        %v536 = vadd.f32 %v451, %v535
        %v537 = vpop.f32.mrf.mxu0
        %v538 = vpop.f32.mrf.mxu0
        %v539 = vadd.f32 %v451, %v538
        %v540 = vpop.f32.mrf.mxu0
        %541 = vmatprep.mubr.bf16.mxu0 0
        %542 = vmatmul.mubr.bf16.gmra.mxu0 %v440
        %v543 = vpop.f32.mrf.mxu0
        %v544 = vadd.f32 %v451, %v543
        %v545 = vpop.f32.mrf.mxu0
        %v546 = vpop.f32.mrf.mxu0
        %v547 = vadd.f32 %v451, %v546
        %v548 = vpop.f32.mrf.mxu0
        %549 = vmatprep.mubr.bf16.mxu0 0
        %550 = vmatmul.mubr.bf16.gmra.mxu0 %v441
        %v551 = vpop.f32.mrf.mxu0
        %v552 = vadd.f32 %v451, %v551
        %v553 = vpop.f32.mrf.mxu0
        %v554 = vpop.f32.mrf.mxu0
        %v555 = vadd.f32 %v451, %v554
        %v556 = vpop.f32.mrf.mxu0
        %557 = vmatprep.mubr.bf16.mxu0 0
        %558 = vmatmul.mubr.bf16.gmra.mxu0 %v442
        %v559 = vpop.f32.mrf.mxu0
        %v560 = vadd.f32 %v451, %v559
        %v561 = vpop.f32.mrf.mxu0
        %v562 = vpop.f32.mrf.mxu0
        %v563 = vadd.f32 %v451, %v562
        %v564 = vpop.f32.mrf.mxu0
        %565 = vmatprep.mubr.bf16.mxu0 0
        %566 = vmatmul.mubr.bf16.gmra.mxu0 %v443
        %v567 = vpop.f32.mrf.mxu0
        %v568 = vadd.f32 %v451, %v567
        %v569 = vpop.f32.mrf.mxu0
        %v570 = vpop.f32.mrf.mxu0
        %v571 = vadd.f32 %v451, %v570
        %v572 = vpop.f32.mrf.mxu0
        %573 = vmatprep.mubr.bf16.mxu0 0
        %574 = vmatmul.mubr.bf16.gmra.mxu0 %v444
        %v575 = vpop.f32.mrf.mxu0
        %v576 = vadd.f32 %v451, %v575
        %v577 = vpop.f32.mrf.mxu0
        %v578 = vpop.f32.mrf.mxu0
        %v579 = vadd.f32 %v451, %v578
        %v580 = vpop.f32.mrf.mxu0
        %581 = vmatprep.mubr.bf16.mxu0 0
        %582 = vmatmul.mubr.bf16.gmra.mxu0 %v445
        %v583 = vpop.f32.mrf.mxu0
        %v584 = vadd.f32 %v451, %v583
        %v585 = vpop.f32.mrf.mxu0
        %v586 = vpop.f32.mrf.mxu0
        %v587 = vadd.f32 %v451, %v586
        %v588 = vpop.f32.mrf.mxu0
        %589 = vmatprep.mubr.bf16.mxu0 0
        %590 = vmatmul.mubr.bf16.gmra.mxu0 %v446
        %v591 = vpop.f32.mrf.mxu0
        %v592 = vadd.f32 %v451, %v591
        %v593 = vpop.f32.mrf.mxu0
        %v594 = vpop.f32.mrf.mxu0
        %v595 = vadd.f32 %v451, %v594
        %v596 = vpop.f32.mrf.mxu0
        %597 = vdwg.mxu0
        %v598 = vxor.u32 %v536, 2147483648
        %v599 = vxor.u32 %v539, 2147483648
        %v600 = vxor.u32 %v544, 2147483648
        %v601 = vxor.u32 %v547, 2147483648
        %v602 = vxor.u32 %v552, 2147483648
        %v603 = vxor.u32 %v555, 2147483648
        %v604 = vxor.u32 %v560, 2147483648
        %v605 = vxor.u32 %v563, 2147483648
        %v606 = vxor.u32 %v568, 2147483648
        %v607 = vxor.u32 %v571, 2147483648
        %v608 = vxor.u32 %v576, 2147483648
        %v609 = vxor.u32 %v579, 2147483648
        %v610 = vxor.u32 %v584, 2147483648
        %v611 = vxor.u32 %v587, 2147483648
        %v612 = vxor.u32 %v592, 2147483648
        %v613 = vxor.u32 %v595, 2147483648
        %v614 = vmul.f32 %v598, 1.442695
        %v615 = vpow.pop %v614
        %v616 = vmul.f32 %v599, 1.442695
        %v617 = vpow.pop %v616
        %v618 = vmul.f32 %v600, 1.442695
        %v619 = vpow.pop %v618
        %v620 = vmul.f32 %v601, 1.442695
        %v621 = vpow.pop %v620
        %v622 = vmul.f32 %v602, 1.442695
        %v623 = vpow.pop %v622
        %v624 = vmul.f32 %v603, 1.442695
        %v625 = vpow.pop %v624
        %v626 = vmul.f32 %v604, 1.442695
        %v627 = vpow.pop %v626
        %v628 = vmul.f32 %v605, 1.442695
        %v629 = vpow.pop %v628
        %v630 = vmul.f32 %v606, 1.442695
        %v631 = vpow.pop %v630
        %v632 = vmul.f32 %v607, 1.442695
        %v633 = vpow.pop %v632
        %v634 = vmul.f32 %v608, 1.442695
        %v635 = vpow.pop %v634
        %v636 = vmul.f32 %v609, 1.442695
        %v637 = vpow.pop %v636
        %v638 = vmul.f32 %v610, 1.442695
        %v639 = vpow.pop %v638
        %v640 = vmul.f32 %v611, 1.442695
        %v641 = vpow.pop %v640
        %v642 = vmul.f32 %v612, 1.442695
        %v643 = vpow.pop %v642
        %v644 = vmul.f32 %v613, 1.442695
        %v645 = vpow.pop %v644
        %v646 = vadd.f32 %v615, 1.0
        %v647 = vadd.f32 %v617, 1.0
        %v648 = vadd.f32 %v619, 1.0
        %v649 = vadd.f32 %v621, 1.0
        %v650 = vadd.f32 %v623, 1.0
        %v651 = vadd.f32 %v625, 1.0
        %v652 = vadd.f32 %v627, 1.0
        %v653 = vadd.f32 %v629, 1.0
        %v654 = vadd.f32 %v631, 1.0
        %v655 = vadd.f32 %v633, 1.0
        %v656 = vadd.f32 %v635, 1.0
        %v657 = vadd.f32 %v637, 1.0
        %v658 = vadd.f32 %v639, 1.0
        %v659 = vadd.f32 %v641, 1.0
        %v660 = vadd.f32 %v643, 1.0
        %v661 = vadd.f32 %v645, 1.0
        %v662 = vrcp.pop %v646
        %v663 = vmul.f32 1.0, %v662
        %v664 = vrcp.pop %v647
        %v665 = vmul.f32 1.0, %v664
        %v666 = vrcp.pop %v648
        %v667 = vmul.f32 1.0, %v666
        %v668 = vrcp.pop %v649
        %v669 = vmul.f32 1.0, %v668
        %v670 = vrcp.pop %v650
        %v671 = vmul.f32 1.0, %v670
        %v672 = vrcp.pop %v651
        %v673 = vmul.f32 1.0, %v672
        %v674 = vrcp.pop %v652
        %v675 = vmul.f32 1.0, %v674
        %v676 = vrcp.pop %v653
        %v677 = vmul.f32 1.0, %v676
        %v678 = vrcp.pop %v654
        %v679 = vmul.f32 1.0, %v678
        %v680 = vrcp.pop %v655
        %v681 = vmul.f32 1.0, %v680
        %v682 = vrcp.pop %v656
        %v683 = vmul.f32 1.0, %v682
        %v684 = vrcp.pop %v657
        %v685 = vmul.f32 1.0, %v684
        %v686 = vrcp.pop %v658
        %v687 = vmul.f32 1.0, %v686
        %v688 = vrcp.pop %v659
        %v689 = vmul.f32 1.0, %v688
        %v690 = vrcp.pop %v660
        %v691 = vmul.f32 1.0, %v690
        %v692 = vrcp.pop %v661
        %v693 = vmul.f32 1.0, %v692
        %v694 = vmul.f32 %v536, %v663
        %v695 = vmul.f32 %v539, %v665
        %v696 = vmul.f32 %v544, %v667
        %v697 = vmul.f32 %v547, %v669
        %v698 = vmul.f32 %v552, %v671
        %v699 = vmul.f32 %v555, %v673
        %v700 = vmul.f32 %v560, %v675
        %v701 = vmul.f32 %v563, %v677
        %v702 = vmul.f32 %v568, %v679
        %v703 = vmul.f32 %v571, %v681
        %v704 = vmul.f32 %v576, %v683
        %v705 = vmul.f32 %v579, %v685
        %v706 = vmul.f32 %v584, %v687
        %v707 = vmul.f32 %v587, %v689
        %v708 = vmul.f32 %v592, %v691
        %v709 = vmul.f32 %v595, %v693
        %v710 = vpack.c.bf16 %v695, %v694
        %v711 = vpack.c.bf16 %v697, %v696
        %v712 = vpack.c.bf16 %v699, %v698
        %v713 = vpack.c.bf16 %v701, %v700
        %v714 = vpack.c.bf16 %v703, %v702
        %v715 = vpack.c.bf16 %v705, %v704
        %v716 = vpack.c.bf16 %v707, %v706
        %v717 = vpack.c.bf16 %v709, %v708
        %v726 = vunpack.c.l.b16 %v710
        %v727 = vunpack.c.h.b16 %v710
        %v728 = vunpack.c.l.b16 %v711
        %v729 = vunpack.c.h.b16 %v711
        %v730 = vunpack.c.l.b16 %v712
        %v731 = vunpack.c.h.b16 %v712
        %v732 = vunpack.c.l.b16 %v713
        %v733 = vunpack.c.h.b16 %v713
        %v734 = vunpack.c.l.b16 %v714
        %v735 = vunpack.c.h.b16 %v714
        %v736 = vunpack.c.l.b16 %v715
        %v737 = vunpack.c.h.b16 %v715
        %v738 = vunpack.c.l.b16 %v716
        %v739 = vunpack.c.h.b16 %v716
        %v740 = vunpack.c.l.b16 %v717
        %v741 = vunpack.c.h.b16 %v717
        %v742 = vpack.c.b16 %v726, %v726
        %v743 = vpack.c.b16 %v727, %v727
        %v744 = vpack.c.b16 %v728, %v728
        %v745 = vpack.c.b16 %v729, %v729
        %v746 = vpack.c.b16 %v730, %v730
        %v747 = vpack.c.b16 %v731, %v731
        %v748 = vpack.c.b16 %v732, %v732
        %v749 = vpack.c.b16 %v733, %v733
        %v750 = vpack.c.b16 %v734, %v734
        %v751 = vpack.c.b16 %v735, %v735
        %v752 = vpack.c.b16 %v736, %v736
        %v753 = vpack.c.b16 %v737, %v737
        %v754 = vpack.c.b16 %v738, %v738
        %v755 = vpack.c.b16 %v739, %v739
        %v756 = vpack.c.b16 %v740, %v740
        %v757 = vpack.c.b16 %v741, %v741
        %s774 = scalar_lea.vmem [#allocation2], 24
        %775 = vst [vmem:[%s774 + $0x4] sm:$0xf] %v742
        %776 = vst [vmem:[%s774 + $0x10] sm:$0xf] %v743
        %777 = vst [vmem:[%s774 + $0x1c] sm:$0xf] %v744
        %778 = vst [vmem:[%s774 + $0x28] sm:$0xf] %v745
        %779 = vst [vmem:[%s774 + $0x34] sm:$0xf] %v746
        %780 = vst [vmem:[%s774 + $0x40] sm:$0xf] %v747
        %781 = vst [vmem:[%s774 + $0x4c] sm:$0xf] %v748
        %782 = vst [vmem:[%s774 + $0x58] sm:$0xf] %v749
        %783 = vst [vmem:[%s774 + $0x64] sm:$0xf] %v750
        %784 = vst [vmem:[%s774 + $0x70] sm:$0xf] %v751
        %785 = vst [vmem:[%s774 + $0x7c] sm:$0xf] %v752
        %786 = vst [vmem:[%s774 + $0x88] sm:$0xf] %v753
        %787 = vst [vmem:[%s774 + $0x94] sm:$0xf] %v754
        %788 = vst [vmem:[%s774 + $0xa0] sm:$0xf] %v755
        %789 = vst [vmem:[%s774 + $0xac] sm:$0xf] %v756
        %790 = vst [vmem:[%s774 + $0xb8] sm:$0xf] %v757
        %vm791 = vsmask.f32 4368
        %vm792 = vmor %vm358, %vm791
        %v794 = vshrl.u32 %v742, 16
        %v796 = vrot.slane %v794, 7
        %v797 = vshll.u32 %v742, 16
        %v799 = vor.u32 %v796, %v797
        %v800 = vrot.slane %v796, 4
        %v802 = vshrl.u32 %v743, 16
        %v804 = vrot.slane %v802, 7
        %v805 = vshll.u32 %v743, 16
        %v807 = vor.u32 %v804, %v805
        %v808 = vsel %vm792, %v800, %v807
        %v810 = vshrl.u32 %v744, 16
        %v812 = vrot.slane %v810, 7
        %v813 = vshll.u32 %v744, 16
        %v815 = vor.u32 %v812, %v813
        %v816 = vrot.slane %v812, 4
        %v818 = vshrl.u32 %v745, 16
        %v820 = vrot.slane %v818, 7
        %v821 = vshll.u32 %v745, 16
        %v823 = vor.u32 %v820, %v821
        %v824 = vsel %vm792, %v816, %v823
        %v826 = vshrl.u32 %v746, 16
        %v828 = vrot.slane %v826, 7
        %v829 = vshll.u32 %v746, 16
        %v831 = vor.u32 %v828, %v829
        %v832 = vrot.slane %v828, 4
        %v834 = vshrl.u32 %v747, 16
        %v836 = vrot.slane %v834, 7
        %v837 = vshll.u32 %v747, 16
        %v839 = vor.u32 %v836, %v837
        %v840 = vsel %vm792, %v832, %v839
        %v842 = vshrl.u32 %v748, 16
        %v844 = vrot.slane %v842, 7
        %v845 = vshll.u32 %v748, 16
        %v847 = vor.u32 %v844, %v845
        %v848 = vrot.slane %v844, 4
        %v850 = vshrl.u32 %v749, 16
        %v852 = vrot.slane %v850, 7
        %v853 = vshll.u32 %v749, 16
        %v855 = vor.u32 %v852, %v853
        %v856 = vsel %vm792, %v848, %v855
        %v858 = vshrl.u32 %v750, 16
        %v860 = vrot.slane %v858, 7
        %v861 = vshll.u32 %v750, 16
        %v863 = vor.u32 %v860, %v861
        %v864 = vrot.slane %v860, 4
        %v866 = vshrl.u32 %v751, 16
        %v868 = vrot.slane %v866, 7
        %v869 = vshll.u32 %v751, 16
        %v871 = vor.u32 %v868, %v869
        %v872 = vsel %vm792, %v864, %v871
        %v874 = vshrl.u32 %v752, 16
        %v876 = vrot.slane %v874, 7
        %v877 = vshll.u32 %v752, 16
        %v879 = vor.u32 %v876, %v877
        %v880 = vrot.slane %v876, 4
        %v882 = vshrl.u32 %v753, 16
        %v884 = vrot.slane %v882, 7
        %v885 = vshll.u32 %v753, 16
        %v887 = vor.u32 %v884, %v885
        %v888 = vsel %vm792, %v880, %v887
        %v890 = vshrl.u32 %v754, 16
        %v892 = vrot.slane %v890, 7
        %v893 = vshll.u32 %v754, 16
        %v895 = vor.u32 %v892, %v893
        %v896 = vrot.slane %v892, 4
        %v898 = vshrl.u32 %v755, 16
        %v900 = vrot.slane %v898, 7
        %v901 = vshll.u32 %v755, 16
        %v903 = vor.u32 %v900, %v901
        %v904 = vsel %vm792, %v896, %v903
        %v906 = vshrl.u32 %v756, 16
        %v908 = vrot.slane %v906, 7
        %v909 = vshll.u32 %v756, 16
        %v911 = vor.u32 %v908, %v909
        %v912 = vrot.slane %v908, 4
        %v914 = vshrl.u32 %v757, 16
        %v916 = vrot.slane %v914, 7
        %v917 = vshll.u32 %v757, 16
        %v919 = vor.u32 %v916, %v917
        %v920 = vsel %vm792, %v912, %v919
        %vm937 = vcmask 1043456
        %vm938 = vsmask.f32 7938
        %vm939 = vmand %vm937, %vm938
        %v940 = vld [vmem:[%s774] sm:$0xf]
        %v941 = vsel %vm939, %v799, %v940
        %942 = vst [vmem:[%s774] sm:$0xf] %v941
        %943 = vst [vmem:[%s774 + $0xc] sm:$0xf] %v808
        %v944 = vld [vmem:[%s774 + $0x18] sm:$0xf]
        %v945 = vsel %vm939, %v815, %v944
        %946 = vst [vmem:[%s774 + $0x18] sm:$0xf] %v945
        %947 = vst [vmem:[%s774 + $0x24] sm:$0xf] %v824
        %v948 = vld [vmem:[%s774 + $0x30] sm:$0xf]
        %v949 = vsel %vm939, %v831, %v948
        %950 = vst [vmem:[%s774 + $0x30] sm:$0xf] %v949
        %951 = vst [vmem:[%s774 + $0x3c] sm:$0xf] %v840
        %v952 = vld [vmem:[%s774 + $0x48] sm:$0xf]
        %v953 = vsel %vm939, %v847, %v952
        %954 = vst [vmem:[%s774 + $0x48] sm:$0xf] %v953
        %955 = vst [vmem:[%s774 + $0x54] sm:$0xf] %v856
        %v956 = vld [vmem:[%s774 + $0x60] sm:$0xf]
        %v957 = vsel %vm939, %v863, %v956
        %958 = vst [vmem:[%s774 + $0x60] sm:$0xf] %v957
        %959 = vst [vmem:[%s774 + $0x6c] sm:$0xf] %v872
        %v960 = vld [vmem:[%s774 + $0x78] sm:$0xf]
        %v961 = vsel %vm939, %v879, %v960
        %962 = vst [vmem:[%s774 + $0x78] sm:$0xf] %v961
        %963 = vst [vmem:[%s774 + $0x84] sm:$0xf] %v888
        %v964 = vld [vmem:[%s774 + $0x90] sm:$0xf]
        %v965 = vsel %vm939, %v895, %v964
        %966 = vst [vmem:[%s774 + $0x90] sm:$0xf] %v965
        %967 = vst [vmem:[%s774 + $0x9c] sm:$0xf] %v904
        %v968 = vld [vmem:[%s774 + $0xa8] sm:$0xf]
        %v969 = vsel %vm939, %v911, %v968
        %970 = vst [vmem:[%s774 + $0xa8] sm:$0xf] %v969
        %971 = vst [vmem:[%s774 + $0xb4] sm:$0xf] %v920
        %vm972 = vsmask.f32 3328
        %vm973 = vsmask.f32 7440
        %vm974 = vmor %vm972, %vm973
        %v975 = vrot.slane %v794, 4
        %v976 = vrot.slane %v797, 5
        %v977 = vor.u32 %v975, %v976
        %v978 = vrot.slane %v977, 4
        %v979 = vrot.slane %v805, 5
        %v980 = vsel %vm974, %v978, %v979
        %v981 = vrot.slane %v802, 4
        %v982 = vor.u32 %v981, %v979
        %v983 = vrot.slane %v982, 4
        %v984 = vrot.slane %v810, 4
        %v985 = vrot.slane %v813, 5
        %v986 = vor.u32 %v984, %v985
        %v987 = vrot.slane %v986, 4
        %v988 = vrot.slane %v821, 5
        %v989 = vsel %vm974, %v987, %v988
        %v990 = vrot.slane %v818, 4
        %v991 = vor.u32 %v990, %v988
        %v992 = vrot.slane %v991, 4
        %v993 = vrot.slane %v826, 4
        %v994 = vrot.slane %v829, 5
        %v995 = vor.u32 %v993, %v994
        %v996 = vrot.slane %v995, 4
        %v997 = vrot.slane %v837, 5
        %v998 = vsel %vm974, %v996, %v997
        %v999 = vrot.slane %v834, 4
        %v1000 = vor.u32 %v999, %v997
        %v1001 = vrot.slane %v1000, 4
        %v1002 = vrot.slane %v842, 4
        %v1003 = vrot.slane %v845, 5
        %v1004 = vor.u32 %v1002, %v1003
        %v1005 = vrot.slane %v1004, 4
        %v1006 = vrot.slane %v853, 5
        %v1007 = vsel %vm974, %v1005, %v1006
        %v1008 = vrot.slane %v850, 4
        %v1009 = vor.u32 %v1008, %v1006
        %v1010 = vrot.slane %v1009, 4
        %v1011 = vrot.slane %v858, 4
        %v1012 = vrot.slane %v861, 5
        %v1013 = vor.u32 %v1011, %v1012
        %v1014 = vrot.slane %v1013, 4
        %v1015 = vrot.slane %v869, 5
        %v1016 = vsel %vm974, %v1014, %v1015
        %v1017 = vrot.slane %v866, 4
        %v1018 = vor.u32 %v1017, %v1015
        %v1019 = vrot.slane %v1018, 4
        %v1020 = vrot.slane %v874, 4
        %v1021 = vrot.slane %v877, 5
        %v1022 = vor.u32 %v1020, %v1021
        %v1023 = vrot.slane %v1022, 4
        %v1024 = vrot.slane %v885, 5
        %v1025 = vsel %vm974, %v1023, %v1024
        %v1026 = vrot.slane %v882, 4
        %v1027 = vor.u32 %v1026, %v1024
        %v1028 = vrot.slane %v1027, 4
        %v1029 = vrot.slane %v890, 4
        %v1030 = vrot.slane %v893, 5
        %v1031 = vor.u32 %v1029, %v1030
        %v1032 = vrot.slane %v1031, 4
        %v1033 = vrot.slane %v901, 5
        %v1034 = vsel %vm974, %v1032, %v1033
        %v1035 = vrot.slane %v898, 4
        %v1036 = vor.u32 %v1035, %v1033
        %v1037 = vrot.slane %v1036, 4
        %v1038 = vrot.slane %v906, 4
        %v1039 = vrot.slane %v909, 5
        %v1040 = vor.u32 %v1038, %v1039
        %v1041 = vrot.slane %v1040, 4
        %v1042 = vrot.slane %v917, 5
        %v1043 = vsel %vm974, %v1041, %v1042
        %v1044 = vrot.slane %v914, 4
        %v1045 = vor.u32 %v1044, %v1042
        %v1046 = vrot.slane %v1045, 4
        %1063 = vst [vmem:[%s774 + $0x8] sm:$0xf] %v980
        %vm1064 = vmand %vm937, %vm972
        %v1065 = vld [vmem:[%s774 + $0x14] sm:$0xf]
        %v1066 = vsel %vm1064, %v983, %v1065
        %1067 = vst [vmem:[%s774 + $0x14] sm:$0xf] %v1066
        %1068 = vst [vmem:[%s774 + $0x20] sm:$0xf] %v989
        %v1069 = vld [vmem:[%s774 + $0x2c] sm:$0xf]
        %v1070 = vsel %vm1064, %v992, %v1069
        %1071 = vst [vmem:[%s774 + $0x2c] sm:$0xf] %v1070
        %1072 = vst [vmem:[%s774 + $0x38] sm:$0xf] %v998
        %v1073 = vld [vmem:[%s774 + $0x44] sm:$0xf]
        %v1074 = vsel %vm1064, %v1001, %v1073
        %1075 = vst [vmem:[%s774 + $0x44] sm:$0xf] %v1074
        %1076 = vst [vmem:[%s774 + $0x50] sm:$0xf] %v1007
        %v1077 = vld [vmem:[%s774 + $0x5c] sm:$0xf]
        %v1078 = vsel %vm1064, %v1010, %v1077
        %1079 = vst [vmem:[%s774 + $0x5c] sm:$0xf] %v1078
        %1080 = vst [vmem:[%s774 + $0x68] sm:$0xf] %v1016
        %v1081 = vld [vmem:[%s774 + $0x74] sm:$0xf]
        %v1082 = vsel %vm1064, %v1019, %v1081
        %1083 = vst [vmem:[%s774 + $0x74] sm:$0xf] %v1082
        %1084 = vst [vmem:[%s774 + $0x80] sm:$0xf] %v1025
        %v1085 = vld [vmem:[%s774 + $0x8c] sm:$0xf]
        %v1086 = vsel %vm1064, %v1028, %v1085
        %1087 = vst [vmem:[%s774 + $0x8c] sm:$0xf] %v1086
        %1088 = vst [vmem:[%s774 + $0x98] sm:$0xf] %v1034
        %v1089 = vld [vmem:[%s774 + $0xa4] sm:$0xf]
        %v1090 = vsel %vm1064, %v1037, %v1089
        %1091 = vst [vmem:[%s774 + $0xa4] sm:$0xf] %v1090
        %1092 = vst [vmem:[%s774 + $0xb0] sm:$0xf] %v1043
        %v1093 = vld [vmem:[%s774 + $0xbc] sm:$0xf]
        %v1094 = vsel %vm1064, %v1046, %v1093
        %1095 = vst [vmem:[%s774 + $0xbc] sm:$0xf] %v1094
        // Predicated region
        $region69: #{tpu_custom_call.1} parent=39 // pred_check
          %p1096 = pneg %p296
        $region70: #{tpu_custom_call.1} parent=39 // pred_check_branch
          %1098 = sbr.rel (%p1096) target = $region72
        $region71: #{tpu_custom_call.1} parent=39 // pred_region
          %s1099 = smul.u32 16, 1
          %s1100 = sshll.u32 %s1099, 4
          %1101 = dma.done [#allocation4], %s1100
          %v1102 = vld [vmem:[#allocation3] sm:$0xff]
          %v1103 = vld [vmem:[#allocation3 + $0x8] sm:$0xff]
          %v1104 = vpack.c.bf16 %v1103, %v1102
          %1105 = vmatprep.subr.bf16.mxu0 0
          %1106 = vmatpush1.bf16.msra.mxu0 %v492
          %1107 = vmatprep.subr.bf16.mxu0 0
          %1108 = vmatpush1.bf16.msra.mxu0 %v491
          %1109 = vmatprep.subr.bf16.mxu0 0
          %1110 = vmatpush1.bf16.msra.mxu0 %v490
          %1111 = vmatprep.subr.bf16.mxu0 0
          %1112 = vmatpush1.bf16.msra.mxu0 %v489
          %1113 = vmatprep.subr.bf16.mxu0 0
          %1114 = vmatpush1.bf16.msra.mxu0 %v488
          %1115 = vmatprep.subr.bf16.mxu0 0
          %1116 = vmatpush1.bf16.msra.mxu0 %v487
          %1117 = vmatprep.subr.bf16.mxu0 0
          %1118 = vmatpush1.bf16.msra.mxu0 %v486
          %1119 = vmatprep.subr.bf16.mxu0 0
          %1120 = vmatpush1.bf16.msra.mxu0 %v485
          %1121 = vmatprep.subr.bf16.mxu0 0
          %1122 = vmatpush2.bf16.msra.mxu0 0
          %1123 = vmatprep.subr.bf16.mxu0 0
          %1124 = vmatpush2.bf16.msra.mxu0 0
          %1125 = vmatprep.subr.bf16.mxu0 0
          %1126 = vmatpush2.bf16.msra.mxu0 0
          %1127 = vmatprep.subr.bf16.mxu0 0
          %1128 = vmatpush2.bf16.msra.mxu0 0
          %1129 = vmatprep.subr.bf16.mxu0 0
          %1130 = vmatpush2.bf16.msra.mxu0 0
          %1131 = vmatprep.subr.bf16.mxu0 0
          %1132 = vmatpush2.bf16.msra.mxu0 0
          %1133 = vmatprep.subr.bf16.mxu0 0
          %1134 = vmatpush2.bf16.msra.mxu0 0
          %1135 = vmatprep.subr.bf16.mxu0 0
          %1136 = vmatpush2.bf16.msra.mxu0 0
          %1137 = vmatprep.mubr.bf16.mxu0 0
          %1138 = vmatmul.mubr.bf16.gmra.mxu0 %v1104
          %v1139 = vpop.f32.mrf.mxu0
          %v1140 = vadd.f32 %v451, %v1139
          %v1141 = vpop.f32.mrf.mxu0
          %v1142 = vpop.f32.mrf.mxu0
          %v1143 = vadd.f32 %v451, %v1142
          %v1144 = vpop.f32.mrf.mxu0
          %1145 = vdwg.mxu0
          %v1146 = vxor.u32 %v1140, 2147483648
          %v1147 = vxor.u32 %v1143, 2147483648
          %v1148 = vmul.f32 %v1146, 1.442695
          %v1149 = vpow.pop %v1148
          %v1150 = vmul.f32 %v1147, 1.442695
          %v1151 = vpow.pop %v1150
          %v1152 = vadd.f32 %v1149, 1.0
          %v1153 = vadd.f32 %v1151, 1.0
          %v1154 = vrcp.pop %v1152
          %v1155 = vmul.f32 1.0, %v1154
          %v1156 = vrcp.pop %v1153
          %v1157 = vmul.f32 1.0, %v1156
          %v1158 = vmul.f32 %v1140, %v1155
          %v1159 = vmul.f32 %v1143, %v1157
          %v1160 = vpack.c.bf16 %v1159, %v1158
          %v1162 = vunpack.c.l.b16 %v1160
          %v1163 = vunpack.c.h.b16 %v1160
          %v1164 = vpack.c.b16 %v1162, %v1162
          %v1165 = vpack.c.b16 %v1163, %v1163
          %1168 = vst [vmem:[#allocation2 + $0x4] sm:$0xf] %v1164
          %1169 = vst [vmem:[#allocation2 + $0x10] sm:$0xf] %v1165
          %v1171 = vshrl.u32 %v1164, 16
          %v1173 = vrot.slane %v1171, 7
          %v1174 = vshll.u32 %v1164, 16
          %v1176 = vor.u32 %v1173, %v1174
          %v1177 = vrot.slane %v1173, 4
          %v1179 = vshrl.u32 %v1165, 16
          %v1181 = vrot.slane %v1179, 7
          %v1182 = vshll.u32 %v1165, 16
          %v1184 = vor.u32 %v1181, %v1182
          %v1185 = vsel %vm792, %v1177, %v1184
          %v1188 = vld [vmem:[#allocation2] sm:$0xf]
          %v1189 = vsel %vm939, %v1176, %v1188
          %1190 = vst [vmem:[#allocation2] sm:$0xf] %v1189
          %1191 = vst [vmem:[#allocation2 + $0xc] sm:$0xf] %v1185
          %v1192 = vrot.slane %v1171, 4
          %v1193 = vrot.slane %v1174, 5
          %v1194 = vor.u32 %v1192, %v1193
          %v1195 = vrot.slane %v1194, 4
          %v1196 = vrot.slane %v1182, 5
          %v1197 = vsel %vm974, %v1195, %v1196
          %v1198 = vrot.slane %v1179, 4
          %v1199 = vor.u32 %v1198, %v1196
          %v1200 = vrot.slane %v1199, 4
          %1203 = vst [vmem:[#allocation2 + $0x8] sm:$0xf] %v1197
          %v1204 = vld [vmem:[#allocation2 + $0x14] sm:$0xf]
          %v1205 = vsel %vm1064, %v1200, %v1204
          %1206 = vst [vmem:[#allocation2 + $0x14] sm:$0xf] %v1205
        $region72: #{tpu_custom_call.1} parent=39 // pred_fallthru
          _
        %p1207 = scmp.eq.s32.totalorder %s29, 0
        // Predicated region
        $region73: #{tpu_custom_call.1} parent=39 // pred_check
          %p1208 = pneg %p1207
        $region74: #{tpu_custom_call.1} parent=39 // pred_check_branch
          %1210 = sbr.rel (%p1208) target = $region76
        $region75: #{tpu_custom_call.1} parent=39 // pred_region
          %1211 = vst [vmem:[#allocation2] sm:$0xff] 0
          %1212 = vst [vmem:[#allocation2 + $0x8] sm:$0xf] 0
          %1213 = vst [vmem:[#allocation2 + $0xc] sm:$0xff] 0
          %1214 = vst [vmem:[#allocation2 + $0x14] sm:$0xf] 0
        $region76: #{tpu_custom_call.1} parent=39 // pred_fallthru
          _
        // Predicated region
        $region77: #{tpu_custom_call.1} parent=39 // pred_check
          %p1215 = pneg %p317
        $region78: #{tpu_custom_call.1} parent=39 // pred_check_branch
          %1217 = sbr.rel (%p1215) target = $region80
        $region79: #{tpu_custom_call.1} parent=39 // pred_region
          %s1218 = scalar_lea.vmem [#allocation3], 16
          %s1219 = scalar_lea.sflag [#allocation4], 1
          %s1220 = smul.u32 16, 1
          %s1221 = sshll.u32 %s1220, 4
          %1222 = dma.done %s1219, %s1221
          %v1223 = vld [vmem:[%s1218] sm:$0xff]
          %v1224 = vld [vmem:[%s1218 + $0x8] sm:$0xff]
          %v1225 = vpack.c.bf16 %v1224, %v1223
          %1226 = vmatprep.subr.bf16.mxu0 0
          %1227 = vmatpush1.bf16.msra.mxu0 %v492
          %1228 = vmatprep.subr.bf16.mxu0 0
          %1229 = vmatpush1.bf16.msra.mxu0 %v491
          %1230 = vmatprep.subr.bf16.mxu0 0
          %1231 = vmatpush1.bf16.msra.mxu0 %v490
          %1232 = vmatprep.subr.bf16.mxu0 0
          %1233 = vmatpush1.bf16.msra.mxu0 %v489
          %1234 = vmatprep.subr.bf16.mxu0 0
          %1235 = vmatpush1.bf16.msra.mxu0 %v488
          %1236 = vmatprep.subr.bf16.mxu0 0
          %1237 = vmatpush1.bf16.msra.mxu0 %v487
          %1238 = vmatprep.subr.bf16.mxu0 0
          %1239 = vmatpush1.bf16.msra.mxu0 %v486
          %1240 = vmatprep.subr.bf16.mxu0 0
          %1241 = vmatpush1.bf16.msra.mxu0 %v485
          %1242 = vmatprep.subr.bf16.mxu0 0
          %1243 = vmatpush2.bf16.msra.mxu0 0
          %1244 = vmatprep.subr.bf16.mxu0 0
          %1245 = vmatpush2.bf16.msra.mxu0 0
          %1246 = vmatprep.subr.bf16.mxu0 0
          %1247 = vmatpush2.bf16.msra.mxu0 0
          %1248 = vmatprep.subr.bf16.mxu0 0
          %1249 = vmatpush2.bf16.msra.mxu0 0
          %1250 = vmatprep.subr.bf16.mxu0 0
          %1251 = vmatpush2.bf16.msra.mxu0 0
          %1252 = vmatprep.subr.bf16.mxu0 0
          %1253 = vmatpush2.bf16.msra.mxu0 0
          %1254 = vmatprep.subr.bf16.mxu0 0
          %1255 = vmatpush2.bf16.msra.mxu0 0
          %1256 = vmatprep.subr.bf16.mxu0 0
          %1257 = vmatpush2.bf16.msra.mxu0 0
          %1258 = vmatprep.mubr.bf16.mxu0 0
          %1259 = vmatmul.mubr.bf16.gmra.mxu0 %v1225
          %v1260 = vpop.f32.mrf.mxu0
          %v1261 = vadd.f32 %v451, %v1260
          %v1262 = vpop.f32.mrf.mxu0
          %v1263 = vpop.f32.mrf.mxu0
          %v1264 = vadd.f32 %v451, %v1263
          %v1265 = vpop.f32.mrf.mxu0
          %1266 = vdwg.mxu0
          %v1267 = vxor.u32 %v1261, 2147483648
          %v1268 = vxor.u32 %v1264, 2147483648
          %v1269 = vmul.f32 %v1267, 1.442695
          %v1270 = vpow.pop %v1269
          %v1271 = vmul.f32 %v1268, 1.442695
          %v1272 = vpow.pop %v1271
          %v1273 = vadd.f32 %v1270, 1.0
          %v1274 = vadd.f32 %v1272, 1.0
          %v1275 = vrcp.pop %v1273
          %v1276 = vmul.f32 1.0, %v1275
          %v1277 = vrcp.pop %v1274
          %v1278 = vmul.f32 1.0, %v1277
          %v1279 = vmul.f32 %v1261, %v1276
          %v1280 = vmul.f32 %v1264, %v1278
          %v1281 = vpack.c.bf16 %v1280, %v1279
          %v1283 = vunpack.c.l.b16 %v1281
          %v1284 = vunpack.c.h.b16 %v1281
          %v1285 = vpack.c.b16 %v1283, %v1283
          %v1286 = vpack.c.b16 %v1284, %v1284
          %s1289 = scalar_lea.vmem [#allocation2], 216
          %1290 = vst [vmem:[%s1289 + $0x4] sm:$0xf] %v1285
          %1291 = vst [vmem:[%s1289 + $0x10] sm:$0xf] %v1286
          %v1293 = vshrl.u32 %v1285, 16
          %v1295 = vrot.slane %v1293, 7
          %v1296 = vshll.u32 %v1285, 16
          %v1298 = vor.u32 %v1295, %v1296
          %v1299 = vrot.slane %v1295, 4
          %v1301 = vshrl.u32 %v1286, 16
          %v1303 = vrot.slane %v1301, 7
          %v1304 = vshll.u32 %v1286, 16
          %v1306 = vor.u32 %v1303, %v1304
          %v1307 = vsel %vm792, %v1299, %v1306
          %v1310 = vld [vmem:[%s1289] sm:$0xf]
          %v1311 = vsel %vm939, %v1298, %v1310
          %1312 = vst [vmem:[%s1289] sm:$0xf] %v1311
          %1313 = vst [vmem:[%s1289 + $0xc] sm:$0xf] %v1307
          %v1314 = vrot.slane %v1293, 4
          %v1315 = vrot.slane %v1296, 5
          %v1316 = vor.u32 %v1314, %v1315
          %v1317 = vrot.slane %v1316, 4
          %v1318 = vrot.slane %v1304, 5
          %v1319 = vsel %vm974, %v1317, %v1318
          %v1320 = vrot.slane %v1301, 4
          %v1321 = vor.u32 %v1320, %v1318
          %v1322 = vrot.slane %v1321, 4
          %1325 = vst [vmem:[%s1289 + $0x8] sm:$0xf] %v1319
          %v1326 = vld [vmem:[%s1289 + $0x14] sm:$0xf]
          %v1327 = vsel %vm1064, %v1322, %v1326
          %1328 = vst [vmem:[%s1289 + $0x14] sm:$0xf] %v1327
        $region80: #{tpu_custom_call.1} parent=39 // pred_fallthru
          _
        %p1329 = scmp.eq.s32.totalorder %s29, 1
        // Predicated region
        $region81: #{tpu_custom_call.1} parent=39 // pred_check
          %p1330 = pneg %p1329
        $region82: #{tpu_custom_call.1} parent=39 // pred_check_branch
          %1332 = sbr.rel (%p1330) target = $region84
        $region83: #{tpu_custom_call.1} parent=39 // pred_region
          %s1333 = scalar_lea.vmem [#allocation2], 216
          %1334 = vst [vmem:[%s1333] sm:$0xff] 0
          %1335 = vst [vmem:[%s1333 + $0x8] sm:$0xf] 0
          %1336 = vst [vmem:[%s1333 + $0xc] sm:$0xff] 0
          %1337 = vst [vmem:[%s1333 + $0x14] sm:$0xf] 0
        $region84: #{tpu_custom_call.1} parent=39 // pred_fallthru
          _
        %v1338 = vld [vmem:[%s5] sm:$0x1]
        %v1339 = vld [vmem:[#allocation2] sm:$0xff]
        %v1340 = vld [vmem:[#allocation2 + $0x8] sm:$0xf]
        %v1341 = vld [vmem:[#allocation2 + $0xc] sm:$0xff]
        %v1342 = vld [vmem:[#allocation2 + $0x14] sm:$0xf]
        %v1343 = vld [vmem:[#allocation2 + $0x18] sm:$0xff]
        %v1344 = vld [vmem:[#allocation2 + $0x20] sm:$0xf]
        %v1345 = vld [vmem:[#allocation2 + $0x24] sm:$0xff]
        %v1346 = vld [vmem:[#allocation2 + $0x2c] sm:$0xf]
        %v1347 = vld [vmem:[#allocation2 + $0x30] sm:$0xff]
        %v1348 = vld [vmem:[#allocation2 + $0x38] sm:$0xf]
        %v1349 = vld [vmem:[#allocation2 + $0x3c] sm:$0xff]
        %v1350 = vld [vmem:[#allocation2 + $0x44] sm:$0xf]
        %v1351 = vld [vmem:[#allocation2 + $0x48] sm:$0xff]
        %v1352 = vld [vmem:[#allocation2 + $0x50] sm:$0xf]
        %v1353 = vld [vmem:[#allocation2 + $0x54] sm:$0xff]
        %v1354 = vld [vmem:[#allocation2 + $0x5c] sm:$0xf]
        %v1355 = vld [vmem:[#allocation2 + $0x60] sm:$0xff]
        %v1356 = vld [vmem:[#allocation2 + $0x68] sm:$0xf]
        %v1357 = vld [vmem:[#allocation2 + $0x6c] sm:$0xff]
        %v1358 = vld [vmem:[#allocation2 + $0x74] sm:$0xf]
        %v1359 = vld [vmem:[#allocation2 + $0x78] sm:$0xff]
        %v1360 = vld [vmem:[#allocation2 + $0x80] sm:$0xf]
        %v1361 = vld [vmem:[#allocation2 + $0x84] sm:$0xff]
        %v1362 = vld [vmem:[#allocation2 + $0x8c] sm:$0xf]
        %v1363 = vld [vmem:[#allocation2 + $0x90] sm:$0xff]
        %v1364 = vld [vmem:[#allocation2 + $0x98] sm:$0xf]
        %v1365 = vld [vmem:[#allocation2 + $0x9c] sm:$0xff]
        %v1366 = vld [vmem:[#allocation2 + $0xa4] sm:$0xf]
        %v1367 = vld [vmem:[#allocation2 + $0xa8] sm:$0xff]
        %v1368 = vld [vmem:[#allocation2 + $0xb0] sm:$0xf]
        %v1369 = vld [vmem:[#allocation2 + $0xb4] sm:$0xff]
        %v1370 = vld [vmem:[#allocation2 + $0xbc] sm:$0xf]
        %v1371 = vld [vmem:[#allocation10] sm:$0xf]
        %v1372 = vld [vmem:[#allocation10 + $0x4] sm:$0xf]
        %v1373 = vld [vmem:[#allocation10 + $0x8] sm:$0xf]
        %v1374 = vld [vmem:[#allocation10 + $0xc] sm:$0xf]
        %v1375 = vld [vmem:[#allocation10 + $0x10] sm:$0xf]
        %v1376 = vld [vmem:[#allocation10 + $0x14] sm:$0xf]
        %v1377 = vld [vmem:[#allocation10 + $0x18] sm:$0xf]
        %v1378 = vld [vmem:[#allocation10 + $0x1c] sm:$0xf]
        %v1379 = vld [vmem:[#allocation10 + $0x20] sm:$0xf]
        %v1380 = vld [vmem:[#allocation10 + $0x24] sm:$0xf]
        %v1381 = vld [vmem:[#allocation10 + $0x28] sm:$0xf]
        %v1382 = vld [vmem:[#allocation10 + $0x2c] sm:$0xf]
        %v1383 = vld [vmem:[#allocation10 + $0x30] sm:$0xf]
        %v1384 = vld [vmem:[#allocation10 + $0x34] sm:$0xf]
        %v1385 = vld [vmem:[#allocation10 + $0x38] sm:$0xf]
        %v1386 = vld [vmem:[#allocation10 + $0x3c] sm:$0xf]
        %v1387 = vld [vmem:[#allocation10 + $0x40] sm:$0xf]
        %v1388 = vld [vmem:[#allocation10 + $0x44] sm:$0xf]
        %v1389 = vld [vmem:[#allocation10 + $0x48] sm:$0xf]
        %v1390 = vld [vmem:[#allocation10 + $0x4c] sm:$0xf]
        %v1391 = vld [vmem:[#allocation10 + $0x50] sm:$0xf]
        %v1392 = vld [vmem:[#allocation10 + $0x54] sm:$0xf]
        %v1393 = vld [vmem:[#allocation10 + $0x58] sm:$0xf]
        %v1394 = vld [vmem:[#allocation10 + $0x5c] sm:$0xf]
        %v1395 = vld [vmem:[#allocation10 + $0x60] sm:$0xf]
        %v1396 = vld [vmem:[#allocation10 + $0x64] sm:$0xf]
        %v1397 = vld [vmem:[#allocation10 + $0x68] sm:$0xf]
        %v1398 = vld [vmem:[#allocation10 + $0x6c] sm:$0xf]
        %v1399 = vld [vmem:[#allocation10 + $0x70] sm:$0xf]
        %v1400 = vld [vmem:[#allocation10 + $0x74] sm:$0xf]
        %v1401 = vld [vmem:[#allocation10 + $0x78] sm:$0xf]
        %v1402 = vld [vmem:[#allocation10 + $0x7c] sm:$0xf]
        %v1403 = vld [vmem:[#allocation10 + $0x80] sm:$0xf]
        %v1404 = vld [vmem:[#allocation10 + $0x84] sm:$0xf]
        %v1405 = vld [vmem:[#allocation10 + $0x88] sm:$0xf]
        %v1406 = vld [vmem:[#allocation10 + $0x8c] sm:$0xf]
        %v1407 = vld [vmem:[#allocation10 + $0x90] sm:$0xf]
        %v1408 = vld [vmem:[#allocation10 + $0x94] sm:$0xf]
        %v1409 = vld [vmem:[#allocation10 + $0x98] sm:$0xf]
        %v1410 = vld [vmem:[#allocation10 + $0x9c] sm:$0xf]
        %v1411 = vld [vmem:[#allocation10 + $0xa0] sm:$0xf]
        %v1412 = vld [vmem:[#allocation10 + $0xa4] sm:$0xf]
        %v1413 = vld [vmem:[#allocation10 + $0xa8] sm:$0xf]
        %v1414 = vld [vmem:[#allocation10 + $0xac] sm:$0xf]
        %v1415 = vld [vmem:[#allocation10 + $0xb0] sm:$0xf]
        %v1416 = vld [vmem:[#allocation10 + $0xb4] sm:$0xf]
        %v1417 = vld [vmem:[#allocation10 + $0xb8] sm:$0xf]
        %v1418 = vld [vmem:[#allocation10 + $0xbc] sm:$0xf]
        %v1451 = vunpack.c.l.b16 %v1339
        %v1452 = vunpack.c.h.b16 %v1339
        %v1453 = vunpack.c.l.b16 %v1340
        %v1454 = vunpack.c.l.b16 %v1341
        %v1455 = vunpack.c.h.b16 %v1341
        %v1456 = vunpack.c.l.b16 %v1342
        %v1457 = vunpack.c.l.b16 %v1343
        %v1458 = vunpack.c.h.b16 %v1343
        %v1459 = vunpack.c.l.b16 %v1344
        %v1460 = vunpack.c.l.b16 %v1345
        %v1461 = vunpack.c.h.b16 %v1345
        %v1462 = vunpack.c.l.b16 %v1346
        %v1463 = vunpack.c.l.b16 %v1347
        %v1464 = vunpack.c.h.b16 %v1347
        %v1465 = vunpack.c.l.b16 %v1348
        %v1466 = vunpack.c.l.b16 %v1349
        %v1467 = vunpack.c.h.b16 %v1349
        %v1468 = vunpack.c.l.b16 %v1350
        %v1469 = vunpack.c.l.b16 %v1351
        %v1470 = vunpack.c.h.b16 %v1351
        %v1471 = vunpack.c.l.b16 %v1352
        %v1472 = vunpack.c.l.b16 %v1353
        %v1473 = vunpack.c.h.b16 %v1353
        %v1474 = vunpack.c.l.b16 %v1354
        %v1475 = vunpack.c.l.b16 %v1355
        %v1476 = vunpack.c.h.b16 %v1355
        %v1477 = vunpack.c.l.b16 %v1356
        %v1478 = vunpack.c.l.b16 %v1357
        %v1479 = vunpack.c.h.b16 %v1357
        %v1480 = vunpack.c.l.b16 %v1358
        %v1481 = vunpack.c.l.b16 %v1359
        %v1482 = vunpack.c.h.b16 %v1359
        %v1483 = vunpack.c.l.b16 %v1360
        %v1484 = vunpack.c.l.b16 %v1361
        %v1485 = vunpack.c.h.b16 %v1361
        %v1486 = vunpack.c.l.b16 %v1362
        %v1487 = vunpack.c.l.b16 %v1363
        %v1488 = vunpack.c.h.b16 %v1363
        %v1489 = vunpack.c.l.b16 %v1364
        %v1490 = vunpack.c.l.b16 %v1365
        %v1491 = vunpack.c.h.b16 %v1365
        %v1492 = vunpack.c.l.b16 %v1366
        %v1493 = vunpack.c.l.b16 %v1367
        %v1494 = vunpack.c.h.b16 %v1367
        %v1495 = vunpack.c.l.b16 %v1368
        %v1496 = vunpack.c.l.b16 %v1369
        %v1497 = vunpack.c.h.b16 %v1369
        %v1498 = vunpack.c.l.b16 %v1370
        %v1499 = vpack.c.b16 %v1454, %v1451
        %v1500 = vpack.c.b16 %v1455, %v1452
        %v1501 = vpack.c.b16 %v1456, %v1453
        %v1502 = vpack.c.b16 %v1460, %v1457
        %v1503 = vpack.c.b16 %v1461, %v1458
        %v1504 = vpack.c.b16 %v1462, %v1459
        %v1505 = vpack.c.b16 %v1466, %v1463
        %v1506 = vpack.c.b16 %v1467, %v1464
        %v1507 = vpack.c.b16 %v1468, %v1465
        %v1508 = vpack.c.b16 %v1472, %v1469
        %v1509 = vpack.c.b16 %v1473, %v1470
        %v1510 = vpack.c.b16 %v1474, %v1471
        %v1511 = vpack.c.b16 %v1478, %v1475
        %v1512 = vpack.c.b16 %v1479, %v1476
        %v1513 = vpack.c.b16 %v1480, %v1477
        %v1514 = vpack.c.b16 %v1484, %v1481
        %v1515 = vpack.c.b16 %v1485, %v1482
        %v1516 = vpack.c.b16 %v1486, %v1483
        %v1517 = vpack.c.b16 %v1490, %v1487
        %v1518 = vpack.c.b16 %v1491, %v1488
        %v1519 = vpack.c.b16 %v1492, %v1489
        %v1520 = vpack.c.b16 %v1496, %v1493
        %v1521 = vpack.c.b16 %v1497, %v1494
        %v1522 = vpack.c.b16 %v1498, %v1495
        %v1595 = vunpack.c.l.b16 %v1371
        %v1596 = vunpack.c.l.b16 %v1372
        %v1597 = vunpack.c.l.b16 %v1373
        %v1598 = vunpack.c.l.b16 %v1374
        %v1599 = vunpack.c.l.b16 %v1375
        %v1600 = vunpack.c.l.b16 %v1376
        %v1601 = vunpack.c.l.b16 %v1377
        %v1602 = vunpack.c.l.b16 %v1378
        %v1603 = vunpack.c.l.b16 %v1379
        %v1604 = vunpack.c.l.b16 %v1380
        %v1605 = vunpack.c.l.b16 %v1381
        %v1606 = vunpack.c.l.b16 %v1382
        %v1607 = vunpack.c.l.b16 %v1383
        %v1608 = vunpack.c.l.b16 %v1384
        %v1609 = vunpack.c.l.b16 %v1385
        %v1610 = vunpack.c.l.b16 %v1386
        %v1611 = vunpack.c.l.b16 %v1387
        %v1612 = vunpack.c.l.b16 %v1388
        %v1613 = vunpack.c.l.b16 %v1389
        %v1614 = vunpack.c.l.b16 %v1390
        %v1615 = vunpack.c.l.b16 %v1391
        %v1616 = vunpack.c.l.b16 %v1392
        %v1617 = vunpack.c.l.b16 %v1393
        %v1618 = vunpack.c.l.b16 %v1394
        %v1619 = vunpack.c.l.b16 %v1395
        %v1620 = vunpack.c.l.b16 %v1396
        %v1621 = vunpack.c.l.b16 %v1397
        %v1622 = vunpack.c.l.b16 %v1398
        %v1623 = vunpack.c.l.b16 %v1399
        %v1624 = vunpack.c.l.b16 %v1400
        %v1625 = vunpack.c.l.b16 %v1401
        %v1626 = vunpack.c.l.b16 %v1402
        %v1627 = vunpack.c.l.b16 %v1403
        %v1628 = vunpack.c.l.b16 %v1404
        %v1629 = vunpack.c.l.b16 %v1405
        %v1630 = vunpack.c.l.b16 %v1406
        %v1631 = vunpack.c.l.b16 %v1407
        %v1632 = vunpack.c.l.b16 %v1408
        %v1633 = vunpack.c.l.b16 %v1409
        %v1634 = vunpack.c.l.b16 %v1410
        %v1635 = vunpack.c.l.b16 %v1411
        %v1636 = vunpack.c.l.b16 %v1412
        %v1637 = vunpack.c.l.b16 %v1413
        %v1638 = vunpack.c.l.b16 %v1414
        %v1639 = vunpack.c.l.b16 %v1415
        %v1640 = vunpack.c.l.b16 %v1416
        %v1641 = vunpack.c.l.b16 %v1417
        %v1642 = vunpack.c.l.b16 %v1418
        %v1643 = vpack.c.b16 %v1596, %v1595
        %v1644 = vpack.c.b16 %v1598, %v1597
        %v1645 = vpack.c.b16 %v1600, %v1599
        %v1646 = vpack.c.b16 %v1602, %v1601
        %v1647 = vpack.c.b16 %v1604, %v1603
        %v1648 = vpack.c.b16 %v1606, %v1605
        %v1649 = vpack.c.b16 %v1608, %v1607
        %v1650 = vpack.c.b16 %v1610, %v1609
        %v1651 = vpack.c.b16 %v1612, %v1611
        %v1652 = vpack.c.b16 %v1614, %v1613
        %v1653 = vpack.c.b16 %v1616, %v1615
        %v1654 = vpack.c.b16 %v1618, %v1617
        %v1655 = vpack.c.b16 %v1620, %v1619
        %v1656 = vpack.c.b16 %v1622, %v1621
        %v1657 = vpack.c.b16 %v1624, %v1623
        %v1658 = vpack.c.b16 %v1626, %v1625
        %v1659 = vpack.c.b16 %v1628, %v1627
        %v1660 = vpack.c.b16 %v1630, %v1629
        %v1661 = vpack.c.b16 %v1632, %v1631
        %v1662 = vpack.c.b16 %v1634, %v1633
        %v1663 = vpack.c.b16 %v1636, %v1635
        %v1664 = vpack.c.b16 %v1638, %v1637
        %v1665 = vpack.c.b16 %v1640, %v1639
        %v1666 = vpack.c.b16 %v1642, %v1641
        %1691 = vmatprep.subr.bf16.mxu0 0
        %1692 = vmatpush1.bf16.msra.mxu0 %v1650
        %1693 = vmatprep.subr.bf16.mxu0 0
        %1694 = vmatpush1.bf16.msra.mxu0 %v1649
        %1695 = vmatprep.subr.bf16.mxu0 0
        %1696 = vmatpush1.bf16.msra.mxu0 %v1648
        %1697 = vmatprep.subr.bf16.mxu0 0
        %1698 = vmatpush1.bf16.msra.mxu0 %v1647
        %1699 = vmatprep.subr.bf16.mxu0 0
        %1700 = vmatpush1.bf16.msra.mxu0 %v1646
        %1701 = vmatprep.subr.bf16.mxu0 0
        %1702 = vmatpush1.bf16.msra.mxu0 %v1645
        %1703 = vmatprep.subr.bf16.mxu0 0
        %1704 = vmatpush1.bf16.msra.mxu0 %v1644
        %1705 = vmatprep.subr.bf16.mxu0 0
        %1706 = vmatpush1.bf16.msra.mxu0 %v1643
        %1707 = vmatprep.subr.bf16.mxu0 0
        %1708 = vmatpush2.bf16.msra.mxu0 %v1658
        %1709 = vmatprep.subr.bf16.mxu0 0
        %1710 = vmatpush2.bf16.msra.mxu0 %v1657
        %1711 = vmatprep.subr.bf16.mxu0 0
        %1712 = vmatpush2.bf16.msra.mxu0 %v1656
        %1713 = vmatprep.subr.bf16.mxu0 0
        %1714 = vmatpush2.bf16.msra.mxu0 %v1655
        %1715 = vmatprep.subr.bf16.mxu0 0
        %1716 = vmatpush2.bf16.msra.mxu0 %v1654
        %1717 = vmatprep.subr.bf16.mxu0 0
        %1718 = vmatpush2.bf16.msra.mxu0 %v1653
        %1719 = vmatprep.subr.bf16.mxu0 0
        %1720 = vmatpush2.bf16.msra.mxu0 %v1652
        %1721 = vmatprep.subr.bf16.mxu0 0
        %1722 = vmatpush2.bf16.msra.mxu0 %v1651
        %1723 = vmatprep.mubr.bf16.mxu0 %v1500
        %1724 = vmatmul.mubr.bf16.gmra.mxu0 %v1499
        %v1725 = vpop.f32.mrf.mxu0
        %v1726 = vadd.f32 0.0, %v1725
        %v1727 = vpop.f32.mrf.mxu0
        %v1728 = vpop.f32.mrf.mxu0
        %v1729 = vadd.f32 0.0, %v1728
        %v1730 = vpop.f32.mrf.mxu0
        %1731 = vmatprep.mubr.bf16.mxu0 %v1503
        %1732 = vmatmul.mubr.bf16.gmra.mxu0 %v1502
        %v1733 = vpop.f32.mrf.mxu0
        %v1734 = vadd.f32 0.0, %v1733
        %v1735 = vpop.f32.mrf.mxu0
        %v1736 = vpop.f32.mrf.mxu0
        %v1737 = vadd.f32 0.0, %v1736
        %v1738 = vpop.f32.mrf.mxu0
        %1739 = vmatprep.mubr.bf16.mxu0 %v1506
        %1740 = vmatmul.mubr.bf16.gmra.mxu0 %v1505
        %v1741 = vpop.f32.mrf.mxu0
        %v1742 = vadd.f32 0.0, %v1741
        %v1743 = vpop.f32.mrf.mxu0
        %v1744 = vpop.f32.mrf.mxu0
        %v1745 = vadd.f32 0.0, %v1744
        %v1746 = vpop.f32.mrf.mxu0
        %1747 = vmatprep.mubr.bf16.mxu0 %v1509
        %1748 = vmatmul.mubr.bf16.gmra.mxu0 %v1508
        %v1749 = vpop.f32.mrf.mxu0
        %v1750 = vadd.f32 0.0, %v1749
        %v1751 = vpop.f32.mrf.mxu0
        %v1752 = vpop.f32.mrf.mxu0
        %v1753 = vadd.f32 0.0, %v1752
        %v1754 = vpop.f32.mrf.mxu0
        %1755 = vmatprep.mubr.bf16.mxu0 %v1512
        %1756 = vmatmul.mubr.bf16.gmra.mxu0 %v1511
        %v1757 = vpop.f32.mrf.mxu0
        %v1758 = vadd.f32 0.0, %v1757
        %v1759 = vpop.f32.mrf.mxu0
        %v1760 = vpop.f32.mrf.mxu0
        %v1761 = vadd.f32 0.0, %v1760
        %v1762 = vpop.f32.mrf.mxu0
        %1763 = vmatprep.mubr.bf16.mxu0 %v1515
        %1764 = vmatmul.mubr.bf16.gmra.mxu0 %v1514
        %v1765 = vpop.f32.mrf.mxu0
        %v1766 = vadd.f32 0.0, %v1765
        %v1767 = vpop.f32.mrf.mxu0
        %v1768 = vpop.f32.mrf.mxu0
        %v1769 = vadd.f32 0.0, %v1768
        %v1770 = vpop.f32.mrf.mxu0
        %1771 = vmatprep.mubr.bf16.mxu0 %v1518
        %1772 = vmatmul.mubr.bf16.gmra.mxu0 %v1517
        %v1773 = vpop.f32.mrf.mxu0
        %v1774 = vadd.f32 0.0, %v1773
        %v1775 = vpop.f32.mrf.mxu0
        %v1776 = vpop.f32.mrf.mxu0
        %v1777 = vadd.f32 0.0, %v1776
        %v1778 = vpop.f32.mrf.mxu0
        %1779 = vmatprep.mubr.bf16.mxu0 %v1521
        %1780 = vmatmul.mubr.bf16.gmra.mxu0 %v1520
        %v1781 = vpop.f32.mrf.mxu0
        %v1782 = vadd.f32 0.0, %v1781
        %v1783 = vpop.f32.mrf.mxu0
        %v1784 = vpop.f32.mrf.mxu0
        %v1785 = vadd.f32 0.0, %v1784
        %v1786 = vpop.f32.mrf.mxu0
        %1787 = vdwg.mxu0
        %1788 = vmatprep.subr.bf16.mxu0 0
        %1789 = vmatpush1.bf16.msra.mxu0 %v1666
        %1790 = vmatprep.subr.bf16.mxu0 0
        %1791 = vmatpush1.bf16.msra.mxu0 %v1665
        %1792 = vmatprep.subr.bf16.mxu0 0
        %1793 = vmatpush1.bf16.msra.mxu0 %v1664
        %1794 = vmatprep.subr.bf16.mxu0 0
        %1795 = vmatpush1.bf16.msra.mxu0 %v1663
        %1796 = vmatprep.subr.bf16.mxu0 0
        %1797 = vmatpush1.bf16.msra.mxu0 %v1662
        %1798 = vmatprep.subr.bf16.mxu0 0
        %1799 = vmatpush1.bf16.msra.mxu0 %v1661
        %1800 = vmatprep.subr.bf16.mxu0 0
        %1801 = vmatpush1.bf16.msra.mxu0 %v1660
        %1802 = vmatprep.subr.bf16.mxu0 0
        %1803 = vmatpush1.bf16.msra.mxu0 %v1659
        %1804 = vmatprep.subr.bf16.mxu0 0
        %1805 = vmatpush2.bf16.msra.mxu0 0
        %1806 = vmatprep.subr.bf16.mxu0 0
        %1807 = vmatpush2.bf16.msra.mxu0 0
        %1808 = vmatprep.subr.bf16.mxu0 0
        %1809 = vmatpush2.bf16.msra.mxu0 0
        %1810 = vmatprep.subr.bf16.mxu0 0
        %1811 = vmatpush2.bf16.msra.mxu0 0
        %1812 = vmatprep.subr.bf16.mxu0 0
        %1813 = vmatpush2.bf16.msra.mxu0 0
        %1814 = vmatprep.subr.bf16.mxu0 0
        %1815 = vmatpush2.bf16.msra.mxu0 0
        %1816 = vmatprep.subr.bf16.mxu0 0
        %1817 = vmatpush2.bf16.msra.mxu0 0
        %1818 = vmatprep.subr.bf16.mxu0 0
        %1819 = vmatpush2.bf16.msra.mxu0 0
        %1820 = vmatprep.mubr.bf16.mxu0 0
        %1821 = vmatmul.mubr.bf16.gmra.mxu0 %v1501
        %v1822 = vpop.f32.mrf.mxu0
        %v1823 = vadd.f32 %v1726, %v1822
        %v1824 = vpop.f32.mrf.mxu0
        %v1825 = vpop.f32.mrf.mxu0
        %v1826 = vadd.f32 %v1729, %v1825
        %v1827 = vpop.f32.mrf.mxu0
        %1828 = vmatprep.mubr.bf16.mxu0 0
        %1829 = vmatmul.mubr.bf16.gmra.mxu0 %v1504
        %v1830 = vpop.f32.mrf.mxu0
        %v1831 = vadd.f32 %v1734, %v1830
        %v1832 = vpop.f32.mrf.mxu0
        %v1833 = vpop.f32.mrf.mxu0
        %v1834 = vadd.f32 %v1737, %v1833
        %v1835 = vpop.f32.mrf.mxu0
        %1836 = vmatprep.mubr.bf16.mxu0 0
        %1837 = vmatmul.mubr.bf16.gmra.mxu0 %v1507
        %v1838 = vpop.f32.mrf.mxu0
        %v1839 = vadd.f32 %v1742, %v1838
        %v1840 = vpop.f32.mrf.mxu0
        %v1841 = vpop.f32.mrf.mxu0
        %v1842 = vadd.f32 %v1745, %v1841
        %v1843 = vpop.f32.mrf.mxu0
        %1844 = vmatprep.mubr.bf16.mxu0 0
        %1845 = vmatmul.mubr.bf16.gmra.mxu0 %v1510
        %v1846 = vpop.f32.mrf.mxu0
        %v1847 = vadd.f32 %v1750, %v1846
        %v1848 = vpop.f32.mrf.mxu0
        %v1849 = vpop.f32.mrf.mxu0
        %v1850 = vadd.f32 %v1753, %v1849
        %v1851 = vpop.f32.mrf.mxu0
        %1852 = vmatprep.mubr.bf16.mxu0 0
        %1853 = vmatmul.mubr.bf16.gmra.mxu0 %v1513
        %v1854 = vpop.f32.mrf.mxu0
        %v1855 = vadd.f32 %v1758, %v1854
        %v1856 = vpop.f32.mrf.mxu0
        %v1857 = vpop.f32.mrf.mxu0
        %v1858 = vadd.f32 %v1761, %v1857
        %v1859 = vpop.f32.mrf.mxu0
        %1860 = vmatprep.mubr.bf16.mxu0 0
        %1861 = vmatmul.mubr.bf16.gmra.mxu0 %v1516
        %v1862 = vpop.f32.mrf.mxu0
        %v1863 = vadd.f32 %v1766, %v1862
        %v1864 = vpop.f32.mrf.mxu0
        %v1865 = vpop.f32.mrf.mxu0
        %v1866 = vadd.f32 %v1769, %v1865
        %v1867 = vpop.f32.mrf.mxu0
        %1868 = vmatprep.mubr.bf16.mxu0 0
        %1869 = vmatmul.mubr.bf16.gmra.mxu0 %v1519
        %v1870 = vpop.f32.mrf.mxu0
        %v1871 = vadd.f32 %v1774, %v1870
        %v1872 = vpop.f32.mrf.mxu0
        %v1873 = vpop.f32.mrf.mxu0
        %v1874 = vadd.f32 %v1777, %v1873
        %v1875 = vpop.f32.mrf.mxu0
        %1876 = vmatprep.mubr.bf16.mxu0 0
        %1877 = vmatmul.mubr.bf16.gmra.mxu0 %v1522
        %v1878 = vpop.f32.mrf.mxu0
        %v1879 = vadd.f32 %v1782, %v1878
        %v1880 = vpop.f32.mrf.mxu0
        %v1881 = vpop.f32.mrf.mxu0
        %v1882 = vadd.f32 %v1785, %v1881
        %v1883 = vpop.f32.mrf.mxu0
        %1884 = vdwg.mxu0
        %v1886 = vlaneseq
        %v1887 = vshrl.u32 %v1886, 7
        %v1888 = vsub.s32 0, %v1887
        %v1889 = vrot.slane %v1338, %v1888
        %v1891 = vadd.f32 %v1889, %v1823
        %v1892 = vadd.f32 %v1889, %v1826
        %v1893 = vadd.f32 %v1889, %v1831
        %v1894 = vadd.f32 %v1889, %v1834
        %v1895 = vadd.f32 %v1889, %v1839
        %v1896 = vadd.f32 %v1889, %v1842
        %v1897 = vadd.f32 %v1889, %v1847
        %v1898 = vadd.f32 %v1889, %v1850
        %v1899 = vadd.f32 %v1889, %v1855
        %v1900 = vadd.f32 %v1889, %v1858
        %v1901 = vadd.f32 %v1889, %v1863
        %v1902 = vadd.f32 %v1889, %v1866
        %v1903 = vadd.f32 %v1889, %v1871
        %v1904 = vadd.f32 %v1889, %v1874
        %v1905 = vadd.f32 %v1889, %v1879
        %v1906 = vadd.f32 %v1889, %v1882
        %v1907 = vld [vmem:[%s774] sm:$0xff]
        %v1908 = vld [vmem:[%s774 + $0x8] sm:$0xf]
        %v1909 = vld [vmem:[%s774 + $0xc] sm:$0xff]
        %v1910 = vld [vmem:[%s774 + $0x14] sm:$0xf]
        %v1911 = vld [vmem:[%s774 + $0x18] sm:$0xff]
        %v1912 = vld [vmem:[%s774 + $0x20] sm:$0xf]
        %v1913 = vld [vmem:[%s774 + $0x24] sm:$0xff]
        %v1914 = vld [vmem:[%s774 + $0x2c] sm:$0xf]
        %v1915 = vld [vmem:[%s774 + $0x30] sm:$0xff]
        %v1916 = vld [vmem:[%s774 + $0x38] sm:$0xf]
        %v1917 = vld [vmem:[%s774 + $0x3c] sm:$0xff]
        %v1918 = vld [vmem:[%s774 + $0x44] sm:$0xf]
        %v1919 = vld [vmem:[%s774 + $0x48] sm:$0xff]
        %v1920 = vld [vmem:[%s774 + $0x50] sm:$0xf]
        %v1921 = vld [vmem:[%s774 + $0x54] sm:$0xff]
        %v1922 = vld [vmem:[%s774 + $0x5c] sm:$0xf]
        %v1923 = vld [vmem:[%s774 + $0x60] sm:$0xff]
        %v1924 = vld [vmem:[%s774 + $0x68] sm:$0xf]
        %v1925 = vld [vmem:[%s774 + $0x6c] sm:$0xff]
        %v1926 = vld [vmem:[%s774 + $0x74] sm:$0xf]
        %v1927 = vld [vmem:[%s774 + $0x78] sm:$0xff]
        %v1928 = vld [vmem:[%s774 + $0x80] sm:$0xf]
        %v1929 = vld [vmem:[%s774 + $0x84] sm:$0xff]
        %v1930 = vld [vmem:[%s774 + $0x8c] sm:$0xf]
        %v1931 = vld [vmem:[%s774 + $0x90] sm:$0xff]
        %v1932 = vld [vmem:[%s774 + $0x98] sm:$0xf]
        %v1933 = vld [vmem:[%s774 + $0x9c] sm:$0xff]
        %v1934 = vld [vmem:[%s774 + $0xa4] sm:$0xf]
        %v1935 = vld [vmem:[%s774 + $0xa8] sm:$0xff]
        %v1936 = vld [vmem:[%s774 + $0xb0] sm:$0xf]
        %v1937 = vld [vmem:[%s774 + $0xb4] sm:$0xff]
        %v1938 = vld [vmem:[%s774 + $0xbc] sm:$0xf]
        %s1939 = scalar_lea.vmem [#allocation10], 192
        %v1940 = vld [vmem:[%s1939] sm:$0xf]
        %v1941 = vld [vmem:[%s1939 + $0x4] sm:$0xf]
        %v1942 = vld [vmem:[%s1939 + $0x8] sm:$0xf]
        %v1943 = vld [vmem:[%s1939 + $0xc] sm:$0xf]
        %v1944 = vld [vmem:[%s1939 + $0x10] sm:$0xf]
        %v1945 = vld [vmem:[%s1939 + $0x14] sm:$0xf]
        %v1946 = vld [vmem:[%s1939 + $0x18] sm:$0xf]
        %v1947 = vld [vmem:[%s1939 + $0x1c] sm:$0xf]
        %v1948 = vld [vmem:[%s1939 + $0x20] sm:$0xf]
        %v1949 = vld [vmem:[%s1939 + $0x24] sm:$0xf]
        %v1950 = vld [vmem:[%s1939 + $0x28] sm:$0xf]
        %v1951 = vld [vmem:[%s1939 + $0x2c] sm:$0xf]
        %v1952 = vld [vmem:[%s1939 + $0x30] sm:$0xf]
        %v1953 = vld [vmem:[%s1939 + $0x34] sm:$0xf]
        %v1954 = vld [vmem:[%s1939 + $0x38] sm:$0xf]
        %v1955 = vld [vmem:[%s1939 + $0x3c] sm:$0xf]
        %v1956 = vld [vmem:[%s1939 + $0x40] sm:$0xf]
        %v1957 = vld [vmem:[%s1939 + $0x44] sm:$0xf]
        %v1958 = vld [vmem:[%s1939 + $0x48] sm:$0xf]
        %v1959 = vld [vmem:[%s1939 + $0x4c] sm:$0xf]
        %v1960 = vld [vmem:[%s1939 + $0x50] sm:$0xf]
        %v1961 = vld [vmem:[%s1939 + $0x54] sm:$0xf]
        %v1962 = vld [vmem:[%s1939 + $0x58] sm:$0xf]
        %v1963 = vld [vmem:[%s1939 + $0x5c] sm:$0xf]
        %v1964 = vld [vmem:[%s1939 + $0x60] sm:$0xf]
        %v1965 = vld [vmem:[%s1939 + $0x64] sm:$0xf]
        %v1966 = vld [vmem:[%s1939 + $0x68] sm:$0xf]
        %v1967 = vld [vmem:[%s1939 + $0x6c] sm:$0xf]
        %v1968 = vld [vmem:[%s1939 + $0x70] sm:$0xf]
        %v1969 = vld [vmem:[%s1939 + $0x74] sm:$0xf]
        %v1970 = vld [vmem:[%s1939 + $0x78] sm:$0xf]
        %v1971 = vld [vmem:[%s1939 + $0x7c] sm:$0xf]
        %v1972 = vld [vmem:[%s1939 + $0x80] sm:$0xf]
        %v1973 = vld [vmem:[%s1939 + $0x84] sm:$0xf]
        %v1974 = vld [vmem:[%s1939 + $0x88] sm:$0xf]
        %v1975 = vld [vmem:[%s1939 + $0x8c] sm:$0xf]
        %v1976 = vld [vmem:[%s1939 + $0x90] sm:$0xf]
        %v1977 = vld [vmem:[%s1939 + $0x94] sm:$0xf]
        %v1978 = vld [vmem:[%s1939 + $0x98] sm:$0xf]
        %v1979 = vld [vmem:[%s1939 + $0x9c] sm:$0xf]
        %v1980 = vld [vmem:[%s1939 + $0xa0] sm:$0xf]
        %v1981 = vld [vmem:[%s1939 + $0xa4] sm:$0xf]
        %v1982 = vld [vmem:[%s1939 + $0xa8] sm:$0xf]
        %v1983 = vld [vmem:[%s1939 + $0xac] sm:$0xf]
        %v1984 = vld [vmem:[%s1939 + $0xb0] sm:$0xf]
        %v1985 = vld [vmem:[%s1939 + $0xb4] sm:$0xf]
        %v1986 = vld [vmem:[%s1939 + $0xb8] sm:$0xf]
        %v1987 = vld [vmem:[%s1939 + $0xbc] sm:$0xf]
        %v2020 = vunpack.c.l.b16 %v1907
        %v2021 = vunpack.c.h.b16 %v1907
        %v2022 = vunpack.c.l.b16 %v1908
        %v2023 = vunpack.c.l.b16 %v1909
        %v2024 = vunpack.c.h.b16 %v1909
        %v2025 = vunpack.c.l.b16 %v1910
        %v2026 = vunpack.c.l.b16 %v1911
        %v2027 = vunpack.c.h.b16 %v1911
        %v2028 = vunpack.c.l.b16 %v1912
        %v2029 = vunpack.c.l.b16 %v1913
        %v2030 = vunpack.c.h.b16 %v1913
        %v2031 = vunpack.c.l.b16 %v1914
        %v2032 = vunpack.c.l.b16 %v1915
        %v2033 = vunpack.c.h.b16 %v1915
        %v2034 = vunpack.c.l.b16 %v1916
        %v2035 = vunpack.c.l.b16 %v1917
        %v2036 = vunpack.c.h.b16 %v1917
        %v2037 = vunpack.c.l.b16 %v1918
        %v2038 = vunpack.c.l.b16 %v1919
        %v2039 = vunpack.c.h.b16 %v1919
        %v2040 = vunpack.c.l.b16 %v1920
        %v2041 = vunpack.c.l.b16 %v1921
        %v2042 = vunpack.c.h.b16 %v1921
        %v2043 = vunpack.c.l.b16 %v1922
        %v2044 = vunpack.c.l.b16 %v1923
        %v2045 = vunpack.c.h.b16 %v1923
        %v2046 = vunpack.c.l.b16 %v1924
        %v2047 = vunpack.c.l.b16 %v1925
        %v2048 = vunpack.c.h.b16 %v1925
        %v2049 = vunpack.c.l.b16 %v1926
        %v2050 = vunpack.c.l.b16 %v1927
        %v2051 = vunpack.c.h.b16 %v1927
        %v2052 = vunpack.c.l.b16 %v1928
        %v2053 = vunpack.c.l.b16 %v1929
        %v2054 = vunpack.c.h.b16 %v1929
        %v2055 = vunpack.c.l.b16 %v1930
        %v2056 = vunpack.c.l.b16 %v1931
        %v2057 = vunpack.c.h.b16 %v1931
        %v2058 = vunpack.c.l.b16 %v1932
        %v2059 = vunpack.c.l.b16 %v1933
        %v2060 = vunpack.c.h.b16 %v1933
        %v2061 = vunpack.c.l.b16 %v1934
        %v2062 = vunpack.c.l.b16 %v1935
        %v2063 = vunpack.c.h.b16 %v1935
        %v2064 = vunpack.c.l.b16 %v1936
        %v2065 = vunpack.c.l.b16 %v1937
        %v2066 = vunpack.c.h.b16 %v1937
        %v2067 = vunpack.c.l.b16 %v1938
        %v2068 = vpack.c.b16 %v2023, %v2020
        %v2069 = vpack.c.b16 %v2024, %v2021
        %v2070 = vpack.c.b16 %v2025, %v2022
        %v2071 = vpack.c.b16 %v2029, %v2026
        %v2072 = vpack.c.b16 %v2030, %v2027
        %v2073 = vpack.c.b16 %v2031, %v2028
        %v2074 = vpack.c.b16 %v2035, %v2032
        %v2075 = vpack.c.b16 %v2036, %v2033
        %v2076 = vpack.c.b16 %v2037, %v2034
        %v2077 = vpack.c.b16 %v2041, %v2038
        %v2078 = vpack.c.b16 %v2042, %v2039
        %v2079 = vpack.c.b16 %v2043, %v2040
        %v2080 = vpack.c.b16 %v2047, %v2044
        %v2081 = vpack.c.b16 %v2048, %v2045
        %v2082 = vpack.c.b16 %v2049, %v2046
        %v2083 = vpack.c.b16 %v2053, %v2050
        %v2084 = vpack.c.b16 %v2054, %v2051
        %v2085 = vpack.c.b16 %v2055, %v2052
        %v2086 = vpack.c.b16 %v2059, %v2056
        %v2087 = vpack.c.b16 %v2060, %v2057
        %v2088 = vpack.c.b16 %v2061, %v2058
        %v2089 = vpack.c.b16 %v2065, %v2062
        %v2090 = vpack.c.b16 %v2066, %v2063
        %v2091 = vpack.c.b16 %v2067, %v2064
        %v2164 = vunpack.c.l.b16 %v1940
        %v2165 = vunpack.c.l.b16 %v1941
        %v2166 = vunpack.c.l.b16 %v1942
        %v2167 = vunpack.c.l.b16 %v1943
        %v2168 = vunpack.c.l.b16 %v1944
        %v2169 = vunpack.c.l.b16 %v1945
        %v2170 = vunpack.c.l.b16 %v1946
        %v2171 = vunpack.c.l.b16 %v1947
        %v2172 = vunpack.c.l.b16 %v1948
        %v2173 = vunpack.c.l.b16 %v1949
        %v2174 = vunpack.c.l.b16 %v1950
        %v2175 = vunpack.c.l.b16 %v1951
        %v2176 = vunpack.c.l.b16 %v1952
        %v2177 = vunpack.c.l.b16 %v1953
        %v2178 = vunpack.c.l.b16 %v1954
        %v2179 = vunpack.c.l.b16 %v1955
        %v2180 = vunpack.c.l.b16 %v1956
        %v2181 = vunpack.c.l.b16 %v1957
        %v2182 = vunpack.c.l.b16 %v1958
        %v2183 = vunpack.c.l.b16 %v1959
        %v2184 = vunpack.c.l.b16 %v1960
        %v2185 = vunpack.c.l.b16 %v1961
        %v2186 = vunpack.c.l.b16 %v1962
        %v2187 = vunpack.c.l.b16 %v1963
        %v2188 = vunpack.c.l.b16 %v1964
        %v2189 = vunpack.c.l.b16 %v1965
        %v2190 = vunpack.c.l.b16 %v1966
        %v2191 = vunpack.c.l.b16 %v1967
        %v2192 = vunpack.c.l.b16 %v1968
        %v2193 = vunpack.c.l.b16 %v1969
        %v2194 = vunpack.c.l.b16 %v1970
        %v2195 = vunpack.c.l.b16 %v1971
        %v2196 = vunpack.c.l.b16 %v1972
        %v2197 = vunpack.c.l.b16 %v1973
        %v2198 = vunpack.c.l.b16 %v1974
        %v2199 = vunpack.c.l.b16 %v1975
        %v2200 = vunpack.c.l.b16 %v1976
        %v2201 = vunpack.c.l.b16 %v1977
        %v2202 = vunpack.c.l.b16 %v1978
        %v2203 = vunpack.c.l.b16 %v1979
        %v2204 = vunpack.c.l.b16 %v1980
        %v2205 = vunpack.c.l.b16 %v1981
        %v2206 = vunpack.c.l.b16 %v1982
        %v2207 = vunpack.c.l.b16 %v1983
        %v2208 = vunpack.c.l.b16 %v1984
        %v2209 = vunpack.c.l.b16 %v1985
        %v2210 = vunpack.c.l.b16 %v1986
        %v2211 = vunpack.c.l.b16 %v1987
        %v2212 = vpack.c.b16 %v2165, %v2164
        %v2213 = vpack.c.b16 %v2167, %v2166
        %v2214 = vpack.c.b16 %v2169, %v2168
        %v2215 = vpack.c.b16 %v2171, %v2170
        %v2216 = vpack.c.b16 %v2173, %v2172
        %v2217 = vpack.c.b16 %v2175, %v2174
        %v2218 = vpack.c.b16 %v2177, %v2176
        %v2219 = vpack.c.b16 %v2179, %v2178
        %v2220 = vpack.c.b16 %v2181, %v2180
        %v2221 = vpack.c.b16 %v2183, %v2182
        %v2222 = vpack.c.b16 %v2185, %v2184
        %v2223 = vpack.c.b16 %v2187, %v2186
        %v2224 = vpack.c.b16 %v2189, %v2188
        %v2225 = vpack.c.b16 %v2191, %v2190
        %v2226 = vpack.c.b16 %v2193, %v2192
        %v2227 = vpack.c.b16 %v2195, %v2194
        %v2228 = vpack.c.b16 %v2197, %v2196
        %v2229 = vpack.c.b16 %v2199, %v2198
        %v2230 = vpack.c.b16 %v2201, %v2200
        %v2231 = vpack.c.b16 %v2203, %v2202
        %v2232 = vpack.c.b16 %v2205, %v2204
        %v2233 = vpack.c.b16 %v2207, %v2206
        %v2234 = vpack.c.b16 %v2209, %v2208
        %v2235 = vpack.c.b16 %v2211, %v2210
        %2260 = vmatprep.subr.bf16.mxu0 0
        %2261 = vmatpush1.bf16.msra.mxu0 %v2219
        %2262 = vmatprep.subr.bf16.mxu0 0
        %2263 = vmatpush1.bf16.msra.mxu0 %v2218
        %2264 = vmatprep.subr.bf16.mxu0 0
        %2265 = vmatpush1.bf16.msra.mxu0 %v2217
        %2266 = vmatprep.subr.bf16.mxu0 0
        %2267 = vmatpush1.bf16.msra.mxu0 %v2216
        %2268 = vmatprep.subr.bf16.mxu0 0
        %2269 = vmatpush1.bf16.msra.mxu0 %v2215
        %2270 = vmatprep.subr.bf16.mxu0 0
        %2271 = vmatpush1.bf16.msra.mxu0 %v2214
        %2272 = vmatprep.subr.bf16.mxu0 0
        %2273 = vmatpush1.bf16.msra.mxu0 %v2213
        %2274 = vmatprep.subr.bf16.mxu0 0
        %2275 = vmatpush1.bf16.msra.mxu0 %v2212
        %2276 = vmatprep.subr.bf16.mxu0 0
        %2277 = vmatpush2.bf16.msra.mxu0 %v2227
        %2278 = vmatprep.subr.bf16.mxu0 0
        %2279 = vmatpush2.bf16.msra.mxu0 %v2226
        %2280 = vmatprep.subr.bf16.mxu0 0
        %2281 = vmatpush2.bf16.msra.mxu0 %v2225
        %2282 = vmatprep.subr.bf16.mxu0 0
        %2283 = vmatpush2.bf16.msra.mxu0 %v2224
        %2284 = vmatprep.subr.bf16.mxu0 0
        %2285 = vmatpush2.bf16.msra.mxu0 %v2223
        %2286 = vmatprep.subr.bf16.mxu0 0
        %2287 = vmatpush2.bf16.msra.mxu0 %v2222
        %2288 = vmatprep.subr.bf16.mxu0 0
        %2289 = vmatpush2.bf16.msra.mxu0 %v2221
        %2290 = vmatprep.subr.bf16.mxu0 0
        %2291 = vmatpush2.bf16.msra.mxu0 %v2220
        %2292 = vmatprep.mubr.bf16.mxu0 %v2069
        %2293 = vmatmul.mubr.bf16.gmra.mxu0 %v2068
        %v2294 = vpop.f32.mrf.mxu0
        %v2295 = vadd.f32 0.0, %v2294
        %v2296 = vpop.f32.mrf.mxu0
        %v2297 = vpop.f32.mrf.mxu0
        %v2298 = vadd.f32 0.0, %v2297
        %v2299 = vpop.f32.mrf.mxu0
        %2300 = vmatprep.mubr.bf16.mxu0 %v2072
        %2301 = vmatmul.mubr.bf16.gmra.mxu0 %v2071
        %v2302 = vpop.f32.mrf.mxu0
        %v2303 = vadd.f32 0.0, %v2302
        %v2304 = vpop.f32.mrf.mxu0
        %v2305 = vpop.f32.mrf.mxu0
        %v2306 = vadd.f32 0.0, %v2305
        %v2307 = vpop.f32.mrf.mxu0
        %2308 = vmatprep.mubr.bf16.mxu0 %v2075
        %2309 = vmatmul.mubr.bf16.gmra.mxu0 %v2074
        %v2310 = vpop.f32.mrf.mxu0
        %v2311 = vadd.f32 0.0, %v2310
        %v2312 = vpop.f32.mrf.mxu0
        %v2313 = vpop.f32.mrf.mxu0
        %v2314 = vadd.f32 0.0, %v2313
        %v2315 = vpop.f32.mrf.mxu0
        %2316 = vmatprep.mubr.bf16.mxu0 %v2078
        %2317 = vmatmul.mubr.bf16.gmra.mxu0 %v2077
        %v2318 = vpop.f32.mrf.mxu0
        %v2319 = vadd.f32 0.0, %v2318
        %v2320 = vpop.f32.mrf.mxu0
        %v2321 = vpop.f32.mrf.mxu0
        %v2322 = vadd.f32 0.0, %v2321
        %v2323 = vpop.f32.mrf.mxu0
        %2324 = vmatprep.mubr.bf16.mxu0 %v2081
        %2325 = vmatmul.mubr.bf16.gmra.mxu0 %v2080
        %v2326 = vpop.f32.mrf.mxu0
        %v2327 = vadd.f32 0.0, %v2326
        %v2328 = vpop.f32.mrf.mxu0
        %v2329 = vpop.f32.mrf.mxu0
        %v2330 = vadd.f32 0.0, %v2329
        %v2331 = vpop.f32.mrf.mxu0
        %2332 = vmatprep.mubr.bf16.mxu0 %v2084
        %2333 = vmatmul.mubr.bf16.gmra.mxu0 %v2083
        %v2334 = vpop.f32.mrf.mxu0
        %v2335 = vadd.f32 0.0, %v2334
        %v2336 = vpop.f32.mrf.mxu0
        %v2337 = vpop.f32.mrf.mxu0
        %v2338 = vadd.f32 0.0, %v2337
        %v2339 = vpop.f32.mrf.mxu0
        %2340 = vmatprep.mubr.bf16.mxu0 %v2087
        %2341 = vmatmul.mubr.bf16.gmra.mxu0 %v2086
        %v2342 = vpop.f32.mrf.mxu0
        %v2343 = vadd.f32 0.0, %v2342
        %v2344 = vpop.f32.mrf.mxu0
        %v2345 = vpop.f32.mrf.mxu0
        %v2346 = vadd.f32 0.0, %v2345
        %v2347 = vpop.f32.mrf.mxu0
        %2348 = vmatprep.mubr.bf16.mxu0 %v2090
        %2349 = vmatmul.mubr.bf16.gmra.mxu0 %v2089
        %v2350 = vpop.f32.mrf.mxu0
        %v2351 = vadd.f32 0.0, %v2350
        %v2352 = vpop.f32.mrf.mxu0
        %v2353 = vpop.f32.mrf.mxu0
        %v2354 = vadd.f32 0.0, %v2353
        %v2355 = vpop.f32.mrf.mxu0
        %2356 = vdwg.mxu0
        %2357 = vmatprep.subr.bf16.mxu0 0
        %2358 = vmatpush1.bf16.msra.mxu0 %v2235
        %2359 = vmatprep.subr.bf16.mxu0 0
        %2360 = vmatpush1.bf16.msra.mxu0 %v2234
        %2361 = vmatprep.subr.bf16.mxu0 0
        %2362 = vmatpush1.bf16.msra.mxu0 %v2233
        %2363 = vmatprep.subr.bf16.mxu0 0
        %2364 = vmatpush1.bf16.msra.mxu0 %v2232
        %2365 = vmatprep.subr.bf16.mxu0 0
        %2366 = vmatpush1.bf16.msra.mxu0 %v2231
        %2367 = vmatprep.subr.bf16.mxu0 0
        %2368 = vmatpush1.bf16.msra.mxu0 %v2230
        %2369 = vmatprep.subr.bf16.mxu0 0
        %2370 = vmatpush1.bf16.msra.mxu0 %v2229
        %2371 = vmatprep.subr.bf16.mxu0 0
        %2372 = vmatpush1.bf16.msra.mxu0 %v2228
        %2373 = vmatprep.subr.bf16.mxu0 0
        %2374 = vmatpush2.bf16.msra.mxu0 0
        %2375 = vmatprep.subr.bf16.mxu0 0
        %2376 = vmatpush2.bf16.msra.mxu0 0
        %2377 = vmatprep.subr.bf16.mxu0 0
        %2378 = vmatpush2.bf16.msra.mxu0 0
        %2379 = vmatprep.subr.bf16.mxu0 0
        %2380 = vmatpush2.bf16.msra.mxu0 0
        %2381 = vmatprep.subr.bf16.mxu0 0
        %2382 = vmatpush2.bf16.msra.mxu0 0
        %2383 = vmatprep.subr.bf16.mxu0 0
        %2384 = vmatpush2.bf16.msra.mxu0 0
        %2385 = vmatprep.subr.bf16.mxu0 0
        %2386 = vmatpush2.bf16.msra.mxu0 0
        %2387 = vmatprep.subr.bf16.mxu0 0
        %2388 = vmatpush2.bf16.msra.mxu0 0
        %2389 = vmatprep.mubr.bf16.mxu0 0
        %2390 = vmatmul.mubr.bf16.gmra.mxu0 %v2070
        %v2391 = vpop.f32.mrf.mxu0
        %v2392 = vadd.f32 %v2295, %v2391
        %v2393 = vpop.f32.mrf.mxu0
        %v2394 = vpop.f32.mrf.mxu0
        %v2395 = vadd.f32 %v2298, %v2394
        %v2396 = vpop.f32.mrf.mxu0
        %2397 = vmatprep.mubr.bf16.mxu0 0
        %2398 = vmatmul.mubr.bf16.gmra.mxu0 %v2073
        %v2399 = vpop.f32.mrf.mxu0
        %v2400 = vadd.f32 %v2303, %v2399
        %v2401 = vpop.f32.mrf.mxu0
        %v2402 = vpop.f32.mrf.mxu0
        %v2403 = vadd.f32 %v2306, %v2402
        %v2404 = vpop.f32.mrf.mxu0
        %2405 = vmatprep.mubr.bf16.mxu0 0
        %2406 = vmatmul.mubr.bf16.gmra.mxu0 %v2076
        %v2407 = vpop.f32.mrf.mxu0
        %v2408 = vadd.f32 %v2311, %v2407
        %v2409 = vpop.f32.mrf.mxu0
        %v2410 = vpop.f32.mrf.mxu0
        %v2411 = vadd.f32 %v2314, %v2410
        %v2412 = vpop.f32.mrf.mxu0
        %2413 = vmatprep.mubr.bf16.mxu0 0
        %2414 = vmatmul.mubr.bf16.gmra.mxu0 %v2079
        %v2415 = vpop.f32.mrf.mxu0
        %v2416 = vadd.f32 %v2319, %v2415
        %v2417 = vpop.f32.mrf.mxu0
        %v2418 = vpop.f32.mrf.mxu0
        %v2419 = vadd.f32 %v2322, %v2418
        %v2420 = vpop.f32.mrf.mxu0
        %2421 = vmatprep.mubr.bf16.mxu0 0
        %2422 = vmatmul.mubr.bf16.gmra.mxu0 %v2082
        %v2423 = vpop.f32.mrf.mxu0
        %v2424 = vadd.f32 %v2327, %v2423
        %v2425 = vpop.f32.mrf.mxu0
        %v2426 = vpop.f32.mrf.mxu0
        %v2427 = vadd.f32 %v2330, %v2426
        %v2428 = vpop.f32.mrf.mxu0
        %2429 = vmatprep.mubr.bf16.mxu0 0
        %2430 = vmatmul.mubr.bf16.gmra.mxu0 %v2085
        %v2431 = vpop.f32.mrf.mxu0
        %v2432 = vadd.f32 %v2335, %v2431
        %v2433 = vpop.f32.mrf.mxu0
        %v2434 = vpop.f32.mrf.mxu0
        %v2435 = vadd.f32 %v2338, %v2434
        %v2436 = vpop.f32.mrf.mxu0
        %2437 = vmatprep.mubr.bf16.mxu0 0
        %2438 = vmatmul.mubr.bf16.gmra.mxu0 %v2088
        %v2439 = vpop.f32.mrf.mxu0
        %v2440 = vadd.f32 %v2343, %v2439
        %v2441 = vpop.f32.mrf.mxu0
        %v2442 = vpop.f32.mrf.mxu0
        %v2443 = vadd.f32 %v2346, %v2442
        %v2444 = vpop.f32.mrf.mxu0
        %2445 = vmatprep.mubr.bf16.mxu0 0
        %2446 = vmatmul.mubr.bf16.gmra.mxu0 %v2091
        %v2447 = vpop.f32.mrf.mxu0
        %v2448 = vadd.f32 %v2351, %v2447
        %v2449 = vpop.f32.mrf.mxu0
        %v2450 = vpop.f32.mrf.mxu0
        %v2451 = vadd.f32 %v2354, %v2450
        %v2452 = vpop.f32.mrf.mxu0
        %2453 = vdwg.mxu0
        %v2454 = vadd.f32 %v1891, %v2392
        %v2455 = vadd.f32 %v1892, %v2395
        %v2456 = vadd.f32 %v1893, %v2400
        %v2457 = vadd.f32 %v1894, %v2403
        %v2458 = vadd.f32 %v1895, %v2408
        %v2459 = vadd.f32 %v1896, %v2411
        %v2460 = vadd.f32 %v1897, %v2416
        %v2461 = vadd.f32 %v1898, %v2419
        %v2462 = vadd.f32 %v1899, %v2424
        %v2463 = vadd.f32 %v1900, %v2427
        %v2464 = vadd.f32 %v1901, %v2432
        %v2465 = vadd.f32 %v1902, %v2435
        %v2466 = vadd.f32 %v1903, %v2440
        %v2467 = vadd.f32 %v1904, %v2443
        %v2468 = vadd.f32 %v1905, %v2448
        %v2469 = vadd.f32 %v1906, %v2451
        %s2470 = scalar_lea.vmem [#allocation2], 48
        %v2471 = vld [vmem:[%s2470] sm:$0xff]
        %v2472 = vld [vmem:[%s2470 + $0x8] sm:$0xf]
        %v2473 = vld [vmem:[%s2470 + $0xc] sm:$0xff]
        %v2474 = vld [vmem:[%s2470 + $0x14] sm:$0xf]
        %v2475 = vld [vmem:[%s2470 + $0x18] sm:$0xff]
        %v2476 = vld [vmem:[%s2470 + $0x20] sm:$0xf]
        %v2477 = vld [vmem:[%s2470 + $0x24] sm:$0xff]
        %v2478 = vld [vmem:[%s2470 + $0x2c] sm:$0xf]
        %v2479 = vld [vmem:[%s2470 + $0x30] sm:$0xff]
        %v2480 = vld [vmem:[%s2470 + $0x38] sm:$0xf]
        %v2481 = vld [vmem:[%s2470 + $0x3c] sm:$0xff]
        %v2482 = vld [vmem:[%s2470 + $0x44] sm:$0xf]
        %v2483 = vld [vmem:[%s2470 + $0x48] sm:$0xff]
        %v2484 = vld [vmem:[%s2470 + $0x50] sm:$0xf]
        %v2485 = vld [vmem:[%s2470 + $0x54] sm:$0xff]
        %v2486 = vld [vmem:[%s2470 + $0x5c] sm:$0xf]
        %v2487 = vld [vmem:[%s2470 + $0x60] sm:$0xff]
        %v2488 = vld [vmem:[%s2470 + $0x68] sm:$0xf]
        %v2489 = vld [vmem:[%s2470 + $0x6c] sm:$0xff]
        %v2490 = vld [vmem:[%s2470 + $0x74] sm:$0xf]
        %v2491 = vld [vmem:[%s2470 + $0x78] sm:$0xff]
        %v2492 = vld [vmem:[%s2470 + $0x80] sm:$0xf]
        %v2493 = vld [vmem:[%s2470 + $0x84] sm:$0xff]
        %v2494 = vld [vmem:[%s2470 + $0x8c] sm:$0xf]
        %v2495 = vld [vmem:[%s2470 + $0x90] sm:$0xff]
        %v2496 = vld [vmem:[%s2470 + $0x98] sm:$0xf]
        %v2497 = vld [vmem:[%s2470 + $0x9c] sm:$0xff]
        %v2498 = vld [vmem:[%s2470 + $0xa4] sm:$0xf]
        %v2499 = vld [vmem:[%s2470 + $0xa8] sm:$0xff]
        %v2500 = vld [vmem:[%s2470 + $0xb0] sm:$0xf]
        %v2501 = vld [vmem:[%s2470 + $0xb4] sm:$0xff]
        %v2502 = vld [vmem:[%s2470 + $0xbc] sm:$0xf]
        %s2503 = scalar_lea.vmem [#allocation10], 384
        %v2504 = vld [vmem:[%s2503] sm:$0xf]
        %v2505 = vld [vmem:[%s2503 + $0x4] sm:$0xf]
        %v2506 = vld [vmem:[%s2503 + $0x8] sm:$0xf]
        %v2507 = vld [vmem:[%s2503 + $0xc] sm:$0xf]
        %v2508 = vld [vmem:[%s2503 + $0x10] sm:$0xf]
        %v2509 = vld [vmem:[%s2503 + $0x14] sm:$0xf]
        %v2510 = vld [vmem:[%s2503 + $0x18] sm:$0xf]
        %v2511 = vld [vmem:[%s2503 + $0x1c] sm:$0xf]
        %v2512 = vld [vmem:[%s2503 + $0x20] sm:$0xf]
        %v2513 = vld [vmem:[%s2503 + $0x24] sm:$0xf]
        %v2514 = vld [vmem:[%s2503 + $0x28] sm:$0xf]
        %v2515 = vld [vmem:[%s2503 + $0x2c] sm:$0xf]
        %v2516 = vld [vmem:[%s2503 + $0x30] sm:$0xf]
        %v2517 = vld [vmem:[%s2503 + $0x34] sm:$0xf]
        %v2518 = vld [vmem:[%s2503 + $0x38] sm:$0xf]
        %v2519 = vld [vmem:[%s2503 + $0x3c] sm:$0xf]
        %v2520 = vld [vmem:[%s2503 + $0x40] sm:$0xf]
        %v2521 = vld [vmem:[%s2503 + $0x44] sm:$0xf]
        %v2522 = vld [vmem:[%s2503 + $0x48] sm:$0xf]
        %v2523 = vld [vmem:[%s2503 + $0x4c] sm:$0xf]
        %v2524 = vld [vmem:[%s2503 + $0x50] sm:$0xf]
        %v2525 = vld [vmem:[%s2503 + $0x54] sm:$0xf]
        %v2526 = vld [vmem:[%s2503 + $0x58] sm:$0xf]
        %v2527 = vld [vmem:[%s2503 + $0x5c] sm:$0xf]
        %v2528 = vld [vmem:[%s2503 + $0x60] sm:$0xf]
        %v2529 = vld [vmem:[%s2503 + $0x64] sm:$0xf]
        %v2530 = vld [vmem:[%s2503 + $0x68] sm:$0xf]
        %v2531 = vld [vmem:[%s2503 + $0x6c] sm:$0xf]
        %v2532 = vld [vmem:[%s2503 + $0x70] sm:$0xf]
        %v2533 = vld [vmem:[%s2503 + $0x74] sm:$0xf]
        %v2534 = vld [vmem:[%s2503 + $0x78] sm:$0xf]
        %v2535 = vld [vmem:[%s2503 + $0x7c] sm:$0xf]
        %v2536 = vld [vmem:[%s2503 + $0x80] sm:$0xf]
        %v2537 = vld [vmem:[%s2503 + $0x84] sm:$0xf]
        %v2538 = vld [vmem:[%s2503 + $0x88] sm:$0xf]
        %v2539 = vld [vmem:[%s2503 + $0x8c] sm:$0xf]
        %v2540 = vld [vmem:[%s2503 + $0x90] sm:$0xf]
        %v2541 = vld [vmem:[%s2503 + $0x94] sm:$0xf]
        %v2542 = vld [vmem:[%s2503 + $0x98] sm:$0xf]
        %v2543 = vld [vmem:[%s2503 + $0x9c] sm:$0xf]
        %v2544 = vld [vmem:[%s2503 + $0xa0] sm:$0xf]
        %v2545 = vld [vmem:[%s2503 + $0xa4] sm:$0xf]
        %v2546 = vld [vmem:[%s2503 + $0xa8] sm:$0xf]
        %v2547 = vld [vmem:[%s2503 + $0xac] sm:$0xf]
        %v2548 = vld [vmem:[%s2503 + $0xb0] sm:$0xf]
        %v2549 = vld [vmem:[%s2503 + $0xb4] sm:$0xf]
        %v2550 = vld [vmem:[%s2503 + $0xb8] sm:$0xf]
        %v2551 = vld [vmem:[%s2503 + $0xbc] sm:$0xf]
        %v2584 = vunpack.c.l.b16 %v2471
        %v2585 = vunpack.c.h.b16 %v2471
        %v2586 = vunpack.c.l.b16 %v2472
        %v2587 = vunpack.c.l.b16 %v2473
        %v2588 = vunpack.c.h.b16 %v2473
        %v2589 = vunpack.c.l.b16 %v2474
        %v2590 = vunpack.c.l.b16 %v2475
        %v2591 = vunpack.c.h.b16 %v2475
        %v2592 = vunpack.c.l.b16 %v2476
        %v2593 = vunpack.c.l.b16 %v2477
        %v2594 = vunpack.c.h.b16 %v2477
        %v2595 = vunpack.c.l.b16 %v2478
        %v2596 = vunpack.c.l.b16 %v2479
        %v2597 = vunpack.c.h.b16 %v2479
        %v2598 = vunpack.c.l.b16 %v2480
        %v2599 = vunpack.c.l.b16 %v2481
        %v2600 = vunpack.c.h.b16 %v2481
        %v2601 = vunpack.c.l.b16 %v2482
        %v2602 = vunpack.c.l.b16 %v2483
        %v2603 = vunpack.c.h.b16 %v2483
        %v2604 = vunpack.c.l.b16 %v2484
        %v2605 = vunpack.c.l.b16 %v2485
        %v2606 = vunpack.c.h.b16 %v2485
        %v2607 = vunpack.c.l.b16 %v2486
        %v2608 = vunpack.c.l.b16 %v2487
        %v2609 = vunpack.c.h.b16 %v2487
        %v2610 = vunpack.c.l.b16 %v2488
        %v2611 = vunpack.c.l.b16 %v2489
        %v2612 = vunpack.c.h.b16 %v2489
        %v2613 = vunpack.c.l.b16 %v2490
        %v2614 = vunpack.c.l.b16 %v2491
        %v2615 = vunpack.c.h.b16 %v2491
        %v2616 = vunpack.c.l.b16 %v2492
        %v2617 = vunpack.c.l.b16 %v2493
        %v2618 = vunpack.c.h.b16 %v2493
        %v2619 = vunpack.c.l.b16 %v2494
        %v2620 = vunpack.c.l.b16 %v2495
        %v2621 = vunpack.c.h.b16 %v2495
        %v2622 = vunpack.c.l.b16 %v2496
        %v2623 = vunpack.c.l.b16 %v2497
        %v2624 = vunpack.c.h.b16 %v2497
        %v2625 = vunpack.c.l.b16 %v2498
        %v2626 = vunpack.c.l.b16 %v2499
        %v2627 = vunpack.c.h.b16 %v2499
        %v2628 = vunpack.c.l.b16 %v2500
        %v2629 = vunpack.c.l.b16 %v2501
        %v2630 = vunpack.c.h.b16 %v2501
        %v2631 = vunpack.c.l.b16 %v2502
        %v2632 = vpack.c.b16 %v2587, %v2584
        %v2633 = vpack.c.b16 %v2588, %v2585
        %v2634 = vpack.c.b16 %v2589, %v2586
        %v2635 = vpack.c.b16 %v2593, %v2590
        %v2636 = vpack.c.b16 %v2594, %v2591
        %v2637 = vpack.c.b16 %v2595, %v2592
        %v2638 = vpack.c.b16 %v2599, %v2596
        %v2639 = vpack.c.b16 %v2600, %v2597
        %v2640 = vpack.c.b16 %v2601, %v2598
        %v2641 = vpack.c.b16 %v2605, %v2602
        %v2642 = vpack.c.b16 %v2606, %v2603
        %v2643 = vpack.c.b16 %v2607, %v2604
        %v2644 = vpack.c.b16 %v2611, %v2608
        %v2645 = vpack.c.b16 %v2612, %v2609
        %v2646 = vpack.c.b16 %v2613, %v2610
        %v2647 = vpack.c.b16 %v2617, %v2614
        %v2648 = vpack.c.b16 %v2618, %v2615
        %v2649 = vpack.c.b16 %v2619, %v2616
        %v2650 = vpack.c.b16 %v2623, %v2620
        %v2651 = vpack.c.b16 %v2624, %v2621
        %v2652 = vpack.c.b16 %v2625, %v2622
        %v2653 = vpack.c.b16 %v2629, %v2626
        %v2654 = vpack.c.b16 %v2630, %v2627
        %v2655 = vpack.c.b16 %v2631, %v2628
        %v2728 = vunpack.c.l.b16 %v2504
        %v2729 = vunpack.c.l.b16 %v2505
        %v2730 = vunpack.c.l.b16 %v2506
        %v2731 = vunpack.c.l.b16 %v2507
        %v2732 = vunpack.c.l.b16 %v2508
        %v2733 = vunpack.c.l.b16 %v2509
        %v2734 = vunpack.c.l.b16 %v2510
        %v2735 = vunpack.c.l.b16 %v2511
        %v2736 = vunpack.c.l.b16 %v2512
        %v2737 = vunpack.c.l.b16 %v2513
        %v2738 = vunpack.c.l.b16 %v2514
        %v2739 = vunpack.c.l.b16 %v2515
        %v2740 = vunpack.c.l.b16 %v2516
        %v2741 = vunpack.c.l.b16 %v2517
        %v2742 = vunpack.c.l.b16 %v2518
        %v2743 = vunpack.c.l.b16 %v2519
        %v2744 = vunpack.c.l.b16 %v2520
        %v2745 = vunpack.c.l.b16 %v2521
        %v2746 = vunpack.c.l.b16 %v2522
        %v2747 = vunpack.c.l.b16 %v2523
        %v2748 = vunpack.c.l.b16 %v2524
        %v2749 = vunpack.c.l.b16 %v2525
        %v2750 = vunpack.c.l.b16 %v2526
        %v2751 = vunpack.c.l.b16 %v2527
        %v2752 = vunpack.c.l.b16 %v2528
        %v2753 = vunpack.c.l.b16 %v2529
        %v2754 = vunpack.c.l.b16 %v2530
        %v2755 = vunpack.c.l.b16 %v2531
        %v2756 = vunpack.c.l.b16 %v2532
        %v2757 = vunpack.c.l.b16 %v2533
        %v2758 = vunpack.c.l.b16 %v2534
        %v2759 = vunpack.c.l.b16 %v2535
        %v2760 = vunpack.c.l.b16 %v2536
        %v2761 = vunpack.c.l.b16 %v2537
        %v2762 = vunpack.c.l.b16 %v2538
        %v2763 = vunpack.c.l.b16 %v2539
        %v2764 = vunpack.c.l.b16 %v2540
        %v2765 = vunpack.c.l.b16 %v2541
        %v2766 = vunpack.c.l.b16 %v2542
        %v2767 = vunpack.c.l.b16 %v2543
        %v2768 = vunpack.c.l.b16 %v2544
        %v2769 = vunpack.c.l.b16 %v2545
        %v2770 = vunpack.c.l.b16 %v2546
        %v2771 = vunpack.c.l.b16 %v2547
        %v2772 = vunpack.c.l.b16 %v2548
        %v2773 = vunpack.c.l.b16 %v2549
        %v2774 = vunpack.c.l.b16 %v2550
        %v2775 = vunpack.c.l.b16 %v2551
        %v2776 = vpack.c.b16 %v2729, %v2728
        %v2777 = vpack.c.b16 %v2731, %v2730
        %v2778 = vpack.c.b16 %v2733, %v2732
        %v2779 = vpack.c.b16 %v2735, %v2734
        %v2780 = vpack.c.b16 %v2737, %v2736
        %v2781 = vpack.c.b16 %v2739, %v2738
        %v2782 = vpack.c.b16 %v2741, %v2740
        %v2783 = vpack.c.b16 %v2743, %v2742
        %v2784 = vpack.c.b16 %v2745, %v2744
        %v2785 = vpack.c.b16 %v2747, %v2746
        %v2786 = vpack.c.b16 %v2749, %v2748
        %v2787 = vpack.c.b16 %v2751, %v2750
        %v2788 = vpack.c.b16 %v2753, %v2752
        %v2789 = vpack.c.b16 %v2755, %v2754
        %v2790 = vpack.c.b16 %v2757, %v2756
        %v2791 = vpack.c.b16 %v2759, %v2758
        %v2792 = vpack.c.b16 %v2761, %v2760
        %v2793 = vpack.c.b16 %v2763, %v2762
        %v2794 = vpack.c.b16 %v2765, %v2764
        %v2795 = vpack.c.b16 %v2767, %v2766
        %v2796 = vpack.c.b16 %v2769, %v2768
        %v2797 = vpack.c.b16 %v2771, %v2770
        %v2798 = vpack.c.b16 %v2773, %v2772
        %v2799 = vpack.c.b16 %v2775, %v2774
        %2824 = vmatprep.subr.bf16.mxu0 0
        %2825 = vmatpush1.bf16.msra.mxu0 %v2783
        %2826 = vmatprep.subr.bf16.mxu0 0
        %2827 = vmatpush1.bf16.msra.mxu0 %v2782
        %2828 = vmatprep.subr.bf16.mxu0 0
        %2829 = vmatpush1.bf16.msra.mxu0 %v2781
        %2830 = vmatprep.subr.bf16.mxu0 0
        %2831 = vmatpush1.bf16.msra.mxu0 %v2780
        %2832 = vmatprep.subr.bf16.mxu0 0
        %2833 = vmatpush1.bf16.msra.mxu0 %v2779
        %2834 = vmatprep.subr.bf16.mxu0 0
        %2835 = vmatpush1.bf16.msra.mxu0 %v2778
        %2836 = vmatprep.subr.bf16.mxu0 0
        %2837 = vmatpush1.bf16.msra.mxu0 %v2777
        %2838 = vmatprep.subr.bf16.mxu0 0
        %2839 = vmatpush1.bf16.msra.mxu0 %v2776
        %2840 = vmatprep.subr.bf16.mxu0 0
        %2841 = vmatpush2.bf16.msra.mxu0 %v2791
        %2842 = vmatprep.subr.bf16.mxu0 0
        %2843 = vmatpush2.bf16.msra.mxu0 %v2790
        %2844 = vmatprep.subr.bf16.mxu0 0
        %2845 = vmatpush2.bf16.msra.mxu0 %v2789
        %2846 = vmatprep.subr.bf16.mxu0 0
        %2847 = vmatpush2.bf16.msra.mxu0 %v2788
        %2848 = vmatprep.subr.bf16.mxu0 0
        %2849 = vmatpush2.bf16.msra.mxu0 %v2787
        %2850 = vmatprep.subr.bf16.mxu0 0
        %2851 = vmatpush2.bf16.msra.mxu0 %v2786
        %2852 = vmatprep.subr.bf16.mxu0 0
        %2853 = vmatpush2.bf16.msra.mxu0 %v2785
        %2854 = vmatprep.subr.bf16.mxu0 0
        %2855 = vmatpush2.bf16.msra.mxu0 %v2784
        %2856 = vmatprep.mubr.bf16.mxu0 %v2633
        %2857 = vmatmul.mubr.bf16.gmra.mxu0 %v2632
        %v2858 = vpop.f32.mrf.mxu0
        %v2859 = vadd.f32 0.0, %v2858
        %v2860 = vpop.f32.mrf.mxu0
        %v2861 = vpop.f32.mrf.mxu0
        %v2862 = vadd.f32 0.0, %v2861
        %v2863 = vpop.f32.mrf.mxu0
        %2864 = vmatprep.mubr.bf16.mxu0 %v2636
        %2865 = vmatmul.mubr.bf16.gmra.mxu0 %v2635
        %v2866 = vpop.f32.mrf.mxu0
        %v2867 = vadd.f32 0.0, %v2866
        %v2868 = vpop.f32.mrf.mxu0
        %v2869 = vpop.f32.mrf.mxu0
        %v2870 = vadd.f32 0.0, %v2869
        %v2871 = vpop.f32.mrf.mxu0
        %2872 = vmatprep.mubr.bf16.mxu0 %v2639
        %2873 = vmatmul.mubr.bf16.gmra.mxu0 %v2638
        %v2874 = vpop.f32.mrf.mxu0
        %v2875 = vadd.f32 0.0, %v2874
        %v2876 = vpop.f32.mrf.mxu0
        %v2877 = vpop.f32.mrf.mxu0
        %v2878 = vadd.f32 0.0, %v2877
        %v2879 = vpop.f32.mrf.mxu0
        %2880 = vmatprep.mubr.bf16.mxu0 %v2642
        %2881 = vmatmul.mubr.bf16.gmra.mxu0 %v2641
        %v2882 = vpop.f32.mrf.mxu0
        %v2883 = vadd.f32 0.0, %v2882
        %v2884 = vpop.f32.mrf.mxu0
        %v2885 = vpop.f32.mrf.mxu0
        %v2886 = vadd.f32 0.0, %v2885
        %v2887 = vpop.f32.mrf.mxu0
        %2888 = vmatprep.mubr.bf16.mxu0 %v2645
        %2889 = vmatmul.mubr.bf16.gmra.mxu0 %v2644
        %v2890 = vpop.f32.mrf.mxu0
        %v2891 = vadd.f32 0.0, %v2890
        %v2892 = vpop.f32.mrf.mxu0
        %v2893 = vpop.f32.mrf.mxu0
        %v2894 = vadd.f32 0.0, %v2893
        %v2895 = vpop.f32.mrf.mxu0
        %2896 = vmatprep.mubr.bf16.mxu0 %v2648
        %2897 = vmatmul.mubr.bf16.gmra.mxu0 %v2647
        %v2898 = vpop.f32.mrf.mxu0
        %v2899 = vadd.f32 0.0, %v2898
        %v2900 = vpop.f32.mrf.mxu0
        %v2901 = vpop.f32.mrf.mxu0
        %v2902 = vadd.f32 0.0, %v2901
        %v2903 = vpop.f32.mrf.mxu0
        %2904 = vmatprep.mubr.bf16.mxu0 %v2651
        %2905 = vmatmul.mubr.bf16.gmra.mxu0 %v2650
        %v2906 = vpop.f32.mrf.mxu0
        %v2907 = vadd.f32 0.0, %v2906
        %v2908 = vpop.f32.mrf.mxu0
        %v2909 = vpop.f32.mrf.mxu0
        %v2910 = vadd.f32 0.0, %v2909
        %v2911 = vpop.f32.mrf.mxu0
        %2912 = vmatprep.mubr.bf16.mxu0 %v2654
        %2913 = vmatmul.mubr.bf16.gmra.mxu0 %v2653
        %v2914 = vpop.f32.mrf.mxu0
        %v2915 = vadd.f32 0.0, %v2914
        %v2916 = vpop.f32.mrf.mxu0
        %v2917 = vpop.f32.mrf.mxu0
        %v2918 = vadd.f32 0.0, %v2917
        %v2919 = vpop.f32.mrf.mxu0
        %2920 = vdwg.mxu0
        %2921 = vmatprep.subr.bf16.mxu0 0
        %2922 = vmatpush1.bf16.msra.mxu0 %v2799
        %2923 = vmatprep.subr.bf16.mxu0 0
        %2924 = vmatpush1.bf16.msra.mxu0 %v2798
        %2925 = vmatprep.subr.bf16.mxu0 0
        %2926 = vmatpush1.bf16.msra.mxu0 %v2797
        %2927 = vmatprep.subr.bf16.mxu0 0
        %2928 = vmatpush1.bf16.msra.mxu0 %v2796
        %2929 = vmatprep.subr.bf16.mxu0 0
        %2930 = vmatpush1.bf16.msra.mxu0 %v2795
        %2931 = vmatprep.subr.bf16.mxu0 0
        %2932 = vmatpush1.bf16.msra.mxu0 %v2794
        %2933 = vmatprep.subr.bf16.mxu0 0
        %2934 = vmatpush1.bf16.msra.mxu0 %v2793
        %2935 = vmatprep.subr.bf16.mxu0 0
        %2936 = vmatpush1.bf16.msra.mxu0 %v2792
        %2937 = vmatprep.subr.bf16.mxu0 0
        %2938 = vmatpush2.bf16.msra.mxu0 0
        %2939 = vmatprep.subr.bf16.mxu0 0
        %2940 = vmatpush2.bf16.msra.mxu0 0
        %2941 = vmatprep.subr.bf16.mxu0 0
        %2942 = vmatpush2.bf16.msra.mxu0 0
        %2943 = vmatprep.subr.bf16.mxu0 0
        %2944 = vmatpush2.bf16.msra.mxu0 0
        %2945 = vmatprep.subr.bf16.mxu0 0
        %2946 = vmatpush2.bf16.msra.mxu0 0
        %2947 = vmatprep.subr.bf16.mxu0 0
        %2948 = vmatpush2.bf16.msra.mxu0 0
        %2949 = vmatprep.subr.bf16.mxu0 0
        %2950 = vmatpush2.bf16.msra.mxu0 0
        %2951 = vmatprep.subr.bf16.mxu0 0
        %2952 = vmatpush2.bf16.msra.mxu0 0
        %2953 = vmatprep.mubr.bf16.mxu0 0
        %2954 = vmatmul.mubr.bf16.gmra.mxu0 %v2634
        %v2955 = vpop.f32.mrf.mxu0
        %v2956 = vadd.f32 %v2859, %v2955
        %v2957 = vpop.f32.mrf.mxu0
        %v2958 = vpop.f32.mrf.mxu0
        %v2959 = vadd.f32 %v2862, %v2958
        %v2960 = vpop.f32.mrf.mxu0
        %2961 = vmatprep.mubr.bf16.mxu0 0
        %2962 = vmatmul.mubr.bf16.gmra.mxu0 %v2637
        %v2963 = vpop.f32.mrf.mxu0
        %v2964 = vadd.f32 %v2867, %v2963
        %v2965 = vpop.f32.mrf.mxu0
        %v2966 = vpop.f32.mrf.mxu0
        %v2967 = vadd.f32 %v2870, %v2966
        %v2968 = vpop.f32.mrf.mxu0
        %2969 = vmatprep.mubr.bf16.mxu0 0
        %2970 = vmatmul.mubr.bf16.gmra.mxu0 %v2640
        %v2971 = vpop.f32.mrf.mxu0
        %v2972 = vadd.f32 %v2875, %v2971
        %v2973 = vpop.f32.mrf.mxu0
        %v2974 = vpop.f32.mrf.mxu0
        %v2975 = vadd.f32 %v2878, %v2974
        %v2976 = vpop.f32.mrf.mxu0
        %2977 = vmatprep.mubr.bf16.mxu0 0
        %2978 = vmatmul.mubr.bf16.gmra.mxu0 %v2643
        %v2979 = vpop.f32.mrf.mxu0
        %v2980 = vadd.f32 %v2883, %v2979
        %v2981 = vpop.f32.mrf.mxu0
        %v2982 = vpop.f32.mrf.mxu0
        %v2983 = vadd.f32 %v2886, %v2982
        %v2984 = vpop.f32.mrf.mxu0
        %2985 = vmatprep.mubr.bf16.mxu0 0
        %2986 = vmatmul.mubr.bf16.gmra.mxu0 %v2646
        %v2987 = vpop.f32.mrf.mxu0
        %v2988 = vadd.f32 %v2891, %v2987
        %v2989 = vpop.f32.mrf.mxu0
        %v2990 = vpop.f32.mrf.mxu0
        %v2991 = vadd.f32 %v2894, %v2990
        %v2992 = vpop.f32.mrf.mxu0
        %2993 = vmatprep.mubr.bf16.mxu0 0
        %2994 = vmatmul.mubr.bf16.gmra.mxu0 %v2649
        %v2995 = vpop.f32.mrf.mxu0
        %v2996 = vadd.f32 %v2899, %v2995
        %v2997 = vpop.f32.mrf.mxu0
        %v2998 = vpop.f32.mrf.mxu0
        %v2999 = vadd.f32 %v2902, %v2998
        %v3000 = vpop.f32.mrf.mxu0
        %3001 = vmatprep.mubr.bf16.mxu0 0
        %3002 = vmatmul.mubr.bf16.gmra.mxu0 %v2652
        %v3003 = vpop.f32.mrf.mxu0
        %v3004 = vadd.f32 %v2907, %v3003
        %v3005 = vpop.f32.mrf.mxu0
        %v3006 = vpop.f32.mrf.mxu0
        %v3007 = vadd.f32 %v2910, %v3006
        %v3008 = vpop.f32.mrf.mxu0
        %3009 = vmatprep.mubr.bf16.mxu0 0
        %3010 = vmatmul.mubr.bf16.gmra.mxu0 %v2655
        %v3011 = vpop.f32.mrf.mxu0
        %v3012 = vadd.f32 %v2915, %v3011
        %v3013 = vpop.f32.mrf.mxu0
        %v3014 = vpop.f32.mrf.mxu0
        %v3015 = vadd.f32 %v2918, %v3014
        %v3016 = vpop.f32.mrf.mxu0
        %3017 = vdwg.mxu0
        %v3018 = vadd.f32 %v2454, %v2956
        %v3019 = vadd.f32 %v2455, %v2959
        %v3020 = vadd.f32 %v2456, %v2964
        %v3021 = vadd.f32 %v2457, %v2967
        %v3022 = vadd.f32 %v2458, %v2972
        %v3023 = vadd.f32 %v2459, %v2975
        %v3024 = vadd.f32 %v2460, %v2980
        %v3025 = vadd.f32 %v2461, %v2983
        %v3026 = vadd.f32 %v2462, %v2988
        %v3027 = vadd.f32 %v2463, %v2991
        %v3028 = vadd.f32 %v2464, %v2996
        %v3029 = vadd.f32 %v2465, %v2999
        %v3030 = vadd.f32 %v2466, %v3004
        %v3031 = vadd.f32 %v2467, %v3007
        %v3032 = vadd.f32 %v2468, %v3012
        %v3033 = vadd.f32 %v2469, %v3015
        %v3034 = vxor.u32 %v3018, 2147483648
        %v3035 = vxor.u32 %v3019, 2147483648
        %v3036 = vxor.u32 %v3020, 2147483648
        %v3037 = vxor.u32 %v3021, 2147483648
        %v3038 = vxor.u32 %v3022, 2147483648
        %v3039 = vxor.u32 %v3023, 2147483648
        %v3040 = vxor.u32 %v3024, 2147483648
        %v3041 = vxor.u32 %v3025, 2147483648
        %v3042 = vxor.u32 %v3026, 2147483648
        %v3043 = vxor.u32 %v3027, 2147483648
        %v3044 = vxor.u32 %v3028, 2147483648
        %v3045 = vxor.u32 %v3029, 2147483648
        %v3046 = vxor.u32 %v3030, 2147483648
        %v3047 = vxor.u32 %v3031, 2147483648
        %v3048 = vxor.u32 %v3032, 2147483648
        %v3049 = vxor.u32 %v3033, 2147483648
        %v3050 = vmul.f32 %v3034, 1.442695
        %v3051 = vpow.pop %v3050
        %v3052 = vmul.f32 %v3035, 1.442695
        %v3053 = vpow.pop %v3052
        %v3054 = vmul.f32 %v3036, 1.442695
        %v3055 = vpow.pop %v3054
        %v3056 = vmul.f32 %v3037, 1.442695
        %v3057 = vpow.pop %v3056
        %v3058 = vmul.f32 %v3038, 1.442695
        %v3059 = vpow.pop %v3058
        %v3060 = vmul.f32 %v3039, 1.442695
        %v3061 = vpow.pop %v3060
        %v3062 = vmul.f32 %v3040, 1.442695
        %v3063 = vpow.pop %v3062
        %v3064 = vmul.f32 %v3041, 1.442695
        %v3065 = vpow.pop %v3064
        %v3066 = vmul.f32 %v3042, 1.442695
        %v3067 = vpow.pop %v3066
        %v3068 = vmul.f32 %v3043, 1.442695
        %v3069 = vpow.pop %v3068
        %v3070 = vmul.f32 %v3044, 1.442695
        %v3071 = vpow.pop %v3070
        %v3072 = vmul.f32 %v3045, 1.442695
        %v3073 = vpow.pop %v3072
        %v3074 = vmul.f32 %v3046, 1.442695
        %v3075 = vpow.pop %v3074
        %v3076 = vmul.f32 %v3047, 1.442695
        %v3077 = vpow.pop %v3076
        %v3078 = vmul.f32 %v3048, 1.442695
        %v3079 = vpow.pop %v3078
        %v3080 = vmul.f32 %v3049, 1.442695
        %v3081 = vpow.pop %v3080
        %v3082 = vadd.f32 %v3051, 1.0
        %v3083 = vadd.f32 %v3053, 1.0
        %v3084 = vadd.f32 %v3055, 1.0
        %v3085 = vadd.f32 %v3057, 1.0
        %v3086 = vadd.f32 %v3059, 1.0
        %v3087 = vadd.f32 %v3061, 1.0
        %v3088 = vadd.f32 %v3063, 1.0
        %v3089 = vadd.f32 %v3065, 1.0
        %v3090 = vadd.f32 %v3067, 1.0
        %v3091 = vadd.f32 %v3069, 1.0
        %v3092 = vadd.f32 %v3071, 1.0
        %v3093 = vadd.f32 %v3073, 1.0
        %v3094 = vadd.f32 %v3075, 1.0
        %v3095 = vadd.f32 %v3077, 1.0
        %v3096 = vadd.f32 %v3079, 1.0
        %v3097 = vadd.f32 %v3081, 1.0
        %v3098 = vrcp.pop %v3082
        %v3099 = vmul.f32 1.0, %v3098
        %v3100 = vrcp.pop %v3083
        %v3101 = vmul.f32 1.0, %v3100
        %v3102 = vrcp.pop %v3084
        %v3103 = vmul.f32 1.0, %v3102
        %v3104 = vrcp.pop %v3085
        %v3105 = vmul.f32 1.0, %v3104
        %v3106 = vrcp.pop %v3086
        %v3107 = vmul.f32 1.0, %v3106
        %v3108 = vrcp.pop %v3087
        %v3109 = vmul.f32 1.0, %v3108
        %v3110 = vrcp.pop %v3088
        %v3111 = vmul.f32 1.0, %v3110
        %v3112 = vrcp.pop %v3089
        %v3113 = vmul.f32 1.0, %v3112
        %v3114 = vrcp.pop %v3090
        %v3115 = vmul.f32 1.0, %v3114
        %v3116 = vrcp.pop %v3091
        %v3117 = vmul.f32 1.0, %v3116
        %v3118 = vrcp.pop %v3092
        %v3119 = vmul.f32 1.0, %v3118
        %v3120 = vrcp.pop %v3093
        %v3121 = vmul.f32 1.0, %v3120
        %v3122 = vrcp.pop %v3094
        %v3123 = vmul.f32 1.0, %v3122
        %v3124 = vrcp.pop %v3095
        %v3125 = vmul.f32 1.0, %v3124
        %v3126 = vrcp.pop %v3096
        %v3127 = vmul.f32 1.0, %v3126
        %v3128 = vrcp.pop %v3097
        %v3129 = vmul.f32 1.0, %v3128
        %v3130 = vmul.f32 %v3018, %v3099
        %v3131 = vmul.f32 %v3019, %v3101
        %v3132 = vmul.f32 %v3020, %v3103
        %v3133 = vmul.f32 %v3021, %v3105
        %v3134 = vmul.f32 %v3022, %v3107
        %v3135 = vmul.f32 %v3023, %v3109
        %v3136 = vmul.f32 %v3024, %v3111
        %v3137 = vmul.f32 %v3025, %v3113
        %v3138 = vmul.f32 %v3026, %v3115
        %v3139 = vmul.f32 %v3027, %v3117
        %v3140 = vmul.f32 %v3028, %v3119
        %v3141 = vmul.f32 %v3029, %v3121
        %v3142 = vmul.f32 %v3030, %v3123
        %v3143 = vmul.f32 %v3031, %v3125
        %v3144 = vmul.f32 %v3032, %v3127
        %v3145 = vmul.f32 %v3033, %v3129
        %v3146 = vadd.f32 %v423, %v3130
        %v3147 = vadd.f32 %v424, %v3131
        %v3148 = vadd.f32 %v425, %v3132
        %v3149 = vadd.f32 %v426, %v3133
        %v3150 = vadd.f32 %v427, %v3134
        %v3151 = vadd.f32 %v428, %v3135
        %v3152 = vadd.f32 %v429, %v3136
        %v3153 = vadd.f32 %v430, %v3137
        %v3154 = vadd.f32 %v431, %v3138
        %v3155 = vadd.f32 %v432, %v3139
        %v3156 = vadd.f32 %v433, %v3140
        %v3157 = vadd.f32 %v434, %v3141
        %v3158 = vadd.f32 %v435, %v3142
        %v3159 = vadd.f32 %v436, %v3143
        %v3160 = vadd.f32 %v437, %v3144
        %v3161 = vadd.f32 %v438, %v3145
        %3162 = vst [vmem:[%s291] sm:$0xff] %v3146
        %3163 = vst [vmem:[%s291 + $0x8] sm:$0xff] %v3147
        %3164 = vst [vmem:[%s291 + $0x10] sm:$0xff] %v3148
        %3165 = vst [vmem:[%s291 + $0x18] sm:$0xff] %v3149
        %3166 = vst [vmem:[%s291 + $0x20] sm:$0xff] %v3150
        %3167 = vst [vmem:[%s291 + $0x28] sm:$0xff] %v3151
        %3168 = vst [vmem:[%s291 + $0x30] sm:$0xff] %v3152
        %3169 = vst [vmem:[%s291 + $0x38] sm:$0xff] %v3153
        %3170 = vst [vmem:[%s291 + $0x40] sm:$0xff] %v3154
        %3171 = vst [vmem:[%s291 + $0x48] sm:$0xff] %v3155
        %3172 = vst [vmem:[%s291 + $0x50] sm:$0xff] %v3156
        %3173 = vst [vmem:[%s291 + $0x58] sm:$0xff] %v3157
        %3174 = vst [vmem:[%s291 + $0x60] sm:$0xff] %v3158
        %3175 = vst [vmem:[%s291 + $0x68] sm:$0xff] %v3159
        %3176 = vst [vmem:[%s291 + $0x70] sm:$0xff] %v3160
        %3177 = vst [vmem:[%s291 + $0x78] sm:$0xff] %v3161
        %s3178 = sand.u32 %s158, 1
        %s3179 = scalar_lea.sflag [#allocation7], %s3178
        %s3180 = sand.u32 %s158, 1
        %s3181 = smul.addr %s3180, 128
        %s3182 = scalar_lea.vmem [#allocation11], %s3181
        // Predicated region
        $region85: #{tpu_custom_call.1} parent=39 // pred_check
          %p3183 = pneg %p168
        $region86: #{tpu_custom_call.1} parent=39 // pred_check_branch
          %3185 = sbr.rel (%p3183) target = $region88
        $region87: #{tpu_custom_call.1} parent=39 // pred_region
          %s3186 = smul.u32 8, %s29
          %s3188 = ssub.s32 2048, 2048
          %3189 = vsyncadd %s3179, %s3188
          %s3190 = smul.addr %s3186, 2
          %s3191 = smul.addr %s28, 32
          %s3192 = sadd.s32 %s3190, %s3191
          %s3193 = smul.addr %s3192, 128
          %s3194 = scalar_lea.hbm %s6, %s3193
          %s3195 = sshll.u32 %s3182, 4
          %s3196 = int_to_ptr.vmem [resolvable:$true] %s3195
          %3201 = dma.vmem_to_hbm [thread:$0]  %s3196, 2048, %s3194, %s3179, 128, 128, 8
        $region88: #{tpu_custom_call.1} parent=39 // pred_fallthru
          _
      $region40: #{tpu_custom_call.1} parent=5 // pred_fallthru
        _
      %p3202 = scmp.le.s32.totalorder 2, %s19
      // Predicated region
      $region89: #{tpu_custom_call.1} parent=5 // pred_check
        %p3203 = pneg %p3202
      $region90: #{tpu_custom_call.1} parent=5 // pred_check_branch
        %3205 = sbr.rel (%p3203) target = $region92
      $region91: #{tpu_custom_call.1} parent=5 // pred_region
        %s3206 = ssub.s32 %s19, 2
        // Predicated region
        $region93: #{tpu_custom_call.1} parent=91 // pred_check
          %p3207 = pneg %p174
        $region94: #{tpu_custom_call.1} parent=91 // pred_check_branch
          %3209 = sbr.rel (%p3207) target = $region96
        $region95: #{tpu_custom_call.1} parent=91 // pred_region
          %s3210 = sand.u32 %s159, 1
          %s3211 = scalar_lea.sflag [#allocation7], %s3210
          %s3212 = sand.u32 %s159, 1
          %s3213 = smul.addr %s3212, 128
          %s3214 = scalar_lea.vmem [#allocation11], %s3213
          %3215 = dma.done %s3211, 2048
        $region96: #{tpu_custom_call.1} parent=91 // pred_fallthru
          _
      $region92: #{tpu_custom_call.1} parent=5 // pred_fallthru
        _
    $region6: #{tpu_custom_call.1} parent=1 // loop_footer
      %s23 = sadd.s32 1, %s19
    $region7: #{tpu_custom_call.1} parent=1 // loop_footer_branch
      %18 = sbr.rel target = $region3
    $region8: #{tpu_custom_call.1} parent=1 // loop_exit
      _
    %3216 = vsyncpa [#allocation6], 1
    %s3217 = scalar_lea.sflag [#allocation6], 1
    %3218 = vsyncpa %s3217, 1
    %3219 = vsyncpa [#allocation9], 1
    %3220 = vsyncpa [#allocation7], 1
    %s3221 = scalar_lea.sflag [#allocation7], 1
    %3222 = vsyncpa %s3221, 1
  %3223 = vsyncmov [#allocation4]
  %s3224 = vpop.sfrf %3223
  %p3225 = scmp.eq.s32.totalorder %s3224, 0
  %p3226 = pneg %p3225
  %3228 = shalt.err (%p3226)
  %s3229 = scalar_lea.sflag [#allocation4], 1
  %3230 = vsyncmov %s3229
  %s3231 = vpop.sfrf %3230
  %p3232 = scmp.eq.s32.totalorder %s3231, 0
  %p3233 = pneg %p3232
  %3235 = shalt.err (%p3233)

</llo_original>
